<compile_context>
chip_gen: v7x
topology: tpu7x:2x2x1
jax: 0.10.0
libtpu: 0.0.40
codegen_flags: <defaults>
</compile_context>

<pallas_src>
import jax
import jax.numpy as jnp
from jax.experimental import pallas as pl
from jax.experimental.pallas import tpu as pltpu


# ----------------------------- helpers --------------------------------------

def _round_up(x, m):
    return (x + m - 1) // m * m


# Kernel gate layout: PyTorch order (i, f, g, o) is permuted to (i, f, o, g)
# so the three sigmoid gates are one contiguous lane-slice.
_GATE_PERM = (0, 1, 3, 2)


def _pad_gate_cols(w, h, hp):
    """[D, 4h] -> [D, 4hp]; gate k (permuted order) occupies cols [k*hp, k*hp+h)."""
    d = w.shape[0]
    w4 = w.reshape(d, 4, h)[:, _GATE_PERM, :]
    w4 = jnp.pad(w4, ((0, 0), (0, 0), (0, hp - h)))
    return w4.reshape(d, 4 * hp)


def _pad_gate_rows_cols(w, h, hp):
    """[h, 4h] -> [hp, 4hp] (zero rows for padded hidden lanes)."""
    return jnp.pad(_pad_gate_cols(w, h, hp), ((0, hp - h), (0, 0)))


def _pad_gate_vec(b, h, hp):
    """[4h] -> [4hp] (permuted gate order, zero-padded lanes)."""
    b4 = b.reshape(4, h)[_GATE_PERM, :]
    return jnp.pad(b4, ((0, 0), (0, hp - h))).reshape(4 * hp)


# ------------------------ tiled linear (MXU) ---------------------------------

def _matmul_kernel(x_ref, w_ref, b_ref, o_ref, acc_ref):
    @pl.when(pl.program_id(2) == 0)
    def _():
        acc_ref[...] = jnp.zeros_like(acc_ref)

    acc_ref[...] += jnp.dot(x_ref[...], w_ref[...],
                            preferred_element_type=jnp.float32)

    @pl.when(pl.program_id(2) == pl.num_programs(2) - 1)
    def _():
        o_ref[...] = (acc_ref[...] + b_ref[...]).astype(o_ref.dtype)


def pallas_linear(x, w, b, *, tm=512, tn=512, tk=512, out_dtype=jnp.float32):
    """y = x @ w + b, x:[M,K], w:[K,N], b:[N] -> out_dtype [M,N].

    Tiled over (M, N, K) with an f32 VMEM accumulator; MXU operands are bf16.
    Inputs are zero-padded to tile multiples (zeros in K contribute nothing;
    padded M/N rows/cols are sliced off).
    """
    M, K = x.shape
    Kw, N = w.shape
    assert K == Kw

    tm = min(tm, _round_up(M, 8))
    tn = min(tn, _round_up(N, 128))
    tk = min(tk, _round_up(K, 128))          # collapses k-grid when K <= tk
    Mp, Np, Kp = _round_up(M, tm), _round_up(N, tn), _round_up(K, tk)

    xp = jnp.pad(x.astype(jnp.bfloat16), ((0, Mp - M), (0, Kp - K)))
    wp = jnp.pad(w.astype(jnp.bfloat16), ((0, Kp - K), (0, Np - N)))
    bp = jnp.pad(b.astype(jnp.float32), (0, Np - N)).reshape(1, Np)

    out = pl.pallas_call(
        _matmul_kernel,
        out_shape=jax.ShapeDtypeStruct((Mp, Np), out_dtype),
        grid=(Mp // tm, Np // tn, Kp // tk),
        in_specs=[
            pl.BlockSpec((tm, tk), lambda i, j, k: (i, k)),
            pl.BlockSpec((tk, tn), lambda i, j, k: (k, j)),
            pl.BlockSpec((1, tn), lambda i, j, k: (0, j)),
        ],
        out_specs=pl.BlockSpec((tm, tn), lambda i, j, k: (i, j)),
        scratch_shapes=[pltpu.VMEM((tm, tn), jnp.float32)],
        compiler_params=pltpu.CompilerParams(
            dimension_semantics=("parallel", "parallel", "arbitrary")),
    )(xp, wp, bp)
    return out[:M, :N]


# ------------------- fused 2-layer LSTM recurrence ---------------------------

def _lstm2_kernel(xg0_ref, whh0_ref, w1_ref, b1_ref, out_ref,
                  h0_ref, c0_ref, h1_ref, c1_ref):
    t = pl.program_id(1)
    Hp = out_ref.shape[-1]

    # init_hidden: zeros — re-initialize the carried state at t == 0 (also
    # correct when the leading batch-split axis advances / is core-sharded).
    @pl.when(t == 0)
    def _():
        h0_ref[...] = jnp.zeros_like(h0_ref)
        c0_ref[...] = jnp.zeros_like(c0_ref)
        h1_ref[...] = jnp.zeros_like(h1_ref)
        c1_ref[...] = jnp.zeros_like(c1_ref)

    def cell(g, c_prev):
        # gate layout (i, f, o, g): one contiguous sigmoid slice + one tanh.
        # Elementwise math kept in f32 (v5e has no bf16 VPU/EUP).
        s = jax.nn.sigmoid(g[:, :3 * Hp])
        i = s[:, 0 * Hp:1 * Hp]
        f = s[:, 1 * Hp:2 * Hp]
        o = s[:, 2 * Hp:3 * Hp]
        gg = jnp.tanh(g[:, 3 * Hp:])
        c = f * c_prev + i * gg
        return o * jnp.tanh(c), c

    h0 = h0_ref[...]
    c0 = c0_ref[...]
    h1 = h1_ref[...]
    c1 = c1_ref[...]

    # layer 0: input projection + bias precomputed (xg0); recurrent matmul
    # with bf16 operands, f32 accumulation.
    g0 = (xg0_ref[0].astype(jnp.float32)
          + jnp.dot(h0.astype(jnp.bfloat16), whh0_ref[...],
                    preferred_element_type=jnp.float32))
    h0, c0 = cell(g0, c0)

    # layer 1: input is layer-0 h of the SAME timestep; wih1/whh1 fused into
    # one [2Hp, 4Hp] matmul.
    h01 = jnp.concatenate([h0, h1], axis=-1).astype(jnp.bfloat16)
    g1 = (jnp.dot(h01, w1_ref[...], preferred_element_type=jnp.float32)
          + b1_ref[...])
    h1, c1 = cell(g1, c1)

    h0_ref[...] = h0
    c0_ref[...] = c0
    h1_ref[...] = h1
    c1_ref[...] = c1
    out_ref[0] = h1.astype(out_ref.dtype)


def pallas_lstm2(xg0, whh0, w1, b1, *, out_dtype=jnp.bfloat16):
    """Fused 2-layer LSTM recurrence, streamed one timestep per grid step.

    xg0  : [T, B, 4*Hp] precomputed layer-0 input gates (x@W_ih0 + b0),
           gate-aligned to Hp = multiple-of-128 lanes.
    whh0 : [Hp, 4*Hp]   layer-0 recurrent weights (gate-aligned, zero-padded)
    w1   : [2*Hp, 4*Hp] fused layer-1 weights: rows [0,Hp) apply to layer-0 h,
           rows [Hp,2Hp) apply to layer-1 h.
    b1   : [4*Hp]       layer-1 bias (b_ih1 + b_hh1)
    Returns layer-1 hidden states [T, B, Hp]; padded lanes are exactly zero
    (relies on the zero initial c/h — a nonzero initial state would break it).
    """
    T, B, G = xg0.shape
    Hp = G // 4
    # Batch split across cores (v7x megacore) only when each half stays
    # sublane-aligned (multiple of 8 rows).
    nb = 2 if (B % 16 == 0) else 1
    Bb = B // nb

    return pl.pallas_call(
        _lstm2_kernel,
        out_shape=jax.ShapeDtypeStruct((T, B, Hp), out_dtype),
        grid=(nb, T),
        in_specs=[
            pl.BlockSpec((1, Bb, 4 * Hp), lambda b, t: (t, b, 0)),
            pl.BlockSpec((Hp, 4 * Hp), lambda b, t: (0, 0)),
            pl.BlockSpec((2 * Hp, 4 * Hp), lambda b, t: (0, 0)),
            pl.BlockSpec((1, 4 * Hp), lambda b, t: (0, 0)),
        ],
        out_specs=pl.BlockSpec((1, Bb, Hp), lambda b, t: (t, b, 0)),
        scratch_shapes=[pltpu.VMEM((Bb, Hp), jnp.float32) for _ in range(4)],
        compiler_params=pltpu.CompilerParams(
            dimension_semantics=("parallel", "arbitrary")),
    )(xg0.astype(jnp.bfloat16),
      whh0.astype(jnp.bfloat16),
      w1.astype(jnp.bfloat16),
      b1.reshape(1, 4 * Hp).astype(jnp.float32))


# ------------------------------- Model1 --------------------------------------

def init_params(key, *, vocab_size, embedding_size, hidden_size, enc_in_dim):
    ks = iter(jax.random.split(key, 16))

    def u(k, shape, scale):
        return jax.random.uniform(k, shape, jnp.float32, -scale, scale)

    s = 1.0 / hidden_size ** 0.5
    return {
        # TODO(synk): frozen pretrained ResNet-50 backbone is not
        # re-implemented; replaced by a deterministic linear feature
        # extractor flat(image) -> 2048, matching the encoder's output dim.
        "enc_w": u(next(ks), (enc_in_dim, 2048), 0.02),
        "enc_b": u(next(ks), (2048,), 0.02),
        # self.linear: 2048 -> embedding_size
        "lin_w": u(next(ks), (2048, embedding_size), 1.0 / 2048 ** 0.5),
        "lin_b": u(next(ks), (embedding_size,), 1.0 / 2048 ** 0.5),
        # self.embedding
        "emb": jax.random.normal(next(ks), (vocab_size, embedding_size),
                                 jnp.float32),
        # self.lstm (num_layers = 2, as hard-coded by init_hidden)
        "w_ih0": u(next(ks), (embedding_size, 4 * hidden_size), s),
        "w_hh0": u(next(ks), (hidden_size, 4 * hidden_size), s),
        "b_ih0": u(next(ks), (4 * hidden_size,), s),
        "b_hh0": u(next(ks), (4 * hidden_size,), s),
        "w_ih1": u(next(ks), (hidden_size, 4 * hidden_size), s),
        "w_hh1": u(next(ks), (hidden_size, 4 * hidden_size), s),
        "b_ih1": u(next(ks), (4 * hidden_size,), s),
        "b_hh1": u(next(ks), (4 * hidden_size,), s),
        # self.fc
        "fc_w": u(next(ks), (hidden_size, vocab_size), s),
        "fc_b": u(next(ks), (vocab_size,), s),
    }


def model1_forward(params, images, captions):
    """Mirrors Model1.forward: returns logits [B, T, vocab_size] (f32)."""
    B = images.shape[0]
    E = params["emb"].shape[1]
    H = params["w_hh0"].shape[0]
    Hp = _round_up(H, 128)

    # features = self.linear(self.encoder(images))          -> [B, E]
    # bf16 intermediates between chained matmuls halve HBM traffic
    # (MXU re-casts operands to bf16 anyway).
    x = images.reshape(B, -1)
    feats_2048 = pallas_linear(x, params["enc_w"], params["enc_b"],
                               out_dtype=jnp.bfloat16)
    features = pallas_linear(feats_2048, params["lin_w"], params["lin_b"],
                             out_dtype=jnp.bfloat16)

    # embeddings = cat([features.unsqueeze(1), emb(captions[:, :-1])], dim=1)
    # Built time-major directly: no float transposes around the recurrence.
    cap_in = captions[:, :-1]                                  # [B, T-1]
    emb_tbe = jnp.take(params["emb"], cap_in.T, axis=0)        # [T-1, B, E]
    seq_tbe = jnp.concatenate([features[None, :, :],
                               emb_tbe.astype(jnp.bfloat16)], axis=0)
    T = seq_tbe.shape[0]                                       # == captions.shape[1]

    # Hoisted layer-0 input projection over all timesteps (one big MXU matmul),
    # bias folded in, gates laid out 128-lane aligned.
    w_ih0_p = _pad_gate_cols(params["w_ih0"], H, Hp)           # [E, 4Hp]
    b0_p = _pad_gate_vec(params["b_ih0"] + params["b_hh0"], H, Hp)
    xg0 = pallas_linear(seq_tbe.reshape(T * B, E), w_ih0_p, b0_p,
                        out_dtype=jnp.bfloat16)
    xg0 = xg0.reshape(T, B, 4 * Hp)

    # Fused 2-layer recurrence, one timestep per grid step, state in VMEM.
    whh0_p = _pad_gate_rows_cols(params["w_hh0"], H, Hp)
    w1_p = jnp.concatenate(
        [_pad_gate_rows_cols(params["w_ih1"], H, Hp),
         _pad_gate_rows_cols(params["w_hh1"], H, Hp)], axis=0)  # [2Hp, 4Hp]
    b1_p = _pad_gate_vec(params["b_ih1"] + params["b_hh1"], H, Hp)
    out_tbh = pallas_lstm2(xg0, whh0_p, w1_p, b1_p)            # [T, B, Hp] bf16

    # Transpose the small [T,B,Hp] hidden tensor (NOT the [B,T,V] logits) so
    # the fc output is already in [B, T, V] order.
    out_bth = jnp.transpose(out_tbh, (1, 0, 2)).reshape(B * T, Hp)

    # outputs = self.fc(outputs); fc weights zero-padded on the Hp rows so the
    # padded (exactly-zero) hidden lanes contribute nothing.
    fc_w_p = jnp.pad(params["fc_w"], ((0, Hp - H), (0, 0)))
    logits = pallas_linear(out_bth, fc_w_p, params["fc_b"])    # f32 [B*T, V]
    return logits.reshape(B, T, -1)                            # [B, T, V]


# --------------------------------- main ---------------------------------------

if __name__ == "__main__":
    # Small, deterministic example shapes.
    B, C, S = 2, 3, 16       # images [2, 3, 16, 16]  (NCHW)
    TCAP = 8                 # caption length
    VOCAB = 16
    EMB = 32
    HID = 32

    key = jax.random.PRNGKey(0)
    k_img, k_cap, k_par = jax.random.split(key, 3)

    images = jax.random.normal(k_img, (B, C, S, S), jnp.float32)
    captions = jax.random.randint(k_cap, (B, TCAP), 0, VOCAB, jnp.int32)

    params = init_params(k_par, vocab_size=VOCAB, embedding_size=EMB,
                         hidden_size=HID, enc_in_dim=C * S * S)

    fwd = jax.jit(model1_forward)
    logits = jax.block_until_ready(fwd(params, images, captions))

    assert logits.shape == (B, TCAP, VOCAB), logits.shape
    assert logits.dtype == jnp.float32
    assert bool(jnp.all(jnp.isfinite(logits)))
    print("KERNEL_OK")
</pallas_src>

<mosaic_0001>
module attributes {stable_mosaic.version = 11 : i64} {
  func.func @_matmul_kernel(%arg0: i32, %arg1: i32, %arg2: i32, %arg3: memref<8x512xbf16, #tpu.memory_space<vmem>>, %arg4: memref<512x512xbf16, #tpu.memory_space<vmem>>, %arg5: memref<1x512xf32, #tpu.memory_space<vmem>>, %arg6: memref<8x512xbf16, #tpu.memory_space<vmem>>, %arg7: memref<8x512xf32, #tpu.memory_space<vmem>>) attributes {dimension_semantics = [#tpu.dimension_semantics<parallel>, #tpu.dimension_semantics<parallel>, #tpu.dimension_semantics<arbitrary>], iteration_bounds = array<i64: 1, 4, 2>, scalar_prefetch = 0 : i64, scratch_operands = 1 : i64, tpu.core_type = #tpu.core_type<tc>, window_params = [{transform_indices = @transform_0, window_bounds = array<i64: 8, 512>}, {transform_indices = @transform_1, window_bounds = array<i64: 512, 512>}, {transform_indices = @transform_2, window_bounds = array<i64: 1, 512>}, {transform_indices = @transform_3, window_bounds = array<i64: 8, 512>}]} {
    %c0_i32 = arith.constant 0 : i32
    %0 = arith.cmpi eq, %arg2, %c0_i32 : i32
    %1 = arith.extui %0 : i1 to i32
    %c0_i32_0 = arith.constant 0 : i32
    %2 = arith.cmpi ne, %1, %c0_i32_0 : i32
    scf.if %2 {
      %cst_9 = arith.constant 0.000000e+00 : f32
      %12 = vector.broadcast %cst_9 : f32 to vector<8x512xf32>
      %c0_10 = arith.constant 0 : index
      %c0_11 = arith.constant 0 : index
      %13 = vector.load %arg7[%c0_10, %c0_11] : memref<8x512xf32, #tpu.memory_space<vmem>>, vector<8x512xf32>
      tpu.vector_store %arg7[%c0_10, %c0_11], %12 {strides = array<i32>} : memref<8x512xf32, #tpu.memory_space<vmem>>, vector<8x512xf32>,
    } else {
    }
    %c0 = arith.constant 0 : index
    %c0_1 = arith.constant 0 : index
    %3 = vector.load %arg7[%c0, %c0_1] : memref<8x512xf32, #tpu.memory_space<vmem>>, vector<8x512xf32>
    %c0_2 = arith.constant 0 : index
    %c0_3 = arith.constant 0 : index
    %4 = vector.load %arg3[%c0_2, %c0_3] : memref<8x512xbf16, #tpu.memory_space<vmem>>, vector<8x512xbf16>
    %c0_4 = arith.constant 0 : index
    %c0_5 = arith.constant 0 : index
    %5 = vector.load %arg4[%c0_4, %c0_5] : memref<512x512xbf16, #tpu.memory_space<vmem>>, vector<512x512xbf16>
    %cst = arith.constant dense<0.000000e+00> : vector<8x512xf32>
    %6 = tpu.matmul %4, %5, %cst {dimension_numbers = #tpu.dot_dimension_numbers<[1], [0], [0], [1], [0, 0, 1, 1], [], []>} : vector<8x512xbf16>, vector<512x512xbf16>, vector<8x512xf32> -> vector<8x512xf32>
    %7 = arith.addf %3, %6 : vector<8x512xf32>
    %c0_6 = arith.constant 0 : index
    %c0_7 = arith.constant 0 : index
    %8 = vector.load %arg7[%c0_6, %c0_7] : memref<8x512xf32, #tpu.memory_space<vmem>>, vector<8x512xf32>
    tpu.vector_store %arg7[%c0_6, %c0_7], %7 {strides = array<i32>} : memref<8x512xf32, #tpu.memory_space<vmem>>, vector<8x512xf32>,
    %c1_i32 = arith.constant 1 : i32
    %9 = arith.cmpi eq, %arg2, %c1_i32 : i32
    %10 = arith.extui %9 : i1 to i32
    %c0_i32_8 = arith.constant 0 : i32
    %11 = arith.cmpi ne, %10, %c0_i32_8 : i32
    scf.if %11 {
      %c0_9 = arith.constant 0 : index
      %c0_10 = arith.constant 0 : index
      %12 = vector.load %arg7[%c0_9, %c0_10] : memref<8x512xf32, #tpu.memory_space<vmem>>, vector<8x512xf32>
      %c0_11 = arith.constant 0 : index
      %c0_12 = arith.constant 0 : index
      %13 = vector.load %arg5[%c0_11, %c0_12] : memref<1x512xf32, #tpu.memory_space<vmem>>, vector<1x512xf32>
      %14 = vector.broadcast %13 : vector<1x512xf32> to vector<8x512xf32>
      %15 = arith.addf %12, %14 : vector<8x512xf32>
      %16 = arith.truncf %15 : vector<8x512xf32> to vector<8x512xbf16>
      %c0_13 = arith.constant 0 : index
      %c0_14 = arith.constant 0 : index
      %17 = vector.load %arg6[%c0_13, %c0_14] : memref<8x512xbf16, #tpu.memory_space<vmem>>, vector<8x512xbf16>
      tpu.vector_store %arg6[%c0_13, %c0_14], %16 {strides = array<i32>} : memref<8x512xbf16, #tpu.memory_space<vmem>>, vector<8x512xbf16>,
    } else {
    }
    return
  }
  func.func @transform_0(%arg0: i32, %arg1: i32, %arg2: i32) -> (i32, i32) {
    %c0_i32 = arith.constant 0 : i32
    return %arg0, %arg2 : i32, i32
  }
  func.func @transform_1(%arg0: i32, %arg1: i32, %arg2: i32) -> (i32, i32) {
    %c0_i32 = arith.constant 0 : i32
    return %arg2, %arg1 : i32, i32
  }
  func.func @transform_2(%arg0: i32, %arg1: i32, %arg2: i32) -> (i32, i32) {
    %c0_i32 = arith.constant 0 : i32
    %c0_i32_0 = arith.constant 0 : i32
    return %c0_i32, %arg1 : i32, i32
  }
  func.func @transform_3(%arg0: i32, %arg1: i32, %arg2: i32) -> (i32, i32) {
    %c0_i32 = arith.constant 0 : i32
    return %arg0, %arg1 : i32, i32
  }
}

module attributes {stable_mosaic.version = 11 : i64} {
  func.func @_matmul_kernel(%arg0: i32, %arg1: i32, %arg2: i32, %arg3: memref<8x512xbf16, #tpu.memory_space<vmem>>, %arg4: memref<512x128xbf16, #tpu.memory_space<vmem>>, %arg5: memref<1x128xf32, #tpu.memory_space<vmem>>, %arg6: memref<8x128xbf16, #tpu.memory_space<vmem>>, %arg7: memref<8x128xf32, #tpu.memory_space<vmem>>) attributes {dimension_semantics = [#tpu.dimension_semantics<parallel>, #tpu.dimension_semantics<parallel>, #tpu.dimension_semantics<arbitrary>], iteration_bounds = array<i64: 1, 1, 4>, scalar_prefetch = 0 : i64, scratch_operands = 1 : i64, tpu.core_type = #tpu.core_type<tc>, window_params = [{transform_indices = @transform_0, window_bounds = array<i64: 8, 512>}, {transform_indices = @transform_1, window_bounds = array<i64: 512, 128>}, {transform_indices = @transform_2, window_bounds = array<i64: 1, 128>}, {transform_indices = @transform_3, window_bounds = array<i64: 8, 128>}]} {
    %c0_i32 = arith.constant 0 : i32
    %0 = arith.cmpi eq, %arg2, %c0_i32 : i32
    %1 = arith.extui %0 : i1 to i32
    %c0_i32_0 = arith.constant 0 : i32
    %2 = arith.cmpi ne, %1, %c0_i32_0 : i32
    scf.if %2 {
      %cst_9 = arith.constant 0.000000e+00 : f32
      %12 = vector.broadcast %cst_9 : f32 to vector<8x128xf32>
      %c0_10 = arith.constant 0 : index
      %c0_11 = arith.constant 0 : index
      %13 = vector.load %arg7[%c0_10, %c0_11] : memref<8x128xf32, #tpu.memory_space<vmem>>, vector<8x128xf32>
      tpu.vector_store %arg7[%c0_10, %c0_11], %12 {strides = array<i32>} : memref<8x128xf32, #tpu.memory_space<vmem>>, vector<8x128xf32>,
    } else {
    }
    %c0 = arith.constant 0 : index
    %c0_1 = arith.constant 0 : index
    %3 = vector.load %arg7[%c0, %c0_1] : memref<8x128xf32, #tpu.memory_space<vmem>>, vector<8x128xf32>
    %c0_2 = arith.constant 0 : index
    %c0_3 = arith.constant 0 : index
    %4 = vector.load %arg3[%c0_2, %c0_3] : memref<8x512xbf16, #tpu.memory_space<vmem>>, vector<8x512xbf16>
    %c0_4 = arith.constant 0 : index
    %c0_5 = arith.constant 0 : index
    %5 = vector.load %arg4[%c0_4, %c0_5] : memref<512x128xbf16, #tpu.memory_space<vmem>>, vector<512x128xbf16>
    %cst = arith.constant dense<0.000000e+00> : vector<8x128xf32>
    %6 = tpu.matmul %4, %5, %cst {dimension_numbers = #tpu.dot_dimension_numbers<[1], [0], [0], [1], [0, 0, 1, 1], [], []>} : vector<8x512xbf16>, vector<512x128xbf16>, vector<8x128xf32> -> vector<8x128xf32>
    %7 = arith.addf %3, %6 : vector<8x128xf32>
    %c0_6 = arith.constant 0 : index
    %c0_7 = arith.constant 0 : index
    %8 = vector.load %arg7[%c0_6, %c0_7] : memref<8x128xf32, #tpu.memory_space<vmem>>, vector<8x128xf32>
    tpu.vector_store %arg7[%c0_6, %c0_7], %7 {strides = array<i32>} : memref<8x128xf32, #tpu.memory_space<vmem>>, vector<8x128xf32>,
    %c3_i32 = arith.constant 3 : i32
    %9 = arith.cmpi eq, %arg2, %c3_i32 : i32
    %10 = arith.extui %9 : i1 to i32
    %c0_i32_8 = arith.constant 0 : i32
    %11 = arith.cmpi ne, %10, %c0_i32_8 : i32
    scf.if %11 {
      %c0_9 = arith.constant 0 : index
      %c0_10 = arith.constant 0 : index
      %12 = vector.load %arg7[%c0_9, %c0_10] : memref<8x128xf32, #tpu.memory_space<vmem>>, vector<8x128xf32>
      %c0_11 = arith.constant 0 : index
      %c0_12 = arith.constant 0 : index
      %13 = vector.load %arg5[%c0_11, %c0_12] : memref<1x128xf32, #tpu.memory_space<vmem>>, vector<1x128xf32>
      %14 = vector.broadcast %13 : vector<1x128xf32> to vector<8x128xf32>
      %15 = arith.addf %12, %14 : vector<8x128xf32>
      %16 = arith.truncf %15 : vector<8x128xf32> to vector<8x128xbf16>
      %c0_13 = arith.constant 0 : index
      %c0_14 = arith.constant 0 : index
      %17 = vector.load %arg6[%c0_13, %c0_14] : memref<8x128xbf16, #tpu.memory_space<vmem>>, vector<8x128xbf16>
      tpu.vector_store %arg6[%c0_13, %c0_14], %16 {strides = array<i32>} : memref<8x128xbf16, #tpu.memory_space<vmem>>, vector<8x128xbf16>,
    } else {
    }
    return
  }
  func.func @transform_0(%arg0: i32, %arg1: i32, %arg2: i32) -> (i32, i32) {
    %c0_i32 = arith.constant 0 : i32
    return %arg0, %arg2 : i32, i32
  }
  func.func @transform_1(%arg0: i32, %arg1: i32, %arg2: i32) -> (i32, i32) {
    %c0_i32 = arith.constant 0 : i32
    return %arg2, %arg1 : i32, i32
  }
  func.func @transform_2(%arg0: i32, %arg1: i32, %arg2: i32) -> (i32, i32) {
    %c0_i32 = arith.constant 0 : i32
    %c0_i32_0 = arith.constant 0 : i32
    return %c0_i32, %arg1 : i32, i32
  }
  func.func @transform_3(%arg0: i32, %arg1: i32, %arg2: i32) -> (i32, i32) {
    %c0_i32 = arith.constant 0 : i32
    return %arg0, %arg1 : i32, i32
  }
}

module attributes {stable_mosaic.version = 11 : i64} {
  func.func @_matmul_kernel(%arg0: i32, %arg1: i32, %arg2: i32, %arg3: memref<16x128xbf16, #tpu.memory_space<vmem>>, %arg4: memref<128x512xbf16, #tpu.memory_space<vmem>>, %arg5: memref<1x512xf32, #tpu.memory_space<vmem>>, %arg6: memref<16x512xbf16, #tpu.memory_space<vmem>>, %arg7: memref<16x512xf32, #tpu.memory_space<vmem>>) attributes {dimension_semantics = [#tpu.dimension_semantics<parallel>, #tpu.dimension_semantics<parallel>, #tpu.dimension_semantics<arbitrary>], iteration_bounds = array<i64: 1, 1, 1>, scalar_prefetch = 0 : i64, scratch_operands = 1 : i64, tpu.core_type = #tpu.core_type<tc>, window_params = [{transform_indices = @transform_0, window_bounds = array<i64: 16, 128>}, {transform_indices = @transform_1, window_bounds = array<i64: 128, 512>}, {transform_indices = @transform_2, window_bounds = array<i64: 1, 512>}, {transform_indices = @transform_3, window_bounds = array<i64: 16, 512>}]} {
    %c0_i32 = arith.constant 0 : i32
    %0 = arith.cmpi eq, %arg2, %c0_i32 : i32
    %1 = arith.extui %0 : i1 to i32
    %c0_i32_0 = arith.constant 0 : i32
    %2 = arith.cmpi ne, %1, %c0_i32_0 : i32
    scf.if %2 {
      %cst_10 = arith.constant 0.000000e+00 : f32
      %12 = vector.broadcast %cst_10 : f32 to vector<16x512xf32>
      %c0_11 = arith.constant 0 : index
      %c0_12 = arith.constant 0 : index
      %13 = vector.load %arg7[%c0_11, %c0_12] : memref<16x512xf32, #tpu.memory_space<vmem>>, vector<16x512xf32>
      tpu.vector_store %arg7[%c0_11, %c0_12], %12 {strides = array<i32>} : memref<16x512xf32, #tpu.memory_space<vmem>>, vector<16x512xf32>,
    } else {
    }
    %c0 = arith.constant 0 : index
    %c0_1 = arith.constant 0 : index
    %3 = vector.load %arg7[%c0, %c0_1] : memref<16x512xf32, #tpu.memory_space<vmem>>, vector<16x512xf32>
    %c0_2 = arith.constant 0 : index
    %c0_3 = arith.constant 0 : index
    %4 = vector.load %arg3[%c0_2, %c0_3] : memref<16x128xbf16, #tpu.memory_space<vmem>>, vector<16x128xbf16>
    %c0_4 = arith.constant 0 : index
    %c0_5 = arith.constant 0 : index
    %5 = vector.load %arg4[%c0_4, %c0_5] : memref<128x512xbf16, #tpu.memory_space<vmem>>, vector<128x512xbf16>
    %cst = arith.constant dense<0.000000e+00> : vector<16x512xf32>
    %6 = tpu.matmul %4, %5, %cst {dimension_numbers = #tpu.dot_dimension_numbers<[1], [0], [0], [1], [0, 0, 1, 1], [], []>} : vector<16x128xbf16>, vector<128x512xbf16>, vector<16x512xf32> -> vector<16x512xf32>
    %7 = arith.addf %3, %6 : vector<16x512xf32>
    %c0_6 = arith.constant 0 : index
    %c0_7 = arith.constant 0 : index
    %8 = vector.load %arg7[%c0_6, %c0_7] : memref<16x512xf32, #tpu.memory_space<vmem>>, vector<16x512xf32>
    tpu.vector_store %arg7[%c0_6, %c0_7], %7 {strides = array<i32>} : memref<16x512xf32, #tpu.memory_space<vmem>>, vector<16x512xf32>,
    %c0_i32_8 = arith.constant 0 : i32
    %9 = arith.cmpi eq, %arg2, %c0_i32_8 : i32
    %10 = arith.extui %9 : i1 to i32
    %c0_i32_9 = arith.constant 0 : i32
    %11 = arith.cmpi ne, %10, %c0_i32_9 : i32
    scf.if %11 {
      %c0_10 = arith.constant 0 : index
      %c0_11 = arith.constant 0 : index
      %12 = vector.load %arg7[%c0_10, %c0_11] : memref<16x512xf32, #tpu.memory_space<vmem>>, vector<16x512xf32>
      %c0_12 = arith.constant 0 : index
      %c0_13 = arith.constant 0 : index
      %13 = vector.load %arg5[%c0_12, %c0_13] : memref<1x512xf32, #tpu.memory_space<vmem>>, vector<1x512xf32>
      %14 = vector.broadcast %13 : vector<1x512xf32> to vector<16x512xf32>
      %15 = arith.addf %12, %14 : vector<16x512xf32>
      %16 = arith.truncf %15 : vector<16x512xf32> to vector<16x512xbf16>
      %c0_14 = arith.constant 0 : index
      %c0_15 = arith.constant 0 : index
      %17 = vector.load %arg6[%c0_14, %c0_15] : memref<16x512xbf16, #tpu.memory_space<vmem>>, vector<16x512xbf16>
      tpu.vector_store %arg6[%c0_14, %c0_15], %16 {strides = array<i32>} : memref<16x512xbf16, #tpu.memory_space<vmem>>, vector<16x512xbf16>,
    } else {
    }
    return
  }
  func.func @transform_0(%arg0: i32, %arg1: i32, %arg2: i32) -> (i32, i32) {
    %c0_i32 = arith.constant 0 : i32
    return %arg0, %arg2 : i32, i32
  }
  func.func @transform_1(%arg0: i32, %arg1: i32, %arg2: i32) -> (i32, i32) {
    %c0_i32 = arith.constant 0 : i32
    return %arg2, %arg1 : i32, i32
  }
  func.func @transform_2(%arg0: i32, %arg1: i32, %arg2: i32) -> (i32, i32) {
    %c0_i32 = arith.constant 0 : i32
    %c0_i32_0 = arith.constant 0 : i32
    return %c0_i32, %arg1 : i32, i32
  }
  func.func @transform_3(%arg0: i32, %arg1: i32, %arg2: i32) -> (i32, i32) {
    %c0_i32 = arith.constant 0 : i32
    return %arg0, %arg1 : i32, i32
  }
}

module attributes {stable_mosaic.version = 11 : i64} {
  func.func @_lstm2_kernel(%arg0: i32, %arg1: i32, %arg2: memref<1x2x512xbf16, #tpu.memory_space<vmem>>, %arg3: memref<128x512xbf16, #tpu.memory_space<vmem>>, %arg4: memref<256x512xbf16, #tpu.memory_space<vmem>>, %arg5: memref<1x512xf32, #tpu.memory_space<vmem>>, %arg6: memref<1x2x128xbf16, #tpu.memory_space<vmem>>, %arg7: memref<2x128xf32, #tpu.memory_space<vmem>>, %arg8: memref<2x128xf32, #tpu.memory_space<vmem>>, %arg9: memref<2x128xf32, #tpu.memory_space<vmem>>, %arg10: memref<2x128xf32, #tpu.memory_space<vmem>>) attributes {dimension_semantics = [#tpu.dimension_semantics<parallel>, #tpu.dimension_semantics<arbitrary>], iteration_bounds = array<i64: 1, 8>, scalar_prefetch = 0 : i64, scratch_operands = 4 : i64, tpu.core_type = #tpu.core_type<tc>, window_params = [{transform_indices = @transform_0, window_bounds = array<i64: 1, 2, 512>}, {pipeline_mode = #tpu.pipeline_mode<synchronous>, transform_indices = @transform_1, window_bounds = array<i64: 128, 512>}, {pipeline_mode = #tpu.pipeline_mode<synchronous>, transform_indices = @transform_2, window_bounds = array<i64: 256, 512>}, {pipeline_mode = #tpu.pipeline_mode<synchronous>, transform_indices = @transform_3, window_bounds = array<i64: 1, 512>}, {transform_indices = @transform_4, window_bounds = array<i64: 1, 2, 128>}]} {
    %c0_i32 = arith.constant 0 : i32
    %0 = arith.cmpi eq, %arg1, %c0_i32 : i32
    %1 = arith.extui %0 : i1 to i32
    %c0_i32_0 = arith.constant 0 : i32
    %2 = arith.cmpi ne, %1, %c0_i32_0 : i32
    scf.if %2 {
      %cst_31 = arith.constant 0.000000e+00 : f32
      %61 = vector.broadcast %cst_31 : f32 to vector<2x128xf32>
      %c0_32 = arith.constant 0 : index
      %c0_33 = arith.constant 0 : index
      %62 = vector.load %arg7[%c0_32, %c0_33] : memref<2x128xf32, #tpu.memory_space<vmem>>, vector<2x128xf32>
      tpu.vector_store %arg7[%c0_32, %c0_33], %61 {strides = array<i32>} : memref<2x128xf32, #tpu.memory_space<vmem>>, vector<2x128xf32>,
      %cst_34 = arith.constant 0.000000e+00 : f32
      %63 = vector.broadcast %cst_34 : f32 to vector<2x128xf32>
      %c0_35 = arith.constant 0 : index
      %c0_36 = arith.constant 0 : index
      %64 = vector.load %arg8[%c0_35, %c0_36] : memref<2x128xf32, #tpu.memory_space<vmem>>, vector<2x128xf32>
      tpu.vector_store %arg8[%c0_35, %c0_36], %63 {strides = array<i32>} : memref<2x128xf32, #tpu.memory_space<vmem>>, vector<2x128xf32>,
      %cst_37 = arith.constant 0.000000e+00 : f32
      %65 = vector.broadcast %cst_37 : f32 to vector<2x128xf32>
      %c0_38 = arith.constant 0 : index
      %c0_39 = arith.constant 0 : index
      %66 = vector.load %arg9[%c0_38, %c0_39] : memref<2x128xf32, #tpu.memory_space<vmem>>, vector<2x128xf32>
      tpu.vector_store %arg9[%c0_38, %c0_39], %65 {strides = array<i32>} : memref<2x128xf32, #tpu.memory_space<vmem>>, vector<2x128xf32>,
      %cst_40 = arith.constant 0.000000e+00 : f32
      %67 = vector.broadcast %cst_40 : f32 to vector<2x128xf32>
      %c0_41 = arith.constant 0 : index
      %c0_42 = arith.constant 0 : index
      %68 = vector.load %arg10[%c0_41, %c0_42] : memref<2x128xf32, #tpu.memory_space<vmem>>, vector<2x128xf32>
      tpu.vector_store %arg10[%c0_41, %c0_42], %67 {strides = array<i32>} : memref<2x128xf32, #tpu.memory_space<vmem>>, vector<2x128xf32>,
    } else {
    }
    %c0 = arith.constant 0 : index
    %c0_1 = arith.constant 0 : index
    %3 = vector.load %arg7[%c0, %c0_1] : memref<2x128xf32, #tpu.memory_space<vmem>>, vector<2x128xf32>
    %c0_2 = arith.constant 0 : index
    %c0_3 = arith.constant 0 : index
    %4 = vector.load %arg8[%c0_2, %c0_3] : memref<2x128xf32, #tpu.memory_space<vmem>>, vector<2x128xf32>
    %c0_4 = arith.constant 0 : index
    %c0_5 = arith.constant 0 : index
    %5 = vector.load %arg9[%c0_4, %c0_5] : memref<2x128xf32, #tpu.memory_space<vmem>>, vector<2x128xf32>
    %c0_6 = arith.constant 0 : index
    %c0_7 = arith.constant 0 : index
    %6 = vector.load %arg10[%c0_6, %c0_7] : memref<2x128xf32, #tpu.memory_space<vmem>>, vector<2x128xf32>
    %c0_8 = arith.constant 0 : index
    %c0_9 = arith.constant 0 : index
    %c0_10 = arith.constant 0 : index
    %7 = vector.load %arg2[%c0_8, %c0_9, %c0_10] : memref<1x2x512xbf16, #tpu.memory_space<vmem>>, vector<1x2x512xbf16>
    %8 = vector.shape_cast %7 : vector<1x2x512xbf16> to vector<2x512xbf16>
    %9 = arith.extf %8 : vector<2x512xbf16> to vector<2x512xf32>
    %10 = arith.truncf %3 : vector<2x128xf32> to vector<2x128xbf16>
    %c0_11 = arith.constant 0 : index
    %c0_12 = arith.constant 0 : index
    %11 = vector.load %arg3[%c0_11, %c0_12] : memref<128x512xbf16, #tpu.memory_space<vmem>>, vector<128x512xbf16>
    %cst = arith.constant dense<0.000000e+00> : vector<2x512xf32>
    %12 = tpu.matmul %10, %11, %cst {dimension_numbers = #tpu.dot_dimension_numbers<[1], [0], [0], [1], [0, 0, 1, 1], [], []>} : vector<2x128xbf16>, vector<128x512xbf16>, vector<2x512xf32> -> vector<2x512xf32>
    %13 = arith.addf %9, %12 : vector<2x512xf32>
    %14 = vector.extract_strided_slice %13 {offsets = [0, 0], sizes = [2, 384], strides = [1, 1]} : vector<2x512xf32> to vector<2x384xf32>
    %15 = arith.negf %14 : vector<2x384xf32>
    %16 = math.exp %15 : vector<2x384xf32>
    %cst_13 = arith.constant 1.000000e+00 : f32
    %17 = vector.broadcast %cst_13 : f32 to vector<2x384xf32>
    %18 = arith.addf %17, %16 : vector<2x384xf32>
    %19 = arith.divf %17, %18 : vector<2x384xf32>
    %20 = vector.extract_strided_slice %19 {offsets = [0, 0], sizes = [2, 128], strides = [1, 1]} : vector<2x384xf32> to vector<2x128xf32>
    %21 = vector.extract_strided_slice %19 {offsets = [0, 128], sizes = [2, 128], strides = [1, 1]} : vector<2x384xf32> to vector<2x128xf32>
    %22 = vector.extract_strided_slice %19 {offsets = [0, 256], sizes = [2, 128], strides = [1, 1]} : vector<2x384xf32> to vector<2x128xf32>
    %23 = vector.extract_strided_slice %13 {offsets = [0, 384], sizes = [2, 128], strides = [1, 1]} : vector<2x512xf32> to vector<2x128xf32>
    %24 = math.tanh %23 : vector<2x128xf32>
    %25 = arith.mulf %21, %4 : vector<2x128xf32>
    %26 = arith.mulf %20, %24 : vector<2x128xf32>
    %27 = arith.addf %25, %26 : vector<2x128xf32>
    %28 = math.tanh %27 : vector<2x128xf32>
    %29 = arith.mulf %22, %28 : vector<2x128xf32>
    %30 = tpu.concatenate %29, %5 in 1 : vector<2x128xf32>, vector<2x128xf32> -> vector<2x256xf32>
    %31 = arith.truncf %30 : vector<2x256xf32> to vector<2x256xbf16>
    %c0_14 = arith.constant 0 : index
    %c0_15 = arith.constant 0 : index
    %32 = vector.load %arg4[%c0_14, %c0_15] : memref<256x512xbf16, #tpu.memory_space<vmem>>, vector<256x512xbf16>
    %cst_16 = arith.constant dense<0.000000e+00> : vector<2x512xf32>
    %33 = tpu.matmul %31, %32, %cst_16 {dimension_numbers = #tpu.dot_dimension_numbers<[1], [0], [0], [1], [0, 0, 1, 1], [], []>} : vector<2x256xbf16>, vector<256x512xbf16>, vector<2x512xf32> -> vector<2x512xf32>
    %c0_17 = arith.constant 0 : index
    %c0_18 = arith.constant 0 : index
    %34 = vector.load %arg5[%c0_17, %c0_18] : memref<1x512xf32, #tpu.memory_space<vmem>>, vector<1x512xf32>
    %35 = vector.broadcast %34 : vector<1x512xf32> to vector<2x512xf32>
    %36 = arith.addf %33, %35 : vector<2x512xf32>
    %37 = vector.extract_strided_slice %36 {offsets = [0, 0], sizes = [2, 384], strides = [1, 1]} : vector<2x512xf32> to vector<2x384xf32>
    %38 = arith.negf %37 : vector<2x384xf32>
    %39 = math.exp %38 : vector<2x384xf32>
    %cst_19 = arith.constant 1.000000e+00 : f32
    %40 = vector.broadcast %cst_19 : f32 to vector<2x384xf32>
    %41 = arith.addf %40, %39 : vector<2x384xf32>
    %42 = arith.divf %40, %41 : vector<2x384xf32>
    %43 = vector.extract_strided_slice %42 {offsets = [0, 0], sizes = [2, 128], strides = [1, 1]} : vector<2x384xf32> to vector<2x128xf32>
    %44 = vector.extract_strided_slice %42 {offsets = [0, 128], sizes = [2, 128], strides = [1, 1]} : vector<2x384xf32> to vector<2x128xf32>
    %45 = vector.extract_strided_slice %42 {offsets = [0, 256], sizes = [2, 128], strides = [1, 1]} : vector<2x384xf32> to vector<2x128xf32>
    %46 = vector.extract_strided_slice %36 {offsets = [0, 384], sizes = [2, 128], strides = [1, 1]} : vector<2x512xf32> to vector<2x128xf32>
    %47 = math.tanh %46 : vector<2x128xf32>
    %48 = arith.mulf %44, %6 : vector<2x128xf32>
    %49 = arith.mulf %43, %47 : vector<2x128xf32>
    %50 = arith.addf %48, %49 : vector<2x128xf32>
    %51 = math.tanh %50 : vector<2x128xf32>
    %52 = arith.mulf %45, %51 : vector<2x128xf32>
    %c0_20 = arith.constant 0 : index
    %c0_21 = arith.constant 0 : index
    %53 = vector.load %arg7[%c0_20, %c0_21] : memref<2x128xf32, #tpu.memory_space<vmem>>, vector<2x128xf32>
    tpu.vector_store %arg7[%c0_20, %c0_21], %29 {strides = array<i32>} : memref<2x128xf32, #tpu.memory_space<vmem>>, vector<2x128xf32>,
    %c0_22 = arith.constant 0 : index
    %c0_23 = arith.constant 0 : index
    %54 = vector.load %arg8[%c0_22, %c0_23] : memref<2x128xf32, #tpu.memory_space<vmem>>, vector<2x128xf32>
    tpu.vector_store %arg8[%c0_22, %c0_23], %27 {strides = array<i32>} : memref<2x128xf32, #tpu.memory_space<vmem>>, vector<2x128xf32>,
    %c0_24 = arith.constant 0 : index
    %c0_25 = arith.constant 0 : index
    %55 = vector.load %arg9[%c0_24, %c0_25] : memref<2x128xf32, #tpu.memory_space<vmem>>, vector<2x128xf32>
    tpu.vector_store %arg9[%c0_24, %c0_25], %52 {strides = array<i32>} : memref<2x128xf32, #tpu.memory_space<vmem>>, vector<2x128xf32>,
    %c0_26 = arith.constant 0 : index
    %c0_27 = arith.constant 0 : index
    %56 = vector.load %arg10[%c0_26, %c0_27] : memref<2x128xf32, #tpu.memory_space<vmem>>, vector<2x128xf32>
    tpu.vector_store %arg10[%c0_26, %c0_27], %50 {strides = array<i32>} : memref<2x128xf32, #tpu.memory_space<vmem>>, vector<2x128xf32>,
    %57 = arith.truncf %52 : vector<2x128xf32> to vector<2x128xbf16>
    %c0_28 = arith.constant 0 : index
    %c0_29 = arith.constant 0 : index
    %c0_30 = arith.constant 0 : index
    %58 = vector.load %arg6[%c0_28, %c0_29, %c0_30] : memref<1x2x128xbf16, #tpu.memory_space<vmem>>, vector<1x2x128xbf16>
    %59 = vector.shape_cast %58 : vector<1x2x128xbf16> to vector<2x128xbf16>
    %60 = vector.shape_cast %57 : vector<2x128xbf16> to vector<1x2x128xbf16>
    tpu.vector_store %arg6[%c0_28, %c0_29, %c0_30], %60 {strides = array<i32>} : memref<1x2x128xbf16, #tpu.memory_space<vmem>>, vector<1x2x128xbf16>,
    return
  }
  func.func @transform_0(%arg0: i32, %arg1: i32) -> (i32, i32, i32) {
    %c0_i32 = arith.constant 0 : i32
    %c0_i32_0 = arith.constant 0 : i32
    return %arg1, %arg0, %c0_i32 : i32, i32, i32
  }
  func.func @transform_1(%arg0: i32, %arg1: i32) -> (i32, i32) {
    %c0_i32 = arith.constant 0 : i32
    %c0_i32_0 = arith.constant 0 : i32
    %c0_i32_1 = arith.constant 0 : i32
    return %c0_i32, %c0_i32_0 : i32, i32
  }
  func.func @transform_2(%arg0: i32, %arg1: i32) -> (i32, i32) {
    %c0_i32 = arith.constant 0 : i32
    %c0_i32_0 = arith.constant 0 : i32
    %c0_i32_1 = arith.constant 0 : i32
    return %c0_i32, %c0_i32_0 : i32, i32
  }
  func.func @transform_3(%arg0: i32, %arg1: i32) -> (i32, i32) {
    %c0_i32 = arith.constant 0 : i32
    %c0_i32_0 = arith.constant 0 : i32
    %c0_i32_1 = arith.constant 0 : i32
    return %c0_i32, %c0_i32_0 : i32, i32
  }
  func.func @transform_4(%arg0: i32, %arg1: i32) -> (i32, i32, i32) {
    %c0_i32 = arith.constant 0 : i32
    %c0_i32_0 = arith.constant 0 : i32
    return %arg1, %arg0, %c0_i32 : i32, i32, i32
  }
}

module attributes {stable_mosaic.version = 11 : i64} {
  func.func @_matmul_kernel(%arg0: i32, %arg1: i32, %arg2: i32, %arg3: memref<16x128xbf16, #tpu.memory_space<vmem>>, %arg4: memref<128x128xbf16, #tpu.memory_space<vmem>>, %arg5: memref<1x128xf32, #tpu.memory_space<vmem>>, %arg6: memref<16x128xf32, #tpu.memory_space<vmem>>, %arg7: memref<16x128xf32, #tpu.memory_space<vmem>>) attributes {dimension_semantics = [#tpu.dimension_semantics<parallel>, #tpu.dimension_semantics<parallel>, #tpu.dimension_semantics<arbitrary>], iteration_bounds = array<i64: 1, 1, 1>, scalar_prefetch = 0 : i64, scratch_operands = 1 : i64, tpu.core_type = #tpu.core_type<tc>, window_params = [{transform_indices = @transform_0, window_bounds = array<i64: 16, 128>}, {transform_indices = @transform_1, window_bounds = array<i64: 128, 128>}, {transform_indices = @transform_2, window_bounds = array<i64: 1, 128>}, {transform_indices = @transform_3, window_bounds = array<i64: 16, 128>}]} {
    %c0_i32 = arith.constant 0 : i32
    %0 = arith.cmpi eq, %arg2, %c0_i32 : i32
    %1 = arith.extui %0 : i1 to i32
    %c0_i32_0 = arith.constant 0 : i32
    %2 = arith.cmpi ne, %1, %c0_i32_0 : i32
    scf.if %2 {
      %cst_10 = arith.constant 0.000000e+00 : f32
      %12 = vector.broadcast %cst_10 : f32 to vector<16x128xf32>
      %c0_11 = arith.constant 0 : index
      %c0_12 = arith.constant 0 : index
      %13 = vector.load %arg7[%c0_11, %c0_12] : memref<16x128xf32, #tpu.memory_space<vmem>>, vector<16x128xf32>
      tpu.vector_store %arg7[%c0_11, %c0_12], %12 {strides = array<i32>} : memref<16x128xf32, #tpu.memory_space<vmem>>, vector<16x128xf32>,
    } else {
    }
    %c0 = arith.constant 0 : index
    %c0_1 = arith.constant 0 : index
    %3 = vector.load %arg7[%c0, %c0_1] : memref<16x128xf32, #tpu.memory_space<vmem>>, vector<16x128xf32>
    %c0_2 = arith.constant 0 : index
    %c0_3 = arith.constant 0 : index
    %4 = vector.load %arg3[%c0_2, %c0_3] : memref<16x128xbf16, #tpu.memory_space<vmem>>, vector<16x128xbf16>
    %c0_4 = arith.constant 0 : index
    %c0_5 = arith.constant 0 : index
    %5 = vector.load %arg4[%c0_4, %c0_5] : memref<128x128xbf16, #tpu.memory_space<vmem>>, vector<128x128xbf16>
    %cst = arith.constant dense<0.000000e+00> : vector<16x128xf32>
    %6 = tpu.matmul %4, %5, %cst {dimension_numbers = #tpu.dot_dimension_numbers<[1], [0], [0], [1], [0, 0, 1, 1], [], []>} : vector<16x128xbf16>, vector<128x128xbf16>, vector<16x128xf32> -> vector<16x128xf32>
    %7 = arith.addf %3, %6 : vector<16x128xf32>
    %c0_6 = arith.constant 0 : index
    %c0_7 = arith.constant 0 : index
    %8 = vector.load %arg7[%c0_6, %c0_7] : memref<16x128xf32, #tpu.memory_space<vmem>>, vector<16x128xf32>
    tpu.vector_store %arg7[%c0_6, %c0_7], %7 {strides = array<i32>} : memref<16x128xf32, #tpu.memory_space<vmem>>, vector<16x128xf32>,
    %c0_i32_8 = arith.constant 0 : i32
    %9 = arith.cmpi eq, %arg2, %c0_i32_8 : i32
    %10 = arith.extui %9 : i1 to i32
    %c0_i32_9 = arith.constant 0 : i32
    %11 = arith.cmpi ne, %10, %c0_i32_9 : i32
    scf.if %11 {
      %c0_10 = arith.constant 0 : index
      %c0_11 = arith.constant 0 : index
      %12 = vector.load %arg7[%c0_10, %c0_11] : memref<16x128xf32, #tpu.memory_space<vmem>>, vector<16x128xf32>
      %c0_12 = arith.constant 0 : index
      %c0_13 = arith.constant 0 : index
      %13 = vector.load %arg5[%c0_12, %c0_13] : memref<1x128xf32, #tpu.memory_space<vmem>>, vector<1x128xf32>
      %14 = vector.broadcast %13 : vector<1x128xf32> to vector<16x128xf32>
      %15 = arith.addf %12, %14 : vector<16x128xf32>
      %c0_14 = arith.constant 0 : index
      %c0_15 = arith.constant 0 : index
      %16 = vector.load %arg6[%c0_14, %c0_15] : memref<16x128xf32, #tpu.memory_space<vmem>>, vector<16x128xf32>
      tpu.vector_store %arg6[%c0_14, %c0_15], %15 {strides = array<i32>} : memref<16x128xf32, #tpu.memory_space<vmem>>, vector<16x128xf32>,
    } else {
    }
    return
  }
  func.func @transform_0(%arg0: i32, %arg1: i32, %arg2: i32) -> (i32, i32) {
    %c0_i32 = arith.constant 0 : i32
    return %arg0, %arg2 : i32, i32
  }
  func.func @transform_1(%arg0: i32, %arg1: i32, %arg2: i32) -> (i32, i32) {
    %c0_i32 = arith.constant 0 : i32
    return %arg2, %arg1 : i32, i32
  }
  func.func @transform_2(%arg0: i32, %arg1: i32, %arg2: i32) -> (i32, i32) {
    %c0_i32 = arith.constant 0 : i32
    %c0_i32_0 = arith.constant 0 : i32
    return %c0_i32, %arg1 : i32, i32
  }
  func.func @transform_3(%arg0: i32, %arg1: i32, %arg2: i32) -> (i32, i32) {
    %c0_i32 = arith.constant 0 : i32
    return %arg0, %arg1 : i32, i32
  }
}

</mosaic_0001>

<llo_original>
// kernel: model1_forward.5
$region0: #{model1_forward.5}
  #allocation0 [shape = 'u32[]', space=smem, size = 0x4, offset = 0x4, fixed_abs, tag = 'smem constant byte address 0x4 - core index']
  #allocation1 [shape = 'u32[144,128]{1,0:T(1,128)}', space=vmem, size = 0x12000, scoped, tag = 'internal scratch']
  #allocation2 [shape = 'f32[8,512]{1,0:T(8,128)}', space=vmem, size = 0x4000, scoped, tag = 'scratch operand']
  %s0 = inlined_call_operand.vmem [shape: bf16[8,1024], index: 0, kind: input, shape index: {}]
  %s1 = inlined_call_operand.vmem [shape: bf16[1024,2048], index: 1, kind: input, shape index: {}]
  %s2 = inlined_call_operand.vmem [shape: f32[1,2048], index: 2, kind: input, shape index: {}]
  %s3 = inlined_call_operand.vmem [shape: bf16[8,2048], index: 3, kind: output, shape index: {}]
  %s4 = sld [smem:[#allocation0]]
  $region76: #{model1_forward.5} parent=0
    _
  %s6 = ssub.s32 1, %s4
  %s7 = scalar_select 0, %s6, %s4
  $region1: #{model1_forward.5} parent=0
    #allocation3 [shape = 'u8[1048576]{0}', space=vmem, size = 0x100000, scoped, tag = 'input window, operand 1']
    loop: start=0, step=1, limit=10
    $region2: #{model1_forward.5} parent=1 // loop_pre_header
      _
    $region3: #{model1_forward.5} parent=1 // loop_header
      %s9 = sphi 0, %s13
      %p10 = scmp.ge.s32.totalorder %s9, 10
      %s16 = sphi 0, %s35
      %s17 = sphi 0, %s31
      %s18 = sphi 0, %s27
      %s19 = sphi 0, %s16
      %s20 = sphi 0, %s17
      %s21 = sphi 0, %s18
      %s22 = sphi 0, %s19
      %s23 = sphi 0, %s20
      %s24 = sphi 0, %s21
      %s40 = sphi 0, %s42
      %s43 = sphi 0, %s40
      %s44 = sphi 0, %s43
      %s60 = sphi 0, %s44
      %s68 = sphi 0, %s70
      %s71 = sphi 0, %s68
      %s72 = sphi 0, %s71
      %s88 = sphi 0, %s72
      %s94 = sphi 0, %s96
      %s97 = sphi 0, %s94
      %s98 = sphi 0, %s97
      %s114 = sphi 0, %s98
      %s122 = sphi 0, %s124
      %s125 = sphi 0, %s122
      %s126 = sphi 0, %s125
      %s142 = sphi 0, %s126
    $region4: #{model1_forward.5} parent=1 // loop_header_branch
      %12 = sbr.rel (%p10) target = $region8
    $region5: #{model1_forward.5} parent=1 // loop_body
      %s14 = ssub.s32 %s9, 1
      %s15 = ssub.s32 %s9, 2
      %s25 = sadd.s32 1, %s18
      %p26 = scmp.ge.s32.totalorder %s25, 2
      %s27 = scalar_select %p26, 0, %s25
      %s28 = sadd.s32 1, %s17
      %s29 = scalar_select %p26, %s28, %s17
      %p30 = scmp.ge.s32.totalorder %s29, 4
      %s31 = scalar_select %p30, 0, %s29
      %s32 = sadd.s32 1, %s16
      %s33 = scalar_select %p30, %s32, %s16
      %p34 = scmp.ge.s32.totalorder %s33, 1
      %s35 = scalar_select %p34, 0, %s33
      %s36 = ssub.s32 %s16, %s35
      %s37 = ssub.s32 %s18, %s27
      %s38 = sor.u32 %s36, %s37
      %p39 = scmp.eq.s32.totalorder %s38, 0
      %s41 = sadd.s32 %s40, 1
      %s42 = scalar_select %p39, %s40, %s41
      %p45 = pneg %p39
      %p46 = scmp.eq.s32.totalorder %s9, 7
      %p47 = por %p45, %p46
      %p48 = scmp.ne.s32.totalorder %s40, %s43
      %p49 = scmp.eq.s32.totalorder %s9, 0
      %p50 = por %p48, %p49
      %p51 = scmp.ne.s32.totalorder %s40, %s43
      %p52 = scmp.eq.s32.totalorder %s14, 7
      %p53 = por %p51, %p52
      %p54 = scmp.ne.s32.totalorder %s43, %s44
      %p55 = scmp.eq.s32.totalorder %s14, 0
      %p56 = por %p54, %p55
      %p57 = scmp.ne.s32.totalorder %s43, %s44
      %p58 = scmp.eq.s32.totalorder %s15, 7
      %p59 = por %p57, %p58
      %p61 = scmp.ne.s32.totalorder %s44, %s60
      %p62 = scmp.eq.s32.totalorder %s15, 0
      %p63 = por %p61, %p62
      %s64 = ssub.s32 %s18, %s27
      %s65 = ssub.s32 %s17, %s31
      %s66 = sor.u32 %s64, %s65
      %p67 = scmp.eq.s32.totalorder %s66, 0
      %s69 = sadd.s32 %s68, 1
      %s70 = scalar_select %p67, %s68, %s69
      %p73 = pneg %p67
      %p74 = scmp.eq.s32.totalorder %s9, 7
      %p75 = por %p73, %p74
      %p76 = scmp.ne.s32.totalorder %s68, %s71
      %p77 = scmp.eq.s32.totalorder %s9, 0
      %p78 = por %p76, %p77
      %p79 = scmp.ne.s32.totalorder %s68, %s71
      %p80 = scmp.eq.s32.totalorder %s14, 7
      %p81 = por %p79, %p80
      %p82 = scmp.ne.s32.totalorder %s71, %s72
      %p83 = scmp.eq.s32.totalorder %s14, 0
      %p84 = por %p82, %p83
      %p85 = scmp.ne.s32.totalorder %s71, %s72
      %p86 = scmp.eq.s32.totalorder %s15, 7
      %p87 = por %p85, %p86
      %p89 = scmp.ne.s32.totalorder %s72, %s88
      %p90 = scmp.eq.s32.totalorder %s15, 0
      %p91 = por %p89, %p90
      %s92 = ssub.s32 %s17, %s31
      %p93 = scmp.eq.s32.totalorder %s92, 0
      %s95 = sadd.s32 %s94, 1
      %s96 = scalar_select %p93, %s94, %s95
      %p99 = pneg %p93
      %p100 = scmp.eq.s32.totalorder %s9, 7
      %p101 = por %p99, %p100
      %p102 = scmp.ne.s32.totalorder %s94, %s97
      %p103 = scmp.eq.s32.totalorder %s9, 0
      %p104 = por %p102, %p103
      %p105 = scmp.ne.s32.totalorder %s94, %s97
      %p106 = scmp.eq.s32.totalorder %s14, 7
      %p107 = por %p105, %p106
      %p108 = scmp.ne.s32.totalorder %s97, %s98
      %p109 = scmp.eq.s32.totalorder %s14, 0
      %p110 = por %p108, %p109
      %p111 = scmp.ne.s32.totalorder %s97, %s98
      %p112 = scmp.eq.s32.totalorder %s15, 7
      %p113 = por %p111, %p112
      %p115 = scmp.ne.s32.totalorder %s98, %s114
      %p116 = scmp.eq.s32.totalorder %s15, 0
      %p117 = por %p115, %p116
      %s118 = ssub.s32 %s16, %s35
      %s119 = ssub.s32 %s17, %s31
      %s120 = sor.u32 %s118, %s119
      %p121 = scmp.eq.s32.totalorder %s120, 0
      %s123 = sadd.s32 %s122, 1
      %s124 = scalar_select %p121, %s122, %s123
      %p127 = pneg %p121
      %p128 = scmp.eq.s32.totalorder %s9, 7
      %p129 = por %p127, %p128
      %p130 = scmp.ne.s32.totalorder %s122, %s125
      %p131 = scmp.eq.s32.totalorder %s9, 0
      %p132 = por %p130, %p131
      %p133 = scmp.ne.s32.totalorder %s122, %s125
      %p134 = scmp.eq.s32.totalorder %s14, 7
      %p135 = por %p133, %p134
      %p136 = scmp.ne.s32.totalorder %s125, %s126
      %p137 = scmp.eq.s32.totalorder %s14, 0
      %p138 = por %p136, %p137
      %p139 = scmp.ne.s32.totalorder %s125, %s126
      %p140 = scmp.eq.s32.totalorder %s15, 7
      %p141 = por %p139, %p140
      %p143 = scmp.ne.s32.totalorder %s126, %s142
      %p144 = scmp.eq.s32.totalorder %s15, 0
      %p145 = por %p143, %p144
      %p146 = scmp.le.s32.totalorder 1, %s9
      %p147 = scmp.lt.s32.totalorder %s9, 9
      %p148 = pnand %p146, %p147
      %p149 = pneg %p148
      // Predicated region
      $region9: #{model1_forward.5} parent=5 // pred_check
        _
      $region10: #{model1_forward.5} parent=5 // pred_check_branch
        %151 = sbr.rel (%p148) target = $region12
      $region11: #{model1_forward.5} parent=5 // pred_region
        %s152 = ssub.s32 %s9, 1
      $region12: #{model1_forward.5} parent=5 // pred_fallthru
        _
      %p153 = scmp.lt.s32.totalorder %s9, 8
      // Predicated region
      $region13: #{model1_forward.5} parent=5 // pred_check
        %p154 = pneg %p153
      $region14: #{model1_forward.5} parent=5 // pred_check_branch
        %156 = sbr.rel (%p154) target = $region16
      $region15: #{model1_forward.5} parent=5 // pred_region
        // Predicated region
        $region17: #{model1_forward.5} parent=15 // pred_check
          %p157 = pneg %p50
        $region18: #{model1_forward.5} parent=15 // pred_check_branch
          %159 = sbr.rel (%p157) target = $region20
        $region19: #{model1_forward.5} parent=15 // pred_region
          %s160 = smul.u32 4, %s18
          %p161 = scmp.lt.s32.totalorder %s16, 0
          %s162 = scalar_select %p161, %s16, 0
          %p163 = scmp.lt.s32.totalorder %s160, 7
          %s164 = scalar_select %p163, %s160, 7
          %s165 = smul.addr %s162, 8
          %s166 = sadd.s32 %s164, %s165
          %s167 = smul.addr %s166, 4
          %s168 = scalar_lea.vmem %s0, %s167
          %s169 = smul.u32 4, %s18
        $region20: #{model1_forward.5} parent=15 // pred_fallthru
          _
        // Predicated region
        $region21: #{model1_forward.5} parent=15 // pred_check
          %p170 = pneg %p78
        $region22: #{model1_forward.5} parent=15 // pred_check_branch
          %172 = sbr.rel (%p170) target = $region24
        $region23: #{model1_forward.5} parent=15 // pred_region
          %s173 = sand.u32 %s68, 1
          %s174 = sand.u32 %s68, 1
          %s175 = smul.addr %s174, 1024
          %s176 = scalar_lea.vmem [#allocation3], %s175
          %s177 = smul.u32 64, %s18
          %s178 = smul.u32 4, %s17
          %s179 = smul.addr %s177, 16
          %s180 = sadd.s32 %s178, %s179
          %s181 = smul.addr %s180, 4
          %s182 = scalar_lea.vmem %s1, %s181
          // Predicated region
          $region25: #{model1_forward.5} parent=23 // pred_check
            _
          $region26: #{model1_forward.5} parent=23 // pred_check_branch
            %184 = sbr.rel (0) target = $region28
          $region27: #{model1_forward.5} parent=23 // pred_region
            // Predicated region
            $region29: #{model1_forward.5} parent=27 // pred_check
              _
            $region30: #{model1_forward.5} parent=27 // pred_check_branch
              %186 = sbr.rel (0) target = $region32
            $region31: #{model1_forward.5} parent=27 // pred_region
              loop: start=0, step=1, limit=1
              $region33: #{model1_forward.5} parent=31 // loop_pre_header
                _
              $region34: #{model1_forward.5} parent=31 // loop_header
                %s188 = sphi 0, %s192
                %p189 = scmp.ge.s32.totalorder %s188, 1
                %s193 = sphi %s182, %s182
                %s194 = sphi %s176, %s176
              $region35: #{model1_forward.5} parent=31 // loop_header_branch
                %191 = sbr.rel (%p189) target = $region39
              $region36: #{model1_forward.5} parent=31 // loop_body
                %v195 = vld [vmem:[%s193] sm:$0xff]
                %196 = vst [vmem:[%s194] sm:$0xff] %v195
                %v197 = vld [vmem:[%s193 + $0x8] sm:$0xff]
                %198 = vst [vmem:[%s194 + $0x8] sm:$0xff] %v197
                %v199 = vld [vmem:[%s193 + $0x40] sm:$0xff]
                %200 = vst [vmem:[%s194 + $0x10] sm:$0xff] %v199
                %v201 = vld [vmem:[%s193 + $0x48] sm:$0xff]
                %202 = vst [vmem:[%s194 + $0x18] sm:$0xff] %v201
                %v203 = vld [vmem:[%s193 + $0x80] sm:$0xff]
                %204 = vst [vmem:[%s194 + $0x20] sm:$0xff] %v203
                %v205 = vld [vmem:[%s193 + $0x88] sm:$0xff]
                %206 = vst [vmem:[%s194 + $0x28] sm:$0xff] %v205
                %v207 = vld [vmem:[%s193 + $0xc0] sm:$0xff]
                %208 = vst [vmem:[%s194 + $0x30] sm:$0xff] %v207
                %v209 = vld [vmem:[%s193 + $0xc8] sm:$0xff]
                %210 = vst [vmem:[%s194 + $0x38] sm:$0xff] %v209
                %v211 = vld [vmem:[%s193 + $0x100] sm:$0xff]
                %212 = vst [vmem:[%s194 + $0x40] sm:$0xff] %v211
                %v213 = vld [vmem:[%s193 + $0x108] sm:$0xff]
                %214 = vst [vmem:[%s194 + $0x48] sm:$0xff] %v213
                %v215 = vld [vmem:[%s193 + $0x140] sm:$0xff]
                %216 = vst [vmem:[%s194 + $0x50] sm:$0xff] %v215
                %v217 = vld [vmem:[%s193 + $0x148] sm:$0xff]
                %218 = vst [vmem:[%s194 + $0x58] sm:$0xff] %v217
                %v219 = vld [vmem:[%s193 + $0x180] sm:$0xff]
                %220 = vst [vmem:[%s194 + $0x60] sm:$0xff] %v219
                %v221 = vld [vmem:[%s193 + $0x188] sm:$0xff]
                %222 = vst [vmem:[%s194 + $0x68] sm:$0xff] %v221
                %v223 = vld [vmem:[%s193 + $0x1c0] sm:$0xff]
                %224 = vst [vmem:[%s194 + $0x70] sm:$0xff] %v223
                %v225 = vld [vmem:[%s193 + $0x1c8] sm:$0xff]
                %226 = vst [vmem:[%s194 + $0x78] sm:$0xff] %v225
                %v227 = vld [vmem:[%s193 + $0x200] sm:$0xff]
                %228 = vst [vmem:[%s194 + $0x80] sm:$0xff] %v227
                %v229 = vld [vmem:[%s193 + $0x208] sm:$0xff]
                %230 = vst [vmem:[%s194 + $0x88] sm:$0xff] %v229
                %v231 = vld [vmem:[%s193 + $0x240] sm:$0xff]
                %232 = vst [vmem:[%s194 + $0x90] sm:$0xff] %v231
                %v233 = vld [vmem:[%s193 + $0x248] sm:$0xff]
                %234 = vst [vmem:[%s194 + $0x98] sm:$0xff] %v233
                %v235 = vld [vmem:[%s193 + $0x280] sm:$0xff]
                %236 = vst [vmem:[%s194 + $0xa0] sm:$0xff] %v235
                %v237 = vld [vmem:[%s193 + $0x288] sm:$0xff]
                %238 = vst [vmem:[%s194 + $0xa8] sm:$0xff] %v237
                %v239 = vld [vmem:[%s193 + $0x2c0] sm:$0xff]
                %240 = vst [vmem:[%s194 + $0xb0] sm:$0xff] %v239
                %v241 = vld [vmem:[%s193 + $0x2c8] sm:$0xff]
                %242 = vst [vmem:[%s194 + $0xb8] sm:$0xff] %v241
                %v243 = vld [vmem:[%s193 + $0x300] sm:$0xff]
                %244 = vst [vmem:[%s194 + $0xc0] sm:$0xff] %v243
                %v245 = vld [vmem:[%s193 + $0x308] sm:$0xff]
                %246 = vst [vmem:[%s194 + $0xc8] sm:$0xff] %v245
                %v247 = vld [vmem:[%s193 + $0x340] sm:$0xff]
                %248 = vst [vmem:[%s194 + $0xd0] sm:$0xff] %v247
                %v249 = vld [vmem:[%s193 + $0x348] sm:$0xff]
                %250 = vst [vmem:[%s194 + $0xd8] sm:$0xff] %v249
                %v251 = vld [vmem:[%s193 + $0x380] sm:$0xff]
                %252 = vst [vmem:[%s194 + $0xe0] sm:$0xff] %v251
                %v253 = vld [vmem:[%s193 + $0x388] sm:$0xff]
                %254 = vst [vmem:[%s194 + $0xe8] sm:$0xff] %v253
                %v255 = vld [vmem:[%s193 + $0x3c0] sm:$0xff]
                %256 = vst [vmem:[%s194 + $0xf0] sm:$0xff] %v255
                %v257 = vld [vmem:[%s193 + $0x3c8] sm:$0xff]
                %258 = vst [vmem:[%s194 + $0xf8] sm:$0xff] %v257
                %v259 = vld [vmem:[%s193 + $0x400] sm:$0xff]
                %260 = vst [vmem:[%s194 + $0x100] sm:$0xff] %v259
                %v261 = vld [vmem:[%s193 + $0x408] sm:$0xff]
                %262 = vst [vmem:[%s194 + $0x108] sm:$0xff] %v261
                %v263 = vld [vmem:[%s193 + $0x440] sm:$0xff]
                %264 = vst [vmem:[%s194 + $0x110] sm:$0xff] %v263
                %v265 = vld [vmem:[%s193 + $0x448] sm:$0xff]
                %266 = vst [vmem:[%s194 + $0x118] sm:$0xff] %v265
                %v267 = vld [vmem:[%s193 + $0x480] sm:$0xff]
                %268 = vst [vmem:[%s194 + $0x120] sm:$0xff] %v267
                %v269 = vld [vmem:[%s193 + $0x488] sm:$0xff]
                %270 = vst [vmem:[%s194 + $0x128] sm:$0xff] %v269
                %v271 = vld [vmem:[%s193 + $0x4c0] sm:$0xff]
                %272 = vst [vmem:[%s194 + $0x130] sm:$0xff] %v271
                %v273 = vld [vmem:[%s193 + $0x4c8] sm:$0xff]
                %274 = vst [vmem:[%s194 + $0x138] sm:$0xff] %v273
                %v275 = vld [vmem:[%s193 + $0x500] sm:$0xff]
                %276 = vst [vmem:[%s194 + $0x140] sm:$0xff] %v275
                %v277 = vld [vmem:[%s193 + $0x508] sm:$0xff]
                %278 = vst [vmem:[%s194 + $0x148] sm:$0xff] %v277
                %v279 = vld [vmem:[%s193 + $0x540] sm:$0xff]
                %280 = vst [vmem:[%s194 + $0x150] sm:$0xff] %v279
                %v281 = vld [vmem:[%s193 + $0x548] sm:$0xff]
                %282 = vst [vmem:[%s194 + $0x158] sm:$0xff] %v281
                %v283 = vld [vmem:[%s193 + $0x580] sm:$0xff]
                %284 = vst [vmem:[%s194 + $0x160] sm:$0xff] %v283
                %v285 = vld [vmem:[%s193 + $0x588] sm:$0xff]
                %286 = vst [vmem:[%s194 + $0x168] sm:$0xff] %v285
                %v287 = vld [vmem:[%s193 + $0x5c0] sm:$0xff]
                %288 = vst [vmem:[%s194 + $0x170] sm:$0xff] %v287
                %v289 = vld [vmem:[%s193 + $0x5c8] sm:$0xff]
                %290 = vst [vmem:[%s194 + $0x178] sm:$0xff] %v289
                %v291 = vld [vmem:[%s193 + $0x600] sm:$0xff]
                %292 = vst [vmem:[%s194 + $0x180] sm:$0xff] %v291
                %v293 = vld [vmem:[%s193 + $0x608] sm:$0xff]
                %294 = vst [vmem:[%s194 + $0x188] sm:$0xff] %v293
                %v295 = vld [vmem:[%s193 + $0x640] sm:$0xff]
                %296 = vst [vmem:[%s194 + $0x190] sm:$0xff] %v295
                %v297 = vld [vmem:[%s193 + $0x648] sm:$0xff]
                %298 = vst [vmem:[%s194 + $0x198] sm:$0xff] %v297
                %v299 = vld [vmem:[%s193 + $0x680] sm:$0xff]
                %300 = vst [vmem:[%s194 + $0x1a0] sm:$0xff] %v299
                %v301 = vld [vmem:[%s193 + $0x688] sm:$0xff]
                %302 = vst [vmem:[%s194 + $0x1a8] sm:$0xff] %v301
                %v303 = vld [vmem:[%s193 + $0x6c0] sm:$0xff]
                %304 = vst [vmem:[%s194 + $0x1b0] sm:$0xff] %v303
                %v305 = vld [vmem:[%s193 + $0x6c8] sm:$0xff]
                %306 = vst [vmem:[%s194 + $0x1b8] sm:$0xff] %v305
                %v307 = vld [vmem:[%s193 + $0x700] sm:$0xff]
                %308 = vst [vmem:[%s194 + $0x1c0] sm:$0xff] %v307
                %v309 = vld [vmem:[%s193 + $0x708] sm:$0xff]
                %310 = vst [vmem:[%s194 + $0x1c8] sm:$0xff] %v309
                %v311 = vld [vmem:[%s193 + $0x740] sm:$0xff]
                %312 = vst [vmem:[%s194 + $0x1d0] sm:$0xff] %v311
                %v313 = vld [vmem:[%s193 + $0x748] sm:$0xff]
                %314 = vst [vmem:[%s194 + $0x1d8] sm:$0xff] %v313
                %v315 = vld [vmem:[%s193 + $0x780] sm:$0xff]
                %316 = vst [vmem:[%s194 + $0x1e0] sm:$0xff] %v315
                %v317 = vld [vmem:[%s193 + $0x788] sm:$0xff]
                %318 = vst [vmem:[%s194 + $0x1e8] sm:$0xff] %v317
                %v319 = vld [vmem:[%s193 + $0x7c0] sm:$0xff]
                %320 = vst [vmem:[%s194 + $0x1f0] sm:$0xff] %v319
                %v321 = vld [vmem:[%s193 + $0x7c8] sm:$0xff]
                %322 = vst [vmem:[%s194 + $0x1f8] sm:$0xff] %v321
                %v323 = vld [vmem:[%s193 + $0x800] sm:$0xff]
                %324 = vst [vmem:[%s194 + $0x200] sm:$0xff] %v323
                %v325 = vld [vmem:[%s193 + $0x808] sm:$0xff]
                %326 = vst [vmem:[%s194 + $0x208] sm:$0xff] %v325
                %v327 = vld [vmem:[%s193 + $0x840] sm:$0xff]
                %328 = vst [vmem:[%s194 + $0x210] sm:$0xff] %v327
                %v329 = vld [vmem:[%s193 + $0x848] sm:$0xff]
                %330 = vst [vmem:[%s194 + $0x218] sm:$0xff] %v329
                %v331 = vld [vmem:[%s193 + $0x880] sm:$0xff]
                %332 = vst [vmem:[%s194 + $0x220] sm:$0xff] %v331
                %v333 = vld [vmem:[%s193 + $0x888] sm:$0xff]
                %334 = vst [vmem:[%s194 + $0x228] sm:$0xff] %v333
                %v335 = vld [vmem:[%s193 + $0x8c0] sm:$0xff]
                %336 = vst [vmem:[%s194 + $0x230] sm:$0xff] %v335
                %v337 = vld [vmem:[%s193 + $0x8c8] sm:$0xff]
                %338 = vst [vmem:[%s194 + $0x238] sm:$0xff] %v337
                %v339 = vld [vmem:[%s193 + $0x900] sm:$0xff]
                %340 = vst [vmem:[%s194 + $0x240] sm:$0xff] %v339
                %v341 = vld [vmem:[%s193 + $0x908] sm:$0xff]
                %342 = vst [vmem:[%s194 + $0x248] sm:$0xff] %v341
                %v343 = vld [vmem:[%s193 + $0x940] sm:$0xff]
                %344 = vst [vmem:[%s194 + $0x250] sm:$0xff] %v343
                %v345 = vld [vmem:[%s193 + $0x948] sm:$0xff]
                %346 = vst [vmem:[%s194 + $0x258] sm:$0xff] %v345
                %v347 = vld [vmem:[%s193 + $0x980] sm:$0xff]
                %348 = vst [vmem:[%s194 + $0x260] sm:$0xff] %v347
                %v349 = vld [vmem:[%s193 + $0x988] sm:$0xff]
                %350 = vst [vmem:[%s194 + $0x268] sm:$0xff] %v349
                %v351 = vld [vmem:[%s193 + $0x9c0] sm:$0xff]
                %352 = vst [vmem:[%s194 + $0x270] sm:$0xff] %v351
                %v353 = vld [vmem:[%s193 + $0x9c8] sm:$0xff]
                %354 = vst [vmem:[%s194 + $0x278] sm:$0xff] %v353
                %v355 = vld [vmem:[%s193 + $0xa00] sm:$0xff]
                %356 = vst [vmem:[%s194 + $0x280] sm:$0xff] %v355
                %v357 = vld [vmem:[%s193 + $0xa08] sm:$0xff]
                %358 = vst [vmem:[%s194 + $0x288] sm:$0xff] %v357
                %v359 = vld [vmem:[%s193 + $0xa40] sm:$0xff]
                %360 = vst [vmem:[%s194 + $0x290] sm:$0xff] %v359
                %v361 = vld [vmem:[%s193 + $0xa48] sm:$0xff]
                %362 = vst [vmem:[%s194 + $0x298] sm:$0xff] %v361
                %v363 = vld [vmem:[%s193 + $0xa80] sm:$0xff]
                %364 = vst [vmem:[%s194 + $0x2a0] sm:$0xff] %v363
                %v365 = vld [vmem:[%s193 + $0xa88] sm:$0xff]
                %366 = vst [vmem:[%s194 + $0x2a8] sm:$0xff] %v365
                %v367 = vld [vmem:[%s193 + $0xac0] sm:$0xff]
                %368 = vst [vmem:[%s194 + $0x2b0] sm:$0xff] %v367
                %v369 = vld [vmem:[%s193 + $0xac8] sm:$0xff]
                %370 = vst [vmem:[%s194 + $0x2b8] sm:$0xff] %v369
                %v371 = vld [vmem:[%s193 + $0xb00] sm:$0xff]
                %372 = vst [vmem:[%s194 + $0x2c0] sm:$0xff] %v371
                %v373 = vld [vmem:[%s193 + $0xb08] sm:$0xff]
                %374 = vst [vmem:[%s194 + $0x2c8] sm:$0xff] %v373
                %v375 = vld [vmem:[%s193 + $0xb40] sm:$0xff]
                %376 = vst [vmem:[%s194 + $0x2d0] sm:$0xff] %v375
                %v377 = vld [vmem:[%s193 + $0xb48] sm:$0xff]
                %378 = vst [vmem:[%s194 + $0x2d8] sm:$0xff] %v377
                %v379 = vld [vmem:[%s193 + $0xb80] sm:$0xff]
                %380 = vst [vmem:[%s194 + $0x2e0] sm:$0xff] %v379
                %v381 = vld [vmem:[%s193 + $0xb88] sm:$0xff]
                %382 = vst [vmem:[%s194 + $0x2e8] sm:$0xff] %v381
                %v383 = vld [vmem:[%s193 + $0xbc0] sm:$0xff]
                %384 = vst [vmem:[%s194 + $0x2f0] sm:$0xff] %v383
                %v385 = vld [vmem:[%s193 + $0xbc8] sm:$0xff]
                %386 = vst [vmem:[%s194 + $0x2f8] sm:$0xff] %v385
                %v387 = vld [vmem:[%s193 + $0xc00] sm:$0xff]
                %388 = vst [vmem:[%s194 + $0x300] sm:$0xff] %v387
                %v389 = vld [vmem:[%s193 + $0xc08] sm:$0xff]
                %390 = vst [vmem:[%s194 + $0x308] sm:$0xff] %v389
                %v391 = vld [vmem:[%s193 + $0xc40] sm:$0xff]
                %392 = vst [vmem:[%s194 + $0x310] sm:$0xff] %v391
                %v393 = vld [vmem:[%s193 + $0xc48] sm:$0xff]
                %394 = vst [vmem:[%s194 + $0x318] sm:$0xff] %v393
                %v395 = vld [vmem:[%s193 + $0xc80] sm:$0xff]
                %396 = vst [vmem:[%s194 + $0x320] sm:$0xff] %v395
                %v397 = vld [vmem:[%s193 + $0xc88] sm:$0xff]
                %398 = vst [vmem:[%s194 + $0x328] sm:$0xff] %v397
                %v399 = vld [vmem:[%s193 + $0xcc0] sm:$0xff]
                %400 = vst [vmem:[%s194 + $0x330] sm:$0xff] %v399
                %v401 = vld [vmem:[%s193 + $0xcc8] sm:$0xff]
                %402 = vst [vmem:[%s194 + $0x338] sm:$0xff] %v401
                %v403 = vld [vmem:[%s193 + $0xd00] sm:$0xff]
                %404 = vst [vmem:[%s194 + $0x340] sm:$0xff] %v403
                %v405 = vld [vmem:[%s193 + $0xd08] sm:$0xff]
                %406 = vst [vmem:[%s194 + $0x348] sm:$0xff] %v405
                %v407 = vld [vmem:[%s193 + $0xd40] sm:$0xff]
                %408 = vst [vmem:[%s194 + $0x350] sm:$0xff] %v407
                %v409 = vld [vmem:[%s193 + $0xd48] sm:$0xff]
                %410 = vst [vmem:[%s194 + $0x358] sm:$0xff] %v409
                %v411 = vld [vmem:[%s193 + $0xd80] sm:$0xff]
                %412 = vst [vmem:[%s194 + $0x360] sm:$0xff] %v411
                %v413 = vld [vmem:[%s193 + $0xd88] sm:$0xff]
                %414 = vst [vmem:[%s194 + $0x368] sm:$0xff] %v413
                %v415 = vld [vmem:[%s193 + $0xdc0] sm:$0xff]
                %416 = vst [vmem:[%s194 + $0x370] sm:$0xff] %v415
                %v417 = vld [vmem:[%s193 + $0xdc8] sm:$0xff]
                %418 = vst [vmem:[%s194 + $0x378] sm:$0xff] %v417
                %v419 = vld [vmem:[%s193 + $0xe00] sm:$0xff]
                %420 = vst [vmem:[%s194 + $0x380] sm:$0xff] %v419
                %v421 = vld [vmem:[%s193 + $0xe08] sm:$0xff]
                %422 = vst [vmem:[%s194 + $0x388] sm:$0xff] %v421
                %v423 = vld [vmem:[%s193 + $0xe40] sm:$0xff]
                %424 = vst [vmem:[%s194 + $0x390] sm:$0xff] %v423
                %v425 = vld [vmem:[%s193 + $0xe48] sm:$0xff]
                %426 = vst [vmem:[%s194 + $0x398] sm:$0xff] %v425
                %v427 = vld [vmem:[%s193 + $0xe80] sm:$0xff]
                %428 = vst [vmem:[%s194 + $0x3a0] sm:$0xff] %v427
                %v429 = vld [vmem:[%s193 + $0xe88] sm:$0xff]
                %430 = vst [vmem:[%s194 + $0x3a8] sm:$0xff] %v429
                %v431 = vld [vmem:[%s193 + $0xec0] sm:$0xff]
                %432 = vst [vmem:[%s194 + $0x3b0] sm:$0xff] %v431
                %v433 = vld [vmem:[%s193 + $0xec8] sm:$0xff]
                %434 = vst [vmem:[%s194 + $0x3b8] sm:$0xff] %v433
                %v435 = vld [vmem:[%s193 + $0xf00] sm:$0xff]
                %436 = vst [vmem:[%s194 + $0x3c0] sm:$0xff] %v435
                %v437 = vld [vmem:[%s193 + $0xf08] sm:$0xff]
                %438 = vst [vmem:[%s194 + $0x3c8] sm:$0xff] %v437
                %v439 = vld [vmem:[%s193 + $0xf40] sm:$0xff]
                %440 = vst [vmem:[%s194 + $0x3d0] sm:$0xff] %v439
                %v441 = vld [vmem:[%s193 + $0xf48] sm:$0xff]
                %442 = vst [vmem:[%s194 + $0x3d8] sm:$0xff] %v441
                %v443 = vld [vmem:[%s193 + $0xf80] sm:$0xff]
                %444 = vst [vmem:[%s194 + $0x3e0] sm:$0xff] %v443
                %v445 = vld [vmem:[%s193 + $0xf88] sm:$0xff]
                %446 = vst [vmem:[%s194 + $0x3e8] sm:$0xff] %v445
                %v447 = vld [vmem:[%s193 + $0xfc0] sm:$0xff]
                %448 = vst [vmem:[%s194 + $0x3f0] sm:$0xff] %v447
                %v449 = vld [vmem:[%s193 + $0xfc8] sm:$0xff]
                %450 = vst [vmem:[%s194 + $0x3f8] sm:$0xff] %v449
              $region37: #{model1_forward.5} parent=31 // loop_footer
                %s192 = sadd.s32 1, %s188
              $region38: #{model1_forward.5} parent=31 // loop_footer_branch
                %187 = sbr.rel target = $region34
              $region39: #{model1_forward.5} parent=31 // loop_exit
                _
            $region32: #{model1_forward.5} parent=27 // pred_fallthru
              _
            // Predicated region
            $region40: #{model1_forward.5} parent=27 // pred_check
              _
            $region41: #{model1_forward.5} parent=27 // pred_check_branch
              %452 = sbr.rel target = $region43
            $region42: #{model1_forward.5} parent=27 // pred_region
              _
            $region43: #{model1_forward.5} parent=27 // pred_fallthru
              _
          $region28: #{model1_forward.5} parent=23 // pred_fallthru
            _
          %453 = vnop
        $region24: #{model1_forward.5} parent=15 // pred_fallthru
          _
        // Predicated region
        $region44: #{model1_forward.5} parent=15 // pred_check
          %p454 = pneg %p104
        $region45: #{model1_forward.5} parent=15 // pred_check_branch
          %456 = sbr.rel (%p454) target = $region47
        $region46: #{model1_forward.5} parent=15 // pred_region
          %s457 = smul.u32 4, %s17
          %p458 = scmp.lt.s32.totalorder %s457, 15
          %s459 = scalar_select %p458, %s457, 15
          %s460 = scalar_lea.vmem %s2, %s459
          %s461 = smul.u32 4, %s17
        $region47: #{model1_forward.5} parent=15 // pred_fallthru
          _
      $region16: #{model1_forward.5} parent=5 // pred_fallthru
        _
      %p462 = scmp.le.s32.totalorder 1, %s9
      %p463 = scmp.lt.s32.totalorder %s9, 9
      %p464 = pnand %p462, %p463
      %p465 = pneg %p464
      // Predicated region
      $region48: #{model1_forward.5} parent=5 // pred_check
        _
      $region49: #{model1_forward.5} parent=5 // pred_check_branch
        %467 = sbr.rel (%p464) target = $region51
      $region50: #{model1_forward.5} parent=5 // pred_region
        %s468 = ssub.s32 %s9, 1
        %s469 = sand.u32 %s71, 1
        %s470 = sand.u32 %s71, 1
        %s471 = smul.addr %s470, 1024
        %s472 = scalar_lea.vmem [#allocation3], %s471
        // Predicated region
        $region52: #{model1_forward.5} parent=50 // pred_check
          %p473 = pneg %p84
        $region53: #{model1_forward.5} parent=50 // pred_check_branch
          %475 = sbr.rel (%p473) target = $region55
        $region54: #{model1_forward.5} parent=50 // pred_region
          _
        $region55: #{model1_forward.5} parent=50 // pred_fallthru
          _
        %s476 = smul.u32 4, %s21
        %p477 = scmp.lt.s32.totalorder %s19, 0
        %s478 = scalar_select %p477, %s19, 0
        %p479 = scmp.lt.s32.totalorder %s476, 7
        %s480 = scalar_select %p479, %s476, 7
        %s481 = smul.addr %s478, 8
        %s482 = sadd.s32 %s480, %s481
        %s483 = smul.addr %s482, 4
        %s484 = scalar_lea.vmem %s0, %s483
        %p485 = pneg %p56
        %p486 = pneg %p53
        %s487 = sand.u32 %s71, 1
        %s488 = sand.u32 %s71, 1
        %s489 = smul.addr %s488, 1024
        %s490 = scalar_lea.vmem [#allocation3], %s489
        %p491 = pneg %p84
        %p492 = pneg %p81
        %s493 = smul.u32 4, %s20
        %p494 = scmp.lt.s32.totalorder %s493, 15
        %s495 = scalar_select %p494, %s493, 15
        %s496 = scalar_lea.vmem %s2, %s495
        %p497 = pneg %p110
        %p498 = pneg %p107
        %p499 = pneg %p138
        %p500 = pneg %p135
        %s501 = smul.u32 4, %s20
        %p502 = scmp.lt.s32.totalorder %s19, 0
        %s503 = scalar_select %p502, %s19, 0
        %p504 = scmp.lt.s32.totalorder %s501, 15
        %s505 = scalar_select %p504, %s501, 15
        %s506 = smul.addr %s503, 16
        %s507 = sadd.s32 %s505, %s506
        %s508 = smul.addr %s507, 4
        %s509 = scalar_lea.vmem %s3, %s508
        %s510 = smul.u32 4, %s21
        %p511 = scmp.lt.s32.totalorder %s19, 0
        %s512 = scalar_select %p511, %s19, 0
        %p513 = scmp.lt.s32.totalorder %s510, 7
        %s514 = scalar_select %p513, %s510, 7
        %s515 = smul.addr %s512, 8
        %s516 = sadd.s32 %s514, %s515
        %s517 = smul.addr %s516, 4
        %s518 = scalar_lea.vmem %s0, %s517
        %s519 = smul.u32 4, %s21
        %s520 = smul.u32 64, %s21
        %s521 = smul.u32 4, %s20
        %s522 = smul.u32 4, %s20
        %p523 = scmp.lt.s32.totalorder %s522, 15
        %s524 = scalar_select %p523, %s522, 15
        %s525 = scalar_lea.vmem %s2, %s524
        %s526 = smul.u32 4, %s20
        %s527 = smul.u32 4, %s20
        %p528 = scmp.lt.s32.totalorder %s19, 0
        %s529 = scalar_select %p528, %s19, 0
        %p530 = scmp.lt.s32.totalorder %s527, 15
        %s531 = scalar_select %p530, %s527, 15
        %s532 = smul.addr %s529, 16
        %s533 = sadd.s32 %s531, %s532
        %s534 = smul.addr %s533, 4
        %s535 = scalar_lea.vmem %s3, %s534
        %s536 = smul.u32 4, %s20
        %p537 = scmp.eq.s32.totalorder %s21, 0
        // Predicated region
        $region56: #{model1_forward.5} parent=50 // pred_check
          %p538 = pneg %p537
        $region57: #{model1_forward.5} parent=50 // pred_check_branch
          %540 = sbr.rel (%p538) target = $region59
        $region58: #{model1_forward.5} parent=50 // pred_region
          %541 = vst [vmem:[#allocation2] sm:$0xff] 0.0
          %542 = vst [vmem:[#allocation2 + $0x8] sm:$0xff] 0.0
          %543 = vst [vmem:[#allocation2 + $0x10] sm:$0xff] 0.0
          %544 = vst [vmem:[#allocation2 + $0x18] sm:$0xff] 0.0
        $region59: #{model1_forward.5} parent=50 // pred_fallthru
          _
        %v545 = vld [vmem:[#allocation2] sm:$0xff]
        %v546 = vld [vmem:[#allocation2 + $0x8] sm:$0xff]
        %v547 = vld [vmem:[#allocation2 + $0x10] sm:$0xff]
        %v548 = vld [vmem:[#allocation2 + $0x18] sm:$0xff]
        %v549 = vld [vmem:[%s518] sm:$0xff]
        %v550 = vld [vmem:[%s518 + $0x8] sm:$0xff]
        %v551 = vld [vmem:[%s472] sm:$0xff]
        %v552 = vld [vmem:[%s472 + $0x8] sm:$0xff]
        %v553 = vld [vmem:[%s472 + $0x10] sm:$0xff]
        %v554 = vld [vmem:[%s472 + $0x18] sm:$0xff]
        %v555 = vld [vmem:[%s472 + $0x20] sm:$0xff]
        %v556 = vld [vmem:[%s472 + $0x28] sm:$0xff]
        %v557 = vld [vmem:[%s472 + $0x30] sm:$0xff]
        %v558 = vld [vmem:[%s472 + $0x38] sm:$0xff]
        %v559 = vld [vmem:[%s472 + $0x40] sm:$0xff]
        %v560 = vld [vmem:[%s472 + $0x48] sm:$0xff]
        %v561 = vld [vmem:[%s472 + $0x50] sm:$0xff]
        %v562 = vld [vmem:[%s472 + $0x58] sm:$0xff]
        %v563 = vld [vmem:[%s472 + $0x60] sm:$0xff]
        %v564 = vld [vmem:[%s472 + $0x68] sm:$0xff]
        %v565 = vld [vmem:[%s472 + $0x70] sm:$0xff]
        %v566 = vld [vmem:[%s472 + $0x78] sm:$0xff]
        %v567 = vld [vmem:[%s472 + $0x80] sm:$0xff]
        %v568 = vld [vmem:[%s472 + $0x88] sm:$0xff]
        %v569 = vld [vmem:[%s472 + $0x90] sm:$0xff]
        %v570 = vld [vmem:[%s472 + $0x98] sm:$0xff]
        %v571 = vld [vmem:[%s472 + $0xa0] sm:$0xff]
        %v572 = vld [vmem:[%s472 + $0xa8] sm:$0xff]
        %v573 = vld [vmem:[%s472 + $0xb0] sm:$0xff]
        %v574 = vld [vmem:[%s472 + $0xb8] sm:$0xff]
        %v575 = vld [vmem:[%s472 + $0xc0] sm:$0xff]
        %v576 = vld [vmem:[%s472 + $0xc8] sm:$0xff]
        %v577 = vld [vmem:[%s472 + $0xd0] sm:$0xff]
        %v578 = vld [vmem:[%s472 + $0xd8] sm:$0xff]
        %v579 = vld [vmem:[%s472 + $0xe0] sm:$0xff]
        %v580 = vld [vmem:[%s472 + $0xe8] sm:$0xff]
        %v581 = vld [vmem:[%s472 + $0xf0] sm:$0xff]
        %v582 = vld [vmem:[%s472 + $0xf8] sm:$0xff]
        %v583 = vld [vmem:[%s472 + $0x100] sm:$0xff]
        %v584 = vld [vmem:[%s472 + $0x108] sm:$0xff]
        %v585 = vld [vmem:[%s472 + $0x110] sm:$0xff]
        %v586 = vld [vmem:[%s472 + $0x118] sm:$0xff]
        %v587 = vld [vmem:[%s472 + $0x120] sm:$0xff]
        %v588 = vld [vmem:[%s472 + $0x128] sm:$0xff]
        %v589 = vld [vmem:[%s472 + $0x130] sm:$0xff]
        %v590 = vld [vmem:[%s472 + $0x138] sm:$0xff]
        %v591 = vld [vmem:[%s472 + $0x140] sm:$0xff]
        %v592 = vld [vmem:[%s472 + $0x148] sm:$0xff]
        %v593 = vld [vmem:[%s472 + $0x150] sm:$0xff]
        %v594 = vld [vmem:[%s472 + $0x158] sm:$0xff]
        %v595 = vld [vmem:[%s472 + $0x160] sm:$0xff]
        %v596 = vld [vmem:[%s472 + $0x168] sm:$0xff]
        %v597 = vld [vmem:[%s472 + $0x170] sm:$0xff]
        %v598 = vld [vmem:[%s472 + $0x178] sm:$0xff]
        %v599 = vld [vmem:[%s472 + $0x180] sm:$0xff]
        %v600 = vld [vmem:[%s472 + $0x188] sm:$0xff]
        %v601 = vld [vmem:[%s472 + $0x190] sm:$0xff]
        %v602 = vld [vmem:[%s472 + $0x198] sm:$0xff]
        %v603 = vld [vmem:[%s472 + $0x1a0] sm:$0xff]
        %v604 = vld [vmem:[%s472 + $0x1a8] sm:$0xff]
        %v605 = vld [vmem:[%s472 + $0x1b0] sm:$0xff]
        %v606 = vld [vmem:[%s472 + $0x1b8] sm:$0xff]
        %v607 = vld [vmem:[%s472 + $0x1c0] sm:$0xff]
        %v608 = vld [vmem:[%s472 + $0x1c8] sm:$0xff]
        %v609 = vld [vmem:[%s472 + $0x1d0] sm:$0xff]
        %v610 = vld [vmem:[%s472 + $0x1d8] sm:$0xff]
        %v611 = vld [vmem:[%s472 + $0x1e0] sm:$0xff]
        %v612 = vld [vmem:[%s472 + $0x1e8] sm:$0xff]
        %v613 = vld [vmem:[%s472 + $0x1f0] sm:$0xff]
        %v614 = vld [vmem:[%s472 + $0x1f8] sm:$0xff]
        %v615 = vld [vmem:[%s472 + $0x200] sm:$0xff]
        %v616 = vld [vmem:[%s472 + $0x208] sm:$0xff]
        %v617 = vld [vmem:[%s472 + $0x210] sm:$0xff]
        %v618 = vld [vmem:[%s472 + $0x218] sm:$0xff]
        %v619 = vld [vmem:[%s472 + $0x220] sm:$0xff]
        %v620 = vld [vmem:[%s472 + $0x228] sm:$0xff]
        %v621 = vld [vmem:[%s472 + $0x230] sm:$0xff]
        %v622 = vld [vmem:[%s472 + $0x238] sm:$0xff]
        %v623 = vld [vmem:[%s472 + $0x240] sm:$0xff]
        %v624 = vld [vmem:[%s472 + $0x248] sm:$0xff]
        %v625 = vld [vmem:[%s472 + $0x250] sm:$0xff]
        %v626 = vld [vmem:[%s472 + $0x258] sm:$0xff]
        %v627 = vld [vmem:[%s472 + $0x260] sm:$0xff]
        %v628 = vld [vmem:[%s472 + $0x268] sm:$0xff]
        %v629 = vld [vmem:[%s472 + $0x270] sm:$0xff]
        %v630 = vld [vmem:[%s472 + $0x278] sm:$0xff]
        %v631 = vld [vmem:[%s472 + $0x280] sm:$0xff]
        %v632 = vld [vmem:[%s472 + $0x288] sm:$0xff]
        %v633 = vld [vmem:[%s472 + $0x290] sm:$0xff]
        %v634 = vld [vmem:[%s472 + $0x298] sm:$0xff]
        %v635 = vld [vmem:[%s472 + $0x2a0] sm:$0xff]
        %v636 = vld [vmem:[%s472 + $0x2a8] sm:$0xff]
        %v637 = vld [vmem:[%s472 + $0x2b0] sm:$0xff]
        %v638 = vld [vmem:[%s472 + $0x2b8] sm:$0xff]
        %v639 = vld [vmem:[%s472 + $0x2c0] sm:$0xff]
        %v640 = vld [vmem:[%s472 + $0x2c8] sm:$0xff]
        %v641 = vld [vmem:[%s472 + $0x2d0] sm:$0xff]
        %v642 = vld [vmem:[%s472 + $0x2d8] sm:$0xff]
        %v643 = vld [vmem:[%s472 + $0x2e0] sm:$0xff]
        %v644 = vld [vmem:[%s472 + $0x2e8] sm:$0xff]
        %v645 = vld [vmem:[%s472 + $0x2f0] sm:$0xff]
        %v646 = vld [vmem:[%s472 + $0x2f8] sm:$0xff]
        %v647 = vld [vmem:[%s472 + $0x300] sm:$0xff]
        %v648 = vld [vmem:[%s472 + $0x308] sm:$0xff]
        %v649 = vld [vmem:[%s472 + $0x310] sm:$0xff]
        %v650 = vld [vmem:[%s472 + $0x318] sm:$0xff]
        %v651 = vld [vmem:[%s472 + $0x320] sm:$0xff]
        %v652 = vld [vmem:[%s472 + $0x328] sm:$0xff]
        %v653 = vld [vmem:[%s472 + $0x330] sm:$0xff]
        %v654 = vld [vmem:[%s472 + $0x338] sm:$0xff]
        %v655 = vld [vmem:[%s472 + $0x340] sm:$0xff]
        %v656 = vld [vmem:[%s472 + $0x348] sm:$0xff]
        %v657 = vld [vmem:[%s472 + $0x350] sm:$0xff]
        %v658 = vld [vmem:[%s472 + $0x358] sm:$0xff]
        %v659 = vld [vmem:[%s472 + $0x360] sm:$0xff]
        %v660 = vld [vmem:[%s472 + $0x368] sm:$0xff]
        %v661 = vld [vmem:[%s472 + $0x370] sm:$0xff]
        %v662 = vld [vmem:[%s472 + $0x378] sm:$0xff]
        %v663 = vld [vmem:[%s472 + $0x380] sm:$0xff]
        %v664 = vld [vmem:[%s472 + $0x388] sm:$0xff]
        %v665 = vld [vmem:[%s472 + $0x390] sm:$0xff]
        %v666 = vld [vmem:[%s472 + $0x398] sm:$0xff]
        %v667 = vld [vmem:[%s472 + $0x3a0] sm:$0xff]
        %v668 = vld [vmem:[%s472 + $0x3a8] sm:$0xff]
        %v669 = vld [vmem:[%s472 + $0x3b0] sm:$0xff]
        %v670 = vld [vmem:[%s472 + $0x3b8] sm:$0xff]
        %v671 = vld [vmem:[%s472 + $0x3c0] sm:$0xff]
        %v672 = vld [vmem:[%s472 + $0x3c8] sm:$0xff]
        %v673 = vld [vmem:[%s472 + $0x3d0] sm:$0xff]
        %v674 = vld [vmem:[%s472 + $0x3d8] sm:$0xff]
        %v675 = vld [vmem:[%s472 + $0x3e0] sm:$0xff]
        %v676 = vld [vmem:[%s472 + $0x3e8] sm:$0xff]
        %v677 = vld [vmem:[%s472 + $0x3f0] sm:$0xff]
        %v678 = vld [vmem:[%s472 + $0x3f8] sm:$0xff]
        %v681 = vunpack.c.l.b16 %v549
        %v682 = vunpack.c.h.b16 %v549
        %v683 = vunpack.c.l.b16 %v550
        %v684 = vunpack.c.h.b16 %v550
        %v685 = vpack.c.b16 %v681, %v681
        %v686 = vpack.c.b16 %v682, %v682
        %v687 = vpack.c.b16 %v683, %v683
        %v688 = vpack.c.b16 %v684, %v684
        %v821 = vunpack.c.l.b16 %v551
        %v822 = vunpack.c.h.b16 %v551
        %v823 = vunpack.c.l.b16 %v552
        %v824 = vunpack.c.h.b16 %v552
        %v825 = vunpack.c.l.b16 %v553
        %v826 = vunpack.c.h.b16 %v553
        %v827 = vunpack.c.l.b16 %v554
        %v828 = vunpack.c.h.b16 %v554
        %v829 = vunpack.c.l.b16 %v555
        %v830 = vunpack.c.h.b16 %v555
        %v831 = vunpack.c.l.b16 %v556
        %v832 = vunpack.c.h.b16 %v556
        %v833 = vunpack.c.l.b16 %v557
        %v834 = vunpack.c.h.b16 %v557
        %v835 = vunpack.c.l.b16 %v558
        %v836 = vunpack.c.h.b16 %v558
        %v837 = vunpack.c.l.b16 %v559
        %v838 = vunpack.c.h.b16 %v559
        %v839 = vunpack.c.l.b16 %v560
        %v840 = vunpack.c.h.b16 %v560
        %v841 = vunpack.c.l.b16 %v561
        %v842 = vunpack.c.h.b16 %v561
        %v843 = vunpack.c.l.b16 %v562
        %v844 = vunpack.c.h.b16 %v562
        %v845 = vunpack.c.l.b16 %v563
        %v846 = vunpack.c.h.b16 %v563
        %v847 = vunpack.c.l.b16 %v564
        %v848 = vunpack.c.h.b16 %v564
        %v849 = vunpack.c.l.b16 %v565
        %v850 = vunpack.c.h.b16 %v565
        %v851 = vunpack.c.l.b16 %v566
        %v852 = vunpack.c.h.b16 %v566
        %v853 = vunpack.c.l.b16 %v567
        %v854 = vunpack.c.h.b16 %v567
        %v855 = vunpack.c.l.b16 %v568
        %v856 = vunpack.c.h.b16 %v568
        %v857 = vunpack.c.l.b16 %v569
        %v858 = vunpack.c.h.b16 %v569
        %v859 = vunpack.c.l.b16 %v570
        %v860 = vunpack.c.h.b16 %v570
        %v861 = vunpack.c.l.b16 %v571
        %v862 = vunpack.c.h.b16 %v571
        %v863 = vunpack.c.l.b16 %v572
        %v864 = vunpack.c.h.b16 %v572
        %v865 = vunpack.c.l.b16 %v573
        %v866 = vunpack.c.h.b16 %v573
        %v867 = vunpack.c.l.b16 %v574
        %v868 = vunpack.c.h.b16 %v574
        %v869 = vunpack.c.l.b16 %v575
        %v870 = vunpack.c.h.b16 %v575
        %v871 = vunpack.c.l.b16 %v576
        %v872 = vunpack.c.h.b16 %v576
        %v873 = vunpack.c.l.b16 %v577
        %v874 = vunpack.c.h.b16 %v577
        %v875 = vunpack.c.l.b16 %v578
        %v876 = vunpack.c.h.b16 %v578
        %v877 = vunpack.c.l.b16 %v579
        %v878 = vunpack.c.h.b16 %v579
        %v879 = vunpack.c.l.b16 %v580
        %v880 = vunpack.c.h.b16 %v580
        %v881 = vunpack.c.l.b16 %v581
        %v882 = vunpack.c.h.b16 %v581
        %v883 = vunpack.c.l.b16 %v582
        %v884 = vunpack.c.h.b16 %v582
        %v885 = vunpack.c.l.b16 %v583
        %v886 = vunpack.c.h.b16 %v583
        %v887 = vunpack.c.l.b16 %v584
        %v888 = vunpack.c.h.b16 %v584
        %v889 = vunpack.c.l.b16 %v585
        %v890 = vunpack.c.h.b16 %v585
        %v891 = vunpack.c.l.b16 %v586
        %v892 = vunpack.c.h.b16 %v586
        %v893 = vunpack.c.l.b16 %v587
        %v894 = vunpack.c.h.b16 %v587
        %v895 = vunpack.c.l.b16 %v588
        %v896 = vunpack.c.h.b16 %v588
        %v897 = vunpack.c.l.b16 %v589
        %v898 = vunpack.c.h.b16 %v589
        %v899 = vunpack.c.l.b16 %v590
        %v900 = vunpack.c.h.b16 %v590
        %v901 = vunpack.c.l.b16 %v591
        %v902 = vunpack.c.h.b16 %v591
        %v903 = vunpack.c.l.b16 %v592
        %v904 = vunpack.c.h.b16 %v592
        %v905 = vunpack.c.l.b16 %v593
        %v906 = vunpack.c.h.b16 %v593
        %v907 = vunpack.c.l.b16 %v594
        %v908 = vunpack.c.h.b16 %v594
        %v909 = vunpack.c.l.b16 %v595
        %v910 = vunpack.c.h.b16 %v595
        %v911 = vunpack.c.l.b16 %v596
        %v912 = vunpack.c.h.b16 %v596
        %v913 = vunpack.c.l.b16 %v597
        %v914 = vunpack.c.h.b16 %v597
        %v915 = vunpack.c.l.b16 %v598
        %v916 = vunpack.c.h.b16 %v598
        %v917 = vunpack.c.l.b16 %v599
        %v918 = vunpack.c.h.b16 %v599
        %v919 = vunpack.c.l.b16 %v600
        %v920 = vunpack.c.h.b16 %v600
        %v921 = vunpack.c.l.b16 %v601
        %v922 = vunpack.c.h.b16 %v601
        %v923 = vunpack.c.l.b16 %v602
        %v924 = vunpack.c.h.b16 %v602
        %v925 = vunpack.c.l.b16 %v603
        %v926 = vunpack.c.h.b16 %v603
        %v927 = vunpack.c.l.b16 %v604
        %v928 = vunpack.c.h.b16 %v604
        %v929 = vunpack.c.l.b16 %v605
        %v930 = vunpack.c.h.b16 %v605
        %v931 = vunpack.c.l.b16 %v606
        %v932 = vunpack.c.h.b16 %v606
        %v933 = vunpack.c.l.b16 %v607
        %v934 = vunpack.c.h.b16 %v607
        %v935 = vunpack.c.l.b16 %v608
        %v936 = vunpack.c.h.b16 %v608
        %v937 = vunpack.c.l.b16 %v609
        %v938 = vunpack.c.h.b16 %v609
        %v939 = vunpack.c.l.b16 %v610
        %v940 = vunpack.c.h.b16 %v610
        %v941 = vunpack.c.l.b16 %v611
        %v942 = vunpack.c.h.b16 %v611
        %v943 = vunpack.c.l.b16 %v612
        %v944 = vunpack.c.h.b16 %v612
        %v945 = vunpack.c.l.b16 %v613
        %v946 = vunpack.c.h.b16 %v613
        %v947 = vunpack.c.l.b16 %v614
        %v948 = vunpack.c.h.b16 %v614
        %v949 = vunpack.c.l.b16 %v615
        %v950 = vunpack.c.h.b16 %v615
        %v951 = vunpack.c.l.b16 %v616
        %v952 = vunpack.c.h.b16 %v616
        %v953 = vunpack.c.l.b16 %v617
        %v954 = vunpack.c.h.b16 %v617
        %v955 = vunpack.c.l.b16 %v618
        %v956 = vunpack.c.h.b16 %v618
        %v957 = vunpack.c.l.b16 %v619
        %v958 = vunpack.c.h.b16 %v619
        %v959 = vunpack.c.l.b16 %v620
        %v960 = vunpack.c.h.b16 %v620
        %v961 = vunpack.c.l.b16 %v621
        %v962 = vunpack.c.h.b16 %v621
        %v963 = vunpack.c.l.b16 %v622
        %v964 = vunpack.c.h.b16 %v622
        %v965 = vunpack.c.l.b16 %v623
        %v966 = vunpack.c.h.b16 %v623
        %v967 = vunpack.c.l.b16 %v624
        %v968 = vunpack.c.h.b16 %v624
        %v969 = vunpack.c.l.b16 %v625
        %v970 = vunpack.c.h.b16 %v625
        %v971 = vunpack.c.l.b16 %v626
        %v972 = vunpack.c.h.b16 %v626
        %v973 = vunpack.c.l.b16 %v627
        %v974 = vunpack.c.h.b16 %v627
        %v975 = vunpack.c.l.b16 %v628
        %v976 = vunpack.c.h.b16 %v628
        %v977 = vunpack.c.l.b16 %v629
        %v978 = vunpack.c.h.b16 %v629
        %v979 = vunpack.c.l.b16 %v630
        %v980 = vunpack.c.h.b16 %v630
        %v981 = vunpack.c.l.b16 %v631
        %v982 = vunpack.c.h.b16 %v631
        %v983 = vunpack.c.l.b16 %v632
        %v984 = vunpack.c.h.b16 %v632
        %v985 = vunpack.c.l.b16 %v633
        %v986 = vunpack.c.h.b16 %v633
        %v987 = vunpack.c.l.b16 %v634
        %v988 = vunpack.c.h.b16 %v634
        %v989 = vunpack.c.l.b16 %v635
        %v990 = vunpack.c.h.b16 %v635
        %v991 = vunpack.c.l.b16 %v636
        %v992 = vunpack.c.h.b16 %v636
        %v993 = vunpack.c.l.b16 %v637
        %v994 = vunpack.c.h.b16 %v637
        %v995 = vunpack.c.l.b16 %v638
        %v996 = vunpack.c.h.b16 %v638
        %v997 = vunpack.c.l.b16 %v639
        %v998 = vunpack.c.h.b16 %v639
        %v999 = vunpack.c.l.b16 %v640
        %v1000 = vunpack.c.h.b16 %v640
        %v1001 = vunpack.c.l.b16 %v641
        %v1002 = vunpack.c.h.b16 %v641
        %v1003 = vunpack.c.l.b16 %v642
        %v1004 = vunpack.c.h.b16 %v642
        %v1005 = vunpack.c.l.b16 %v643
        %v1006 = vunpack.c.h.b16 %v643
        %v1007 = vunpack.c.l.b16 %v644
        %v1008 = vunpack.c.h.b16 %v644
        %v1009 = vunpack.c.l.b16 %v645
        %v1010 = vunpack.c.h.b16 %v645
        %v1011 = vunpack.c.l.b16 %v646
        %v1012 = vunpack.c.h.b16 %v646
        %v1013 = vunpack.c.l.b16 %v647
        %v1014 = vunpack.c.h.b16 %v647
        %v1015 = vunpack.c.l.b16 %v648
        %v1016 = vunpack.c.h.b16 %v648
        %v1017 = vunpack.c.l.b16 %v649
        %v1018 = vunpack.c.h.b16 %v649
        %v1019 = vunpack.c.l.b16 %v650
        %v1020 = vunpack.c.h.b16 %v650
        %v1021 = vunpack.c.l.b16 %v651
        %v1022 = vunpack.c.h.b16 %v651
        %v1023 = vunpack.c.l.b16 %v652
        %v1024 = vunpack.c.h.b16 %v652
        %v1025 = vunpack.c.l.b16 %v653
        %v1026 = vunpack.c.h.b16 %v653
        %v1027 = vunpack.c.l.b16 %v654
        %v1028 = vunpack.c.h.b16 %v654
        %v1029 = vunpack.c.l.b16 %v655
        %v1030 = vunpack.c.h.b16 %v655
        %v1031 = vunpack.c.l.b16 %v656
        %v1032 = vunpack.c.h.b16 %v656
        %v1033 = vunpack.c.l.b16 %v657
        %v1034 = vunpack.c.h.b16 %v657
        %v1035 = vunpack.c.l.b16 %v658
        %v1036 = vunpack.c.h.b16 %v658
        %v1037 = vunpack.c.l.b16 %v659
        %v1038 = vunpack.c.h.b16 %v659
        %v1039 = vunpack.c.l.b16 %v660
        %v1040 = vunpack.c.h.b16 %v660
        %v1041 = vunpack.c.l.b16 %v661
        %v1042 = vunpack.c.h.b16 %v661
        %v1043 = vunpack.c.l.b16 %v662
        %v1044 = vunpack.c.h.b16 %v662
        %v1045 = vunpack.c.l.b16 %v663
        %v1046 = vunpack.c.h.b16 %v663
        %v1047 = vunpack.c.l.b16 %v664
        %v1048 = vunpack.c.h.b16 %v664
        %v1049 = vunpack.c.l.b16 %v665
        %v1050 = vunpack.c.h.b16 %v665
        %v1051 = vunpack.c.l.b16 %v666
        %v1052 = vunpack.c.h.b16 %v666
        %v1053 = vunpack.c.l.b16 %v667
        %v1054 = vunpack.c.h.b16 %v667
        %v1055 = vunpack.c.l.b16 %v668
        %v1056 = vunpack.c.h.b16 %v668
        %v1057 = vunpack.c.l.b16 %v669
        %v1058 = vunpack.c.h.b16 %v669
        %v1059 = vunpack.c.l.b16 %v670
        %v1060 = vunpack.c.h.b16 %v670
        %v1061 = vunpack.c.l.b16 %v671
        %v1062 = vunpack.c.h.b16 %v671
        %v1063 = vunpack.c.l.b16 %v672
        %v1064 = vunpack.c.h.b16 %v672
        %v1065 = vunpack.c.l.b16 %v673
        %v1066 = vunpack.c.h.b16 %v673
        %v1067 = vunpack.c.l.b16 %v674
        %v1068 = vunpack.c.h.b16 %v674
        %v1069 = vunpack.c.l.b16 %v675
        %v1070 = vunpack.c.h.b16 %v675
        %v1071 = vunpack.c.l.b16 %v676
        %v1072 = vunpack.c.h.b16 %v676
        %v1073 = vunpack.c.l.b16 %v677
        %v1074 = vunpack.c.h.b16 %v677
        %v1075 = vunpack.c.l.b16 %v678
        %v1076 = vunpack.c.h.b16 %v678
        %v1077 = vpack.c.b16 %v825, %v821
        %v1078 = vpack.c.b16 %v826, %v822
        %v1079 = vpack.c.b16 %v827, %v823
        %v1080 = vpack.c.b16 %v828, %v824
        %v1081 = vpack.c.b16 %v833, %v829
        %v1082 = vpack.c.b16 %v834, %v830
        %v1083 = vpack.c.b16 %v835, %v831
        %v1084 = vpack.c.b16 %v836, %v832
        %v1085 = vpack.c.b16 %v841, %v837
        %v1086 = vpack.c.b16 %v842, %v838
        %v1087 = vpack.c.b16 %v843, %v839
        %v1088 = vpack.c.b16 %v844, %v840
        %v1089 = vpack.c.b16 %v849, %v845
        %v1090 = vpack.c.b16 %v850, %v846
        %v1091 = vpack.c.b16 %v851, %v847
        %v1092 = vpack.c.b16 %v852, %v848
        %v1093 = vpack.c.b16 %v857, %v853
        %v1094 = vpack.c.b16 %v858, %v854
        %v1095 = vpack.c.b16 %v859, %v855
        %v1096 = vpack.c.b16 %v860, %v856
        %v1097 = vpack.c.b16 %v865, %v861
        %v1098 = vpack.c.b16 %v866, %v862
        %v1099 = vpack.c.b16 %v867, %v863
        %v1100 = vpack.c.b16 %v868, %v864
        %v1101 = vpack.c.b16 %v873, %v869
        %v1102 = vpack.c.b16 %v874, %v870
        %v1103 = vpack.c.b16 %v875, %v871
        %v1104 = vpack.c.b16 %v876, %v872
        %v1105 = vpack.c.b16 %v881, %v877
        %v1106 = vpack.c.b16 %v882, %v878
        %v1107 = vpack.c.b16 %v883, %v879
        %v1108 = vpack.c.b16 %v884, %v880
        %v1109 = vpack.c.b16 %v889, %v885
        %v1110 = vpack.c.b16 %v890, %v886
        %v1111 = vpack.c.b16 %v891, %v887
        %v1112 = vpack.c.b16 %v892, %v888
        %v1113 = vpack.c.b16 %v897, %v893
        %v1114 = vpack.c.b16 %v898, %v894
        %v1115 = vpack.c.b16 %v899, %v895
        %v1116 = vpack.c.b16 %v900, %v896
        %v1117 = vpack.c.b16 %v905, %v901
        %v1118 = vpack.c.b16 %v906, %v902
        %v1119 = vpack.c.b16 %v907, %v903
        %v1120 = vpack.c.b16 %v908, %v904
        %v1121 = vpack.c.b16 %v913, %v909
        %v1122 = vpack.c.b16 %v914, %v910
        %v1123 = vpack.c.b16 %v915, %v911
        %v1124 = vpack.c.b16 %v916, %v912
        %v1125 = vpack.c.b16 %v921, %v917
        %v1126 = vpack.c.b16 %v922, %v918
        %v1127 = vpack.c.b16 %v923, %v919
        %v1128 = vpack.c.b16 %v924, %v920
        %v1129 = vpack.c.b16 %v929, %v925
        %v1130 = vpack.c.b16 %v930, %v926
        %v1131 = vpack.c.b16 %v931, %v927
        %v1132 = vpack.c.b16 %v932, %v928
        %v1133 = vpack.c.b16 %v937, %v933
        %v1134 = vpack.c.b16 %v938, %v934
        %v1135 = vpack.c.b16 %v939, %v935
        %v1136 = vpack.c.b16 %v940, %v936
        %v1137 = vpack.c.b16 %v945, %v941
        %v1138 = vpack.c.b16 %v946, %v942
        %v1139 = vpack.c.b16 %v947, %v943
        %v1140 = vpack.c.b16 %v948, %v944
        %v1141 = vpack.c.b16 %v953, %v949
        %v1142 = vpack.c.b16 %v954, %v950
        %v1143 = vpack.c.b16 %v955, %v951
        %v1144 = vpack.c.b16 %v956, %v952
        %v1145 = vpack.c.b16 %v961, %v957
        %v1146 = vpack.c.b16 %v962, %v958
        %v1147 = vpack.c.b16 %v963, %v959
        %v1148 = vpack.c.b16 %v964, %v960
        %v1149 = vpack.c.b16 %v969, %v965
        %v1150 = vpack.c.b16 %v970, %v966
        %v1151 = vpack.c.b16 %v971, %v967
        %v1152 = vpack.c.b16 %v972, %v968
        %v1153 = vpack.c.b16 %v977, %v973
        %v1154 = vpack.c.b16 %v978, %v974
        %v1155 = vpack.c.b16 %v979, %v975
        %v1156 = vpack.c.b16 %v980, %v976
        %v1157 = vpack.c.b16 %v985, %v981
        %v1158 = vpack.c.b16 %v986, %v982
        %v1159 = vpack.c.b16 %v987, %v983
        %v1160 = vpack.c.b16 %v988, %v984
        %v1161 = vpack.c.b16 %v993, %v989
        %v1162 = vpack.c.b16 %v994, %v990
        %v1163 = vpack.c.b16 %v995, %v991
        %v1164 = vpack.c.b16 %v996, %v992
        %v1165 = vpack.c.b16 %v1001, %v997
        %v1166 = vpack.c.b16 %v1002, %v998
        %v1167 = vpack.c.b16 %v1003, %v999
        %v1168 = vpack.c.b16 %v1004, %v1000
        %v1169 = vpack.c.b16 %v1009, %v1005
        %v1170 = vpack.c.b16 %v1010, %v1006
        %v1171 = vpack.c.b16 %v1011, %v1007
        %v1172 = vpack.c.b16 %v1012, %v1008
        %v1173 = vpack.c.b16 %v1017, %v1013
        %v1174 = vpack.c.b16 %v1018, %v1014
        %v1175 = vpack.c.b16 %v1019, %v1015
        %v1176 = vpack.c.b16 %v1020, %v1016
        %v1177 = vpack.c.b16 %v1025, %v1021
        %v1178 = vpack.c.b16 %v1026, %v1022
        %v1179 = vpack.c.b16 %v1027, %v1023
        %v1180 = vpack.c.b16 %v1028, %v1024
        %v1181 = vpack.c.b16 %v1033, %v1029
        %v1182 = vpack.c.b16 %v1034, %v1030
        %v1183 = vpack.c.b16 %v1035, %v1031
        %v1184 = vpack.c.b16 %v1036, %v1032
        %v1185 = vpack.c.b16 %v1041, %v1037
        %v1186 = vpack.c.b16 %v1042, %v1038
        %v1187 = vpack.c.b16 %v1043, %v1039
        %v1188 = vpack.c.b16 %v1044, %v1040
        %v1189 = vpack.c.b16 %v1049, %v1045
        %v1190 = vpack.c.b16 %v1050, %v1046
        %v1191 = vpack.c.b16 %v1051, %v1047
        %v1192 = vpack.c.b16 %v1052, %v1048
        %v1193 = vpack.c.b16 %v1057, %v1053
        %v1194 = vpack.c.b16 %v1058, %v1054
        %v1195 = vpack.c.b16 %v1059, %v1055
        %v1196 = vpack.c.b16 %v1060, %v1056
        %v1197 = vpack.c.b16 %v1065, %v1061
        %v1198 = vpack.c.b16 %v1066, %v1062
        %v1199 = vpack.c.b16 %v1067, %v1063
        %v1200 = vpack.c.b16 %v1068, %v1064
        %v1201 = vpack.c.b16 %v1073, %v1069
        %v1202 = vpack.c.b16 %v1074, %v1070
        %v1203 = vpack.c.b16 %v1075, %v1071
        %v1204 = vpack.c.b16 %v1076, %v1072
        %1333 = vmatprep.subr.bf16.mxu0 %v1078
        %1334 = vmatpush1.bf16.msra.mxu0 %v1077
        %1335 = vmatprep.subr.bf16.mxu0 %v1082
        %1336 = vmatpush1.bf16.msra.mxu0 %v1081
        %1337 = vmatprep.subr.bf16.mxu0 %v1086
        %1338 = vmatpush1.bf16.msra.mxu0 %v1085
        %1339 = vmatprep.subr.bf16.mxu0 %v1090
        %1340 = vmatpush1.bf16.msra.mxu0 %v1089
        %1341 = vmatprep.subr.bf16.mxu0 %v1094
        %1342 = vmatpush1.bf16.msra.mxu0 %v1093
        %1343 = vmatprep.subr.bf16.mxu0 %v1098
        %1344 = vmatpush1.bf16.msra.mxu0 %v1097
        %1345 = vmatprep.subr.bf16.mxu0 %v1102
        %1346 = vmatpush1.bf16.msra.mxu0 %v1101
        %1347 = vmatprep.subr.bf16.mxu0 %v1106
        %1348 = vmatpush1.bf16.msra.mxu0 %v1105
        %1349 = vmatprep.subr.bf16.mxu0 %v1110
        %1350 = vmatpush1.bf16.msra.mxu0 %v1109
        %1351 = vmatprep.subr.bf16.mxu0 %v1114
        %1352 = vmatpush1.bf16.msra.mxu0 %v1113
        %1353 = vmatprep.subr.bf16.mxu0 %v1118
        %1354 = vmatpush1.bf16.msra.mxu0 %v1117
        %1355 = vmatprep.subr.bf16.mxu0 %v1122
        %1356 = vmatpush1.bf16.msra.mxu0 %v1121
        %1357 = vmatprep.subr.bf16.mxu0 %v1126
        %1358 = vmatpush1.bf16.msra.mxu0 %v1125
        %1359 = vmatprep.subr.bf16.mxu0 %v1130
        %1360 = vmatpush1.bf16.msra.mxu0 %v1129
        %1361 = vmatprep.subr.bf16.mxu0 %v1134
        %1362 = vmatpush1.bf16.msra.mxu0 %v1133
        %1363 = vmatprep.subr.bf16.mxu0 %v1138
        %1364 = vmatpush1.bf16.msra.mxu0 %v1137
        %1365 = vmatprep.mubr.bf16.mxu0 %v686
        %1366 = vmatmul.mubr.bf16.gmra.mrb[0].mxu0 %v685
        %v1367 = vpop.f32.mrb[0].mxu0
        %v1368 = vadd.f32 0.0, %v1367
        %v1369 = vpop.f32.mrb[0].mxu0
        %v1370 = vadd.f32 0.0, %v1369
        %v1371 = vpop.f32.mrb[0].mxu0
        %v1372 = vpop.f32.mrb[0].mxu0
        %1373 = vdwg.mxu0
        %1374 = vmatprep.subr.bf16.mxu0 %v1142
        %1375 = vmatpush1.bf16.msra.mxu0 %v1141
        %1376 = vmatprep.subr.bf16.mxu0 %v1146
        %1377 = vmatpush1.bf16.msra.mxu0 %v1145
        %1378 = vmatprep.subr.bf16.mxu0 %v1150
        %1379 = vmatpush1.bf16.msra.mxu0 %v1149
        %1380 = vmatprep.subr.bf16.mxu0 %v1154
        %1381 = vmatpush1.bf16.msra.mxu0 %v1153
        %1382 = vmatprep.subr.bf16.mxu0 %v1158
        %1383 = vmatpush1.bf16.msra.mxu0 %v1157
        %1384 = vmatprep.subr.bf16.mxu0 %v1162
        %1385 = vmatpush1.bf16.msra.mxu0 %v1161
        %1386 = vmatprep.subr.bf16.mxu0 %v1166
        %1387 = vmatpush1.bf16.msra.mxu0 %v1165
        %1388 = vmatprep.subr.bf16.mxu0 %v1170
        %1389 = vmatpush1.bf16.msra.mxu0 %v1169
        %1390 = vmatprep.subr.bf16.mxu0 %v1174
        %1391 = vmatpush1.bf16.msra.mxu0 %v1173
        %1392 = vmatprep.subr.bf16.mxu0 %v1178
        %1393 = vmatpush1.bf16.msra.mxu0 %v1177
        %1394 = vmatprep.subr.bf16.mxu0 %v1182
        %1395 = vmatpush1.bf16.msra.mxu0 %v1181
        %1396 = vmatprep.subr.bf16.mxu0 %v1186
        %1397 = vmatpush1.bf16.msra.mxu0 %v1185
        %1398 = vmatprep.subr.bf16.mxu0 %v1190
        %1399 = vmatpush1.bf16.msra.mxu0 %v1189
        %1400 = vmatprep.subr.bf16.mxu0 %v1194
        %1401 = vmatpush1.bf16.msra.mxu0 %v1193
        %1402 = vmatprep.subr.bf16.mxu0 %v1198
        %1403 = vmatpush1.bf16.msra.mxu0 %v1197
        %1404 = vmatprep.subr.bf16.mxu0 %v1202
        %1405 = vmatpush1.bf16.msra.mxu0 %v1201
        %1406 = vmatprep.mubr.bf16.mxu0 %v688
        %1407 = vmatmul.mubr.bf16.gmra.mrb[0].mxu0 %v687
        %v1408 = vpop.f32.mrb[0].mxu0
        %v1409 = vadd.f32 %v1368, %v1408
        %v1410 = vpop.f32.mrb[0].mxu0
        %v1411 = vadd.f32 %v1370, %v1410
        %v1412 = vpop.f32.mrb[0].mxu0
        %v1413 = vpop.f32.mrb[0].mxu0
        %1414 = vdwg.mxu0
        %1415 = vmatprep.subr.bf16.mxu0 %v1080
        %1416 = vmatpush1.bf16.msra.mxu0 %v1079
        %1417 = vmatprep.subr.bf16.mxu0 %v1084
        %1418 = vmatpush1.bf16.msra.mxu0 %v1083
        %1419 = vmatprep.subr.bf16.mxu0 %v1088
        %1420 = vmatpush1.bf16.msra.mxu0 %v1087
        %1421 = vmatprep.subr.bf16.mxu0 %v1092
        %1422 = vmatpush1.bf16.msra.mxu0 %v1091
        %1423 = vmatprep.subr.bf16.mxu0 %v1096
        %1424 = vmatpush1.bf16.msra.mxu0 %v1095
        %1425 = vmatprep.subr.bf16.mxu0 %v1100
        %1426 = vmatpush1.bf16.msra.mxu0 %v1099
        %1427 = vmatprep.subr.bf16.mxu0 %v1104
        %1428 = vmatpush1.bf16.msra.mxu0 %v1103
        %1429 = vmatprep.subr.bf16.mxu0 %v1108
        %1430 = vmatpush1.bf16.msra.mxu0 %v1107
        %1431 = vmatprep.subr.bf16.mxu0 %v1112
        %1432 = vmatpush1.bf16.msra.mxu0 %v1111
        %1433 = vmatprep.subr.bf16.mxu0 %v1116
        %1434 = vmatpush1.bf16.msra.mxu0 %v1115
        %1435 = vmatprep.subr.bf16.mxu0 %v1120
        %1436 = vmatpush1.bf16.msra.mxu0 %v1119
        %1437 = vmatprep.subr.bf16.mxu0 %v1124
        %1438 = vmatpush1.bf16.msra.mxu0 %v1123
        %1439 = vmatprep.subr.bf16.mxu0 %v1128
        %1440 = vmatpush1.bf16.msra.mxu0 %v1127
        %1441 = vmatprep.subr.bf16.mxu0 %v1132
        %1442 = vmatpush1.bf16.msra.mxu0 %v1131
        %1443 = vmatprep.subr.bf16.mxu0 %v1136
        %1444 = vmatpush1.bf16.msra.mxu0 %v1135
        %1445 = vmatprep.subr.bf16.mxu0 %v1140
        %1446 = vmatpush1.bf16.msra.mxu0 %v1139
        %1447 = vmatprep.mubr.bf16.mxu0 %v686
        %1448 = vmatmul.mubr.bf16.gmra.mrb[0].mxu0 %v685
        %v1449 = vpop.f32.mrb[0].mxu0
        %v1450 = vadd.f32 0.0, %v1449
        %v1451 = vpop.f32.mrb[0].mxu0
        %v1452 = vadd.f32 0.0, %v1451
        %v1453 = vpop.f32.mrb[0].mxu0
        %v1454 = vpop.f32.mrb[0].mxu0
        %1455 = vdwg.mxu0
        %1456 = vmatprep.subr.bf16.mxu0 %v1144
        %1457 = vmatpush1.bf16.msra.mxu0 %v1143
        %1458 = vmatprep.subr.bf16.mxu0 %v1148
        %1459 = vmatpush1.bf16.msra.mxu0 %v1147
        %1460 = vmatprep.subr.bf16.mxu0 %v1152
        %1461 = vmatpush1.bf16.msra.mxu0 %v1151
        %1462 = vmatprep.subr.bf16.mxu0 %v1156
        %1463 = vmatpush1.bf16.msra.mxu0 %v1155
        %1464 = vmatprep.subr.bf16.mxu0 %v1160
        %1465 = vmatpush1.bf16.msra.mxu0 %v1159
        %1466 = vmatprep.subr.bf16.mxu0 %v1164
        %1467 = vmatpush1.bf16.msra.mxu0 %v1163
        %1468 = vmatprep.subr.bf16.mxu0 %v1168
        %1469 = vmatpush1.bf16.msra.mxu0 %v1167
        %1470 = vmatprep.subr.bf16.mxu0 %v1172
        %1471 = vmatpush1.bf16.msra.mxu0 %v1171
        %1472 = vmatprep.subr.bf16.mxu0 %v1176
        %1473 = vmatpush1.bf16.msra.mxu0 %v1175
        %1474 = vmatprep.subr.bf16.mxu0 %v1180
        %1475 = vmatpush1.bf16.msra.mxu0 %v1179
        %1476 = vmatprep.subr.bf16.mxu0 %v1184
        %1477 = vmatpush1.bf16.msra.mxu0 %v1183
        %1478 = vmatprep.subr.bf16.mxu0 %v1188
        %1479 = vmatpush1.bf16.msra.mxu0 %v1187
        %1480 = vmatprep.subr.bf16.mxu0 %v1192
        %1481 = vmatpush1.bf16.msra.mxu0 %v1191
        %1482 = vmatprep.subr.bf16.mxu0 %v1196
        %1483 = vmatpush1.bf16.msra.mxu0 %v1195
        %1484 = vmatprep.subr.bf16.mxu0 %v1200
        %1485 = vmatpush1.bf16.msra.mxu0 %v1199
        %1486 = vmatprep.subr.bf16.mxu0 %v1204
        %1487 = vmatpush1.bf16.msra.mxu0 %v1203
        %1488 = vmatprep.mubr.bf16.mxu0 %v688
        %1489 = vmatmul.mubr.bf16.gmra.mrb[0].mxu0 %v687
        %v1490 = vpop.f32.mrb[0].mxu0
        %v1491 = vadd.f32 %v1450, %v1490
        %v1492 = vpop.f32.mrb[0].mxu0
        %v1493 = vadd.f32 %v1452, %v1492
        %v1494 = vpop.f32.mrb[0].mxu0
        %v1495 = vpop.f32.mrb[0].mxu0
        %1496 = vdwg.mxu0
        %v1497 = vadd.f32 %v545, %v1409
        %v1498 = vadd.f32 %v546, %v1411
        %v1499 = vadd.f32 %v547, %v1491
        %v1500 = vadd.f32 %v548, %v1493
        %1501 = vst [vmem:[#allocation2] sm:$0xff] %v1497
        %1502 = vst [vmem:[#allocation2 + $0x8] sm:$0xff] %v1498
        %1503 = vst [vmem:[#allocation2 + $0x10] sm:$0xff] %v1499
        %1504 = vst [vmem:[#allocation2 + $0x18] sm:$0xff] %v1500
        %p1505 = scmp.eq.s32.totalorder %s21, 1
        // Predicated region
        $region60: #{model1_forward.5} parent=50 // pred_check
          %p1506 = pneg %p1505
        $region61: #{model1_forward.5} parent=50 // pred_check_branch
          %1508 = sbr.rel (%p1506) target = $region63
        $region62: #{model1_forward.5} parent=50 // pred_region
          %v1509 = vld [vmem:[#allocation2] sm:$0xff]
          %v1510 = vld [vmem:[#allocation2 + $0x8] sm:$0xff]
          %v1511 = vld [vmem:[#allocation2 + $0x10] sm:$0xff]
          %v1512 = vld [vmem:[#allocation2 + $0x18] sm:$0xff]
          %v1513 = vld [vmem:[%s525] sm:$0xf]
          %v1515 = vlaneseq
          %v1516 = vshrl.u32 %v1515, 7
          %v1517 = vsub.s32 0, %v1516
          %v1518 = vrot.slane %v1513, %v1517
          %v1519 = vlaneseq
          %v1520 = vshrl.u32 %v1519, 7
          %v1521 = vsub.s32 1, %v1520
          %v1522 = vrot.slane %v1513, %v1521
          %v1523 = vlaneseq
          %v1524 = vshrl.u32 %v1523, 7
          %v1525 = vsub.s32 2, %v1524
          %v1526 = vrot.slane %v1513, %v1525
          %v1527 = vlaneseq
          %v1528 = vshrl.u32 %v1527, 7
          %v1529 = vsub.s32 3, %v1528
          %v1530 = vrot.slane %v1513, %v1529
          %v1535 = vadd.f32 %v1509, %v1518
          %v1536 = vadd.f32 %v1510, %v1522
          %v1537 = vadd.f32 %v1511, %v1526
          %v1538 = vadd.f32 %v1512, %v1530
          %v1539 = vpack.c.bf16 %v1535, %v1535
          %v1540 = vpack.c.bf16 %v1536, %v1536
          %v1541 = vpack.c.bf16 %v1537, %v1537
          %v1542 = vpack.c.bf16 %v1538, %v1538
          %v1547 = vunpack.c.l.b16 %v1539
          %v1548 = vunpack.c.l.b16 %v1540
          %v1549 = vunpack.c.l.b16 %v1541
          %v1550 = vunpack.c.l.b16 %v1542
          %v1551 = vpack.c.b16 %v1548, %v1547
          %v1552 = vpack.c.b16 %v1550, %v1549
          %1555 = vst [vmem:[%s535] sm:$0xff] %v1551
          %1556 = vst [vmem:[%s535 + $0x8] sm:$0xff] %v1552
        $region63: #{model1_forward.5} parent=50 // pred_fallthru
          _
        %s1557 = smul.u32 4, %s20
        %p1558 = scmp.lt.s32.totalorder %s19, 0
        %s1559 = scalar_select %p1558, %s19, 0
        %p1560 = scmp.lt.s32.totalorder %s1557, 15
        %s1561 = scalar_select %p1560, %s1557, 15
        %s1562 = smul.addr %s1559, 16
        %s1563 = sadd.s32 %s1561, %s1562
        %s1564 = smul.addr %s1563, 4
        %s1565 = scalar_lea.vmem %s3, %s1564
        // Predicated region
        $region64: #{model1_forward.5} parent=50 // pred_check
          %p1566 = pneg %p135
        $region65: #{model1_forward.5} parent=50 // pred_check_branch
          %1568 = sbr.rel (%p1566) target = $region67
        $region66: #{model1_forward.5} parent=50 // pred_region
          %s1569 = smul.u32 4, %s20
        $region67: #{model1_forward.5} parent=50 // pred_fallthru
          _
      $region51: #{model1_forward.5} parent=5 // pred_fallthru
        _
      %p1570 = scmp.le.s32.totalorder 2, %s9
      // Predicated region
      $region68: #{model1_forward.5} parent=5 // pred_check
        %p1571 = pneg %p1570
      $region69: #{model1_forward.5} parent=5 // pred_check_branch
        %1573 = sbr.rel (%p1571) target = $region71
      $region70: #{model1_forward.5} parent=5 // pred_region
        %s1574 = ssub.s32 %s9, 2
        // Predicated region
        $region72: #{model1_forward.5} parent=70 // pred_check
          %p1575 = pneg %p141
        $region73: #{model1_forward.5} parent=70 // pred_check_branch
          %1577 = sbr.rel (%p1575) target = $region75
        $region74: #{model1_forward.5} parent=70 // pred_region
          %s1578 = smul.u32 4, %s23
          %p1579 = scmp.lt.s32.totalorder %s22, 0
          %s1580 = scalar_select %p1579, %s22, 0
          %p1581 = scmp.lt.s32.totalorder %s1578, 15
          %s1582 = scalar_select %p1581, %s1578, 15
          %s1583 = smul.addr %s1580, 16
          %s1584 = sadd.s32 %s1582, %s1583
          %s1585 = smul.addr %s1584, 4
          %s1586 = scalar_lea.vmem %s3, %s1585
        $region75: #{model1_forward.5} parent=70 // pred_fallthru
          _
      $region71: #{model1_forward.5} parent=5 // pred_fallthru
        _
    $region6: #{model1_forward.5} parent=1 // loop_footer
      %s13 = sadd.s32 1, %s9
    $region7: #{model1_forward.5} parent=1 // loop_footer_branch
      %8 = sbr.rel target = $region3
    $region8: #{model1_forward.5} parent=1 // loop_exit
      _

// kernel: model1_forward.6
$region0: #{model1_forward.6}
  #allocation0 [shape = 'u32[]', space=smem, size = 0x4, offset = 0x4, fixed_abs, tag = 'smem constant byte address 0x4 - core index']
  #allocation1 [shape = 'u32[144,128]{1,0:T(1,128)}', space=vmem, size = 0x12000, scoped, tag = 'internal scratch']
  #allocation2 [shape = 'f32[8,128]{1,0:T(8,128)}', space=vmem, size = 0x1000, scoped, tag = 'scratch operand']
  %s0 = inlined_call_operand.vmem [shape: bf16[8,2048], index: 0, kind: input, shape index: {}]
  %s1 = inlined_call_operand.vmem [shape: bf16[2048,128], index: 1, kind: input, shape index: {}]
  %s2 = inlined_call_operand.vmem [shape: f32[1,128], index: 2, kind: input, shape index: {}]
  %s3 = inlined_call_operand.vmem [shape: bf16[8,128], index: 3, kind: output, shape index: {}]
  %s4 = sld [smem:[#allocation0]]
  $region53: #{model1_forward.6} parent=0
    _
  %s6 = ssub.s32 1, %s4
  %s7 = scalar_select 0, %s6, %s4
  loop: start=0, step=1, limit=6
  $region2: #{model1_forward.6} parent=0 // loop_pre_header
    _
  $region3: #{model1_forward.6} parent=0 // loop_header
    %s9 = sphi 0, %s13
    %p10 = scmp.ge.s32.totalorder %s9, 6
    %s16 = sphi 0, %s35
    %s17 = sphi 0, %s31
    %s18 = sphi 0, %s27
    %s19 = sphi 0, %s16
    %s20 = sphi 0, %s17
    %s21 = sphi 0, %s18
    %s22 = sphi 0, %s19
    %s23 = sphi 0, %s20
    %s24 = sphi 0, %s21
    %s40 = sphi 0, %s42
    %s43 = sphi 0, %s40
    %s44 = sphi 0, %s43
    %s60 = sphi 0, %s44
    %s68 = sphi 0, %s70
    %s71 = sphi 0, %s68
    %s72 = sphi 0, %s71
    %s88 = sphi 0, %s72
    %s94 = sphi 0, %s96
    %s97 = sphi 0, %s94
    %s98 = sphi 0, %s97
    %s114 = sphi 0, %s98
    %s122 = sphi 0, %s124
    %s125 = sphi 0, %s122
    %s126 = sphi 0, %s125
    %s142 = sphi 0, %s126
  $region4: #{model1_forward.6} parent=0 // loop_header_branch
    %12 = sbr.rel (%p10) target = $region8
  $region5: #{model1_forward.6} parent=0 // loop_body
    %s14 = ssub.s32 %s9, 1
    %s15 = ssub.s32 %s9, 2
    %s25 = sadd.s32 1, %s18
    %p26 = scmp.ge.s32.totalorder %s25, 4
    %s27 = scalar_select %p26, 0, %s25
    %s28 = sadd.s32 1, %s17
    %s29 = scalar_select %p26, %s28, %s17
    %p30 = scmp.ge.s32.totalorder %s29, 1
    %s31 = scalar_select %p30, 0, %s29
    %s32 = sadd.s32 1, %s16
    %s33 = scalar_select %p30, %s32, %s16
    %p34 = scmp.ge.s32.totalorder %s33, 1
    %s35 = scalar_select %p34, 0, %s33
    %s36 = ssub.s32 %s16, %s35
    %s37 = ssub.s32 %s18, %s27
    %s38 = sor.u32 %s36, %s37
    %p39 = scmp.eq.s32.totalorder %s38, 0
    %s41 = sadd.s32 %s40, 1
    %s42 = scalar_select %p39, %s40, %s41
    %p45 = pneg %p39
    %p46 = scmp.eq.s32.totalorder %s9, 3
    %p47 = por %p45, %p46
    %p48 = scmp.ne.s32.totalorder %s40, %s43
    %p49 = scmp.eq.s32.totalorder %s9, 0
    %p50 = por %p48, %p49
    %p51 = scmp.ne.s32.totalorder %s40, %s43
    %p52 = scmp.eq.s32.totalorder %s14, 3
    %p53 = por %p51, %p52
    %p54 = scmp.ne.s32.totalorder %s43, %s44
    %p55 = scmp.eq.s32.totalorder %s14, 0
    %p56 = por %p54, %p55
    %p57 = scmp.ne.s32.totalorder %s43, %s44
    %p58 = scmp.eq.s32.totalorder %s15, 3
    %p59 = por %p57, %p58
    %p61 = scmp.ne.s32.totalorder %s44, %s60
    %p62 = scmp.eq.s32.totalorder %s15, 0
    %p63 = por %p61, %p62
    %s64 = ssub.s32 %s18, %s27
    %s65 = ssub.s32 %s17, %s31
    %s66 = sor.u32 %s64, %s65
    %p67 = scmp.eq.s32.totalorder %s66, 0
    %s69 = sadd.s32 %s68, 1
    %s70 = scalar_select %p67, %s68, %s69
    %p73 = pneg %p67
    %p74 = scmp.eq.s32.totalorder %s9, 3
    %p75 = por %p73, %p74
    %p76 = scmp.ne.s32.totalorder %s68, %s71
    %p77 = scmp.eq.s32.totalorder %s9, 0
    %p78 = por %p76, %p77
    %p79 = scmp.ne.s32.totalorder %s68, %s71
    %p80 = scmp.eq.s32.totalorder %s14, 3
    %p81 = por %p79, %p80
    %p82 = scmp.ne.s32.totalorder %s71, %s72
    %p83 = scmp.eq.s32.totalorder %s14, 0
    %p84 = por %p82, %p83
    %p85 = scmp.ne.s32.totalorder %s71, %s72
    %p86 = scmp.eq.s32.totalorder %s15, 3
    %p87 = por %p85, %p86
    %p89 = scmp.ne.s32.totalorder %s72, %s88
    %p90 = scmp.eq.s32.totalorder %s15, 0
    %p91 = por %p89, %p90
    %s92 = ssub.s32 %s17, %s31
    %p93 = scmp.eq.s32.totalorder %s92, 0
    %s95 = sadd.s32 %s94, 1
    %s96 = scalar_select %p93, %s94, %s95
    %p99 = pneg %p93
    %p100 = scmp.eq.s32.totalorder %s9, 3
    %p101 = por %p99, %p100
    %p102 = scmp.ne.s32.totalorder %s94, %s97
    %p103 = scmp.eq.s32.totalorder %s9, 0
    %p104 = por %p102, %p103
    %p105 = scmp.ne.s32.totalorder %s94, %s97
    %p106 = scmp.eq.s32.totalorder %s14, 3
    %p107 = por %p105, %p106
    %p108 = scmp.ne.s32.totalorder %s97, %s98
    %p109 = scmp.eq.s32.totalorder %s14, 0
    %p110 = por %p108, %p109
    %p111 = scmp.ne.s32.totalorder %s97, %s98
    %p112 = scmp.eq.s32.totalorder %s15, 3
    %p113 = por %p111, %p112
    %p115 = scmp.ne.s32.totalorder %s98, %s114
    %p116 = scmp.eq.s32.totalorder %s15, 0
    %p117 = por %p115, %p116
    %s118 = ssub.s32 %s16, %s35
    %s119 = ssub.s32 %s17, %s31
    %s120 = sor.u32 %s118, %s119
    %p121 = scmp.eq.s32.totalorder %s120, 0
    %s123 = sadd.s32 %s122, 1
    %s124 = scalar_select %p121, %s122, %s123
    %p127 = pneg %p121
    %p128 = scmp.eq.s32.totalorder %s9, 3
    %p129 = por %p127, %p128
    %p130 = scmp.ne.s32.totalorder %s122, %s125
    %p131 = scmp.eq.s32.totalorder %s9, 0
    %p132 = por %p130, %p131
    %p133 = scmp.ne.s32.totalorder %s122, %s125
    %p134 = scmp.eq.s32.totalorder %s14, 3
    %p135 = por %p133, %p134
    %p136 = scmp.ne.s32.totalorder %s125, %s126
    %p137 = scmp.eq.s32.totalorder %s14, 0
    %p138 = por %p136, %p137
    %p139 = scmp.ne.s32.totalorder %s125, %s126
    %p140 = scmp.eq.s32.totalorder %s15, 3
    %p141 = por %p139, %p140
    %p143 = scmp.ne.s32.totalorder %s126, %s142
    %p144 = scmp.eq.s32.totalorder %s15, 0
    %p145 = por %p143, %p144
    %p146 = scmp.le.s32.totalorder 1, %s9
    %p147 = scmp.lt.s32.totalorder %s9, 5
    %p148 = pnand %p146, %p147
    %p149 = pneg %p148
    // Predicated region
    $region9: #{model1_forward.6} parent=5 // pred_check
      _
    $region10: #{model1_forward.6} parent=5 // pred_check_branch
      %151 = sbr.rel (%p148) target = $region12
    $region11: #{model1_forward.6} parent=5 // pred_region
      %s152 = ssub.s32 %s9, 1
      // Predicated region
      $region13: #{model1_forward.6} parent=11 // pred_check
        %p153 = pneg %p110
      $region14: #{model1_forward.6} parent=11 // pred_check_branch
        %155 = sbr.rel (%p153) target = $region16
      $region15: #{model1_forward.6} parent=11 // pred_region
        %p156 = scmp.lt.s32.totalorder %s20, 0
        %s157 = scalar_select %p156, %s20, 0
        %s158 = scalar_lea.vmem %s2, %s157
      $region16: #{model1_forward.6} parent=11 // pred_fallthru
        _
    $region12: #{model1_forward.6} parent=5 // pred_fallthru
      _
    %p159 = scmp.lt.s32.totalorder %s9, 4
    // Predicated region
    $region17: #{model1_forward.6} parent=5 // pred_check
      %p160 = pneg %p159
    $region18: #{model1_forward.6} parent=5 // pred_check_branch
      %162 = sbr.rel (%p160) target = $region20
    $region19: #{model1_forward.6} parent=5 // pred_region
      // Predicated region
      $region21: #{model1_forward.6} parent=19 // pred_check
        %p163 = pneg %p50
      $region22: #{model1_forward.6} parent=19 // pred_check_branch
        %165 = sbr.rel (%p163) target = $region24
      $region23: #{model1_forward.6} parent=19 // pred_region
        %s166 = smul.u32 4, %s18
        %p167 = scmp.lt.s32.totalorder %s16, 0
        %s168 = scalar_select %p167, %s16, 0
        %p169 = scmp.lt.s32.totalorder %s166, 15
        %s170 = scalar_select %p169, %s166, 15
        %s171 = smul.addr %s168, 16
        %s172 = sadd.s32 %s170, %s171
        %s173 = smul.addr %s172, 4
        %s174 = scalar_lea.vmem %s0, %s173
        %s175 = smul.u32 4, %s18
      $region24: #{model1_forward.6} parent=19 // pred_fallthru
        _
      // Predicated region
      $region25: #{model1_forward.6} parent=19 // pred_check
        %p176 = pneg %p78
      $region26: #{model1_forward.6} parent=19 // pred_check_branch
        %178 = sbr.rel (%p176) target = $region28
      $region27: #{model1_forward.6} parent=19 // pred_region
        %s179 = smul.u32 64, %s18
        %p180 = scmp.lt.s32.totalorder %s179, 255
        %s181 = scalar_select %p180, %s179, 255
        %p182 = scmp.lt.s32.totalorder %s17, 0
        %s183 = scalar_select %p182, %s17, 0
        %s184 = sadd.s32 %s183, %s181
        %s185 = smul.addr %s184, 4
        %s186 = scalar_lea.vmem %s1, %s185
        %s187 = smul.u32 64, %s18
      $region28: #{model1_forward.6} parent=19 // pred_fallthru
        _
    $region20: #{model1_forward.6} parent=5 // pred_fallthru
      _
    %p188 = scmp.le.s32.totalorder 1, %s9
    %p189 = scmp.lt.s32.totalorder %s9, 5
    %p190 = pnand %p188, %p189
    %p191 = pneg %p190
    // Predicated region
    $region29: #{model1_forward.6} parent=5 // pred_check
      _
    $region30: #{model1_forward.6} parent=5 // pred_check_branch
      %193 = sbr.rel (%p190) target = $region32
    $region31: #{model1_forward.6} parent=5 // pred_region
      %s194 = ssub.s32 %s9, 1
      %s195 = smul.u32 4, %s21
      %p196 = scmp.lt.s32.totalorder %s19, 0
      %s197 = scalar_select %p196, %s19, 0
      %p198 = scmp.lt.s32.totalorder %s195, 15
      %s199 = scalar_select %p198, %s195, 15
      %s200 = smul.addr %s197, 16
      %s201 = sadd.s32 %s199, %s200
      %s202 = smul.addr %s201, 4
      %s203 = scalar_lea.vmem %s0, %s202
      %p204 = pneg %p56
      %p205 = pneg %p53
      %s206 = smul.u32 64, %s21
      %p207 = scmp.lt.s32.totalorder %s206, 255
      %s208 = scalar_select %p207, %s206, 255
      %p209 = scmp.lt.s32.totalorder %s20, 0
      %s210 = scalar_select %p209, %s20, 0
      %s211 = sadd.s32 %s210, %s208
      %s212 = smul.addr %s211, 4
      %s213 = scalar_lea.vmem %s1, %s212
      %p214 = pneg %p84
      %p215 = pneg %p81
      %p216 = scmp.lt.s32.totalorder %s20, 0
      %s217 = scalar_select %p216, %s20, 0
      %s218 = scalar_lea.vmem %s2, %s217
      %p219 = pneg %p110
      %p220 = pneg %p107
      %p221 = pneg %p138
      %p222 = pneg %p135
      %p223 = scmp.lt.s32.totalorder %s19, 0
      %s224 = scalar_select %p223, %s19, 0
      %p225 = scmp.lt.s32.totalorder %s20, 0
      %s226 = scalar_select %p225, %s20, 0
      %s227 = sadd.s32 %s226, %s224
      %s228 = smul.addr %s227, 4
      %s229 = scalar_lea.vmem %s3, %s228
      %s230 = smul.u32 4, %s21
      %p231 = scmp.lt.s32.totalorder %s19, 0
      %s232 = scalar_select %p231, %s19, 0
      %p233 = scmp.lt.s32.totalorder %s230, 15
      %s234 = scalar_select %p233, %s230, 15
      %s235 = smul.addr %s232, 16
      %s236 = sadd.s32 %s234, %s235
      %s237 = smul.addr %s236, 4
      %s238 = scalar_lea.vmem %s0, %s237
      %s239 = smul.u32 4, %s21
      %s240 = smul.u32 64, %s21
      %p241 = scmp.lt.s32.totalorder %s240, 255
      %s242 = scalar_select %p241, %s240, 255
      %p243 = scmp.lt.s32.totalorder %s20, 0
      %s244 = scalar_select %p243, %s20, 0
      %s245 = sadd.s32 %s244, %s242
      %s246 = smul.addr %s245, 4
      %s247 = scalar_lea.vmem %s1, %s246
      %s248 = smul.u32 64, %s21
      %p249 = scmp.lt.s32.totalorder %s20, 0
      %s250 = scalar_select %p249, %s20, 0
      %s251 = scalar_lea.vmem %s2, %s250
      %p252 = scmp.lt.s32.totalorder %s19, 0
      %s253 = scalar_select %p252, %s19, 0
      %p254 = scmp.lt.s32.totalorder %s20, 0
      %s255 = scalar_select %p254, %s20, 0
      %s256 = sadd.s32 %s255, %s253
      %s257 = smul.addr %s256, 4
      %s258 = scalar_lea.vmem %s3, %s257
      %p260 = scmp.eq.s32.totalorder %s21, 0
      // Predicated region
      $region33: #{model1_forward.6} parent=31 // pred_check
        %p261 = pneg %p260
      $region34: #{model1_forward.6} parent=31 // pred_check_branch
        %263 = sbr.rel (%p261) target = $region36
      $region35: #{model1_forward.6} parent=31 // pred_region
        %264 = vst [vmem:[#allocation2] sm:$0xff] 0.0
      $region36: #{model1_forward.6} parent=31 // pred_fallthru
        _
      %v265 = vld [vmem:[#allocation2] sm:$0xff]
      %v266 = vld [vmem:[%s238] sm:$0xff]
      %v267 = vld [vmem:[%s238 + $0x8] sm:$0xff]
      %v268 = vld [vmem:[%s247] sm:$0xf]
      %v269 = vld [vmem:[%s247 + $0x4] sm:$0xf]
      %v270 = vld [vmem:[%s247 + $0x8] sm:$0xf]
      %v271 = vld [vmem:[%s247 + $0xc] sm:$0xf]
      %v272 = vld [vmem:[%s247 + $0x10] sm:$0xf]
      %v273 = vld [vmem:[%s247 + $0x14] sm:$0xf]
      %v274 = vld [vmem:[%s247 + $0x18] sm:$0xf]
      %v275 = vld [vmem:[%s247 + $0x1c] sm:$0xf]
      %v276 = vld [vmem:[%s247 + $0x20] sm:$0xf]
      %v277 = vld [vmem:[%s247 + $0x24] sm:$0xf]
      %v278 = vld [vmem:[%s247 + $0x28] sm:$0xf]
      %v279 = vld [vmem:[%s247 + $0x2c] sm:$0xf]
      %v280 = vld [vmem:[%s247 + $0x30] sm:$0xf]
      %v281 = vld [vmem:[%s247 + $0x34] sm:$0xf]
      %v282 = vld [vmem:[%s247 + $0x38] sm:$0xf]
      %v283 = vld [vmem:[%s247 + $0x3c] sm:$0xf]
      %v284 = vld [vmem:[%s247 + $0x40] sm:$0xf]
      %v285 = vld [vmem:[%s247 + $0x44] sm:$0xf]
      %v286 = vld [vmem:[%s247 + $0x48] sm:$0xf]
      %v287 = vld [vmem:[%s247 + $0x4c] sm:$0xf]
      %v288 = vld [vmem:[%s247 + $0x50] sm:$0xf]
      %v289 = vld [vmem:[%s247 + $0x54] sm:$0xf]
      %v290 = vld [vmem:[%s247 + $0x58] sm:$0xf]
      %v291 = vld [vmem:[%s247 + $0x5c] sm:$0xf]
      %v292 = vld [vmem:[%s247 + $0x60] sm:$0xf]
      %v293 = vld [vmem:[%s247 + $0x64] sm:$0xf]
      %v294 = vld [vmem:[%s247 + $0x68] sm:$0xf]
      %v295 = vld [vmem:[%s247 + $0x6c] sm:$0xf]
      %v296 = vld [vmem:[%s247 + $0x70] sm:$0xf]
      %v297 = vld [vmem:[%s247 + $0x74] sm:$0xf]
      %v298 = vld [vmem:[%s247 + $0x78] sm:$0xf]
      %v299 = vld [vmem:[%s247 + $0x7c] sm:$0xf]
      %v300 = vld [vmem:[%s247 + $0x80] sm:$0xf]
      %v301 = vld [vmem:[%s247 + $0x84] sm:$0xf]
      %v302 = vld [vmem:[%s247 + $0x88] sm:$0xf]
      %v303 = vld [vmem:[%s247 + $0x8c] sm:$0xf]
      %v304 = vld [vmem:[%s247 + $0x90] sm:$0xf]
      %v305 = vld [vmem:[%s247 + $0x94] sm:$0xf]
      %v306 = vld [vmem:[%s247 + $0x98] sm:$0xf]
      %v307 = vld [vmem:[%s247 + $0x9c] sm:$0xf]
      %v308 = vld [vmem:[%s247 + $0xa0] sm:$0xf]
      %v309 = vld [vmem:[%s247 + $0xa4] sm:$0xf]
      %v310 = vld [vmem:[%s247 + $0xa8] sm:$0xf]
      %v311 = vld [vmem:[%s247 + $0xac] sm:$0xf]
      %v312 = vld [vmem:[%s247 + $0xb0] sm:$0xf]
      %v313 = vld [vmem:[%s247 + $0xb4] sm:$0xf]
      %v314 = vld [vmem:[%s247 + $0xb8] sm:$0xf]
      %v315 = vld [vmem:[%s247 + $0xbc] sm:$0xf]
      %v316 = vld [vmem:[%s247 + $0xc0] sm:$0xf]
      %v317 = vld [vmem:[%s247 + $0xc4] sm:$0xf]
      %v318 = vld [vmem:[%s247 + $0xc8] sm:$0xf]
      %v319 = vld [vmem:[%s247 + $0xcc] sm:$0xf]
      %v320 = vld [vmem:[%s247 + $0xd0] sm:$0xf]
      %v321 = vld [vmem:[%s247 + $0xd4] sm:$0xf]
      %v322 = vld [vmem:[%s247 + $0xd8] sm:$0xf]
      %v323 = vld [vmem:[%s247 + $0xdc] sm:$0xf]
      %v324 = vld [vmem:[%s247 + $0xe0] sm:$0xf]
      %v325 = vld [vmem:[%s247 + $0xe4] sm:$0xf]
      %v326 = vld [vmem:[%s247 + $0xe8] sm:$0xf]
      %v327 = vld [vmem:[%s247 + $0xec] sm:$0xf]
      %v328 = vld [vmem:[%s247 + $0xf0] sm:$0xf]
      %v329 = vld [vmem:[%s247 + $0xf4] sm:$0xf]
      %v330 = vld [vmem:[%s247 + $0xf8] sm:$0xf]
      %v331 = vld [vmem:[%s247 + $0xfc] sm:$0xf]
      %v334 = vunpack.c.l.b16 %v266
      %v335 = vunpack.c.h.b16 %v266
      %v336 = vunpack.c.l.b16 %v267
      %v337 = vunpack.c.h.b16 %v267
      %v338 = vpack.c.b16 %v334, %v334
      %v339 = vpack.c.b16 %v335, %v335
      %v340 = vpack.c.b16 %v336, %v336
      %v341 = vpack.c.b16 %v337, %v337
      %v410 = vunpack.c.l.b16 %v268
      %v411 = vunpack.c.l.b16 %v269
      %v412 = vunpack.c.l.b16 %v270
      %v413 = vunpack.c.l.b16 %v271
      %v414 = vunpack.c.l.b16 %v272
      %v415 = vunpack.c.l.b16 %v273
      %v416 = vunpack.c.l.b16 %v274
      %v417 = vunpack.c.l.b16 %v275
      %v418 = vunpack.c.l.b16 %v276
      %v419 = vunpack.c.l.b16 %v277
      %v420 = vunpack.c.l.b16 %v278
      %v421 = vunpack.c.l.b16 %v279
      %v422 = vunpack.c.l.b16 %v280
      %v423 = vunpack.c.l.b16 %v281
      %v424 = vunpack.c.l.b16 %v282
      %v425 = vunpack.c.l.b16 %v283
      %v426 = vunpack.c.l.b16 %v284
      %v427 = vunpack.c.l.b16 %v285
      %v428 = vunpack.c.l.b16 %v286
      %v429 = vunpack.c.l.b16 %v287
      %v430 = vunpack.c.l.b16 %v288
      %v431 = vunpack.c.l.b16 %v289
      %v432 = vunpack.c.l.b16 %v290
      %v433 = vunpack.c.l.b16 %v291
      %v434 = vunpack.c.l.b16 %v292
      %v435 = vunpack.c.l.b16 %v293
      %v436 = vunpack.c.l.b16 %v294
      %v437 = vunpack.c.l.b16 %v295
      %v438 = vunpack.c.l.b16 %v296
      %v439 = vunpack.c.l.b16 %v297
      %v440 = vunpack.c.l.b16 %v298
      %v441 = vunpack.c.l.b16 %v299
      %v442 = vunpack.c.l.b16 %v300
      %v443 = vunpack.c.l.b16 %v301
      %v444 = vunpack.c.l.b16 %v302
      %v445 = vunpack.c.l.b16 %v303
      %v446 = vunpack.c.l.b16 %v304
      %v447 = vunpack.c.l.b16 %v305
      %v448 = vunpack.c.l.b16 %v306
      %v449 = vunpack.c.l.b16 %v307
      %v450 = vunpack.c.l.b16 %v308
      %v451 = vunpack.c.l.b16 %v309
      %v452 = vunpack.c.l.b16 %v310
      %v453 = vunpack.c.l.b16 %v311
      %v454 = vunpack.c.l.b16 %v312
      %v455 = vunpack.c.l.b16 %v313
      %v456 = vunpack.c.l.b16 %v314
      %v457 = vunpack.c.l.b16 %v315
      %v458 = vunpack.c.l.b16 %v316
      %v459 = vunpack.c.l.b16 %v317
      %v460 = vunpack.c.l.b16 %v318
      %v461 = vunpack.c.l.b16 %v319
      %v462 = vunpack.c.l.b16 %v320
      %v463 = vunpack.c.l.b16 %v321
      %v464 = vunpack.c.l.b16 %v322
      %v465 = vunpack.c.l.b16 %v323
      %v466 = vunpack.c.l.b16 %v324
      %v467 = vunpack.c.l.b16 %v325
      %v468 = vunpack.c.l.b16 %v326
      %v469 = vunpack.c.l.b16 %v327
      %v470 = vunpack.c.l.b16 %v328
      %v471 = vunpack.c.l.b16 %v329
      %v472 = vunpack.c.l.b16 %v330
      %v473 = vunpack.c.l.b16 %v331
      %v474 = vpack.c.b16 %v411, %v410
      %v475 = vpack.c.b16 %v413, %v412
      %v476 = vpack.c.b16 %v415, %v414
      %v477 = vpack.c.b16 %v417, %v416
      %v478 = vpack.c.b16 %v419, %v418
      %v479 = vpack.c.b16 %v421, %v420
      %v480 = vpack.c.b16 %v423, %v422
      %v481 = vpack.c.b16 %v425, %v424
      %v482 = vpack.c.b16 %v427, %v426
      %v483 = vpack.c.b16 %v429, %v428
      %v484 = vpack.c.b16 %v431, %v430
      %v485 = vpack.c.b16 %v433, %v432
      %v486 = vpack.c.b16 %v435, %v434
      %v487 = vpack.c.b16 %v437, %v436
      %v488 = vpack.c.b16 %v439, %v438
      %v489 = vpack.c.b16 %v441, %v440
      %v490 = vpack.c.b16 %v443, %v442
      %v491 = vpack.c.b16 %v445, %v444
      %v492 = vpack.c.b16 %v447, %v446
      %v493 = vpack.c.b16 %v449, %v448
      %v494 = vpack.c.b16 %v451, %v450
      %v495 = vpack.c.b16 %v453, %v452
      %v496 = vpack.c.b16 %v455, %v454
      %v497 = vpack.c.b16 %v457, %v456
      %v498 = vpack.c.b16 %v459, %v458
      %v499 = vpack.c.b16 %v461, %v460
      %v500 = vpack.c.b16 %v463, %v462
      %v501 = vpack.c.b16 %v465, %v464
      %v502 = vpack.c.b16 %v467, %v466
      %v503 = vpack.c.b16 %v469, %v468
      %v504 = vpack.c.b16 %v471, %v470
      %v505 = vpack.c.b16 %v473, %v472
      %538 = vmatprep.subr.bf16.mxu0 0
      %539 = vmatpush1.bf16.msra.mxu0 %v474
      %540 = vmatprep.subr.bf16.mxu0 0
      %541 = vmatpush1.bf16.msra.mxu0 %v475
      %542 = vmatprep.subr.bf16.mxu0 0
      %543 = vmatpush1.bf16.msra.mxu0 %v476
      %544 = vmatprep.subr.bf16.mxu0 0
      %545 = vmatpush1.bf16.msra.mxu0 %v477
      %546 = vmatprep.subr.bf16.mxu0 0
      %547 = vmatpush1.bf16.msra.mxu0 %v478
      %548 = vmatprep.subr.bf16.mxu0 0
      %549 = vmatpush1.bf16.msra.mxu0 %v479
      %550 = vmatprep.subr.bf16.mxu0 0
      %551 = vmatpush1.bf16.msra.mxu0 %v480
      %552 = vmatprep.subr.bf16.mxu0 0
      %553 = vmatpush1.bf16.msra.mxu0 %v481
      %554 = vmatprep.subr.bf16.mxu0 0
      %555 = vmatpush1.bf16.msra.mxu0 %v482
      %556 = vmatprep.subr.bf16.mxu0 0
      %557 = vmatpush1.bf16.msra.mxu0 %v483
      %558 = vmatprep.subr.bf16.mxu0 0
      %559 = vmatpush1.bf16.msra.mxu0 %v484
      %560 = vmatprep.subr.bf16.mxu0 0
      %561 = vmatpush1.bf16.msra.mxu0 %v485
      %562 = vmatprep.subr.bf16.mxu0 0
      %563 = vmatpush1.bf16.msra.mxu0 %v486
      %564 = vmatprep.subr.bf16.mxu0 0
      %565 = vmatpush1.bf16.msra.mxu0 %v487
      %566 = vmatprep.subr.bf16.mxu0 0
      %567 = vmatpush1.bf16.msra.mxu0 %v488
      %568 = vmatprep.subr.bf16.mxu0 0
      %569 = vmatpush1.bf16.msra.mxu0 %v489
      %570 = vmatprep.mubr.bf16.mxu0 %v339
      %571 = vmatmul.mubr.bf16.gmra.mrb[0].mxu0 %v338
      %v572 = vpop.f32.mrb[0].mxu0
      %v573 = vadd.f32 0.0, %v572
      %v574 = vpop.f32.mrb[0].mxu0
      %v575 = vpop.f32.mrb[0].mxu0
      %v576 = vpop.f32.mrb[0].mxu0
      %577 = vdwg.mxu0
      %578 = vmatprep.subr.bf16.mxu0 0
      %579 = vmatpush1.bf16.msra.mxu0 %v490
      %580 = vmatprep.subr.bf16.mxu0 0
      %581 = vmatpush1.bf16.msra.mxu0 %v491
      %582 = vmatprep.subr.bf16.mxu0 0
      %583 = vmatpush1.bf16.msra.mxu0 %v492
      %584 = vmatprep.subr.bf16.mxu0 0
      %585 = vmatpush1.bf16.msra.mxu0 %v493
      %586 = vmatprep.subr.bf16.mxu0 0
      %587 = vmatpush1.bf16.msra.mxu0 %v494
      %588 = vmatprep.subr.bf16.mxu0 0
      %589 = vmatpush1.bf16.msra.mxu0 %v495
      %590 = vmatprep.subr.bf16.mxu0 0
      %591 = vmatpush1.bf16.msra.mxu0 %v496
      %592 = vmatprep.subr.bf16.mxu0 0
      %593 = vmatpush1.bf16.msra.mxu0 %v497
      %594 = vmatprep.subr.bf16.mxu0 0
      %595 = vmatpush1.bf16.msra.mxu0 %v498
      %596 = vmatprep.subr.bf16.mxu0 0
      %597 = vmatpush1.bf16.msra.mxu0 %v499
      %598 = vmatprep.subr.bf16.mxu0 0
      %599 = vmatpush1.bf16.msra.mxu0 %v500
      %600 = vmatprep.subr.bf16.mxu0 0
      %601 = vmatpush1.bf16.msra.mxu0 %v501
      %602 = vmatprep.subr.bf16.mxu0 0
      %603 = vmatpush1.bf16.msra.mxu0 %v502
      %604 = vmatprep.subr.bf16.mxu0 0
      %605 = vmatpush1.bf16.msra.mxu0 %v503
      %606 = vmatprep.subr.bf16.mxu0 0
      %607 = vmatpush1.bf16.msra.mxu0 %v504
      %608 = vmatprep.subr.bf16.mxu0 0
      %609 = vmatpush1.bf16.msra.mxu0 %v505
      %610 = vmatprep.mubr.bf16.mxu0 %v341
      %611 = vmatmul.mubr.bf16.gmra.mrb[0].mxu0 %v340
      %v612 = vpop.f32.mrb[0].mxu0
      %v613 = vadd.f32 %v573, %v612
      %v614 = vpop.f32.mrb[0].mxu0
      %v615 = vpop.f32.mrb[0].mxu0
      %v616 = vpop.f32.mrb[0].mxu0
      %617 = vdwg.mxu0
      %v618 = vadd.f32 %v265, %v613
      %619 = vst [vmem:[#allocation2] sm:$0xff] %v618
      %p620 = scmp.eq.s32.totalorder %s21, 3
      // Predicated region
      $region37: #{model1_forward.6} parent=31 // pred_check
        %p621 = pneg %p620
      $region38: #{model1_forward.6} parent=31 // pred_check_branch
        %623 = sbr.rel (%p621) target = $region40
      $region39: #{model1_forward.6} parent=31 // pred_region
        %v624 = vld [vmem:[#allocation2] sm:$0xff]
        %v625 = vld [vmem:[%s251] sm:$0x1]
        %v627 = vlaneseq
        %v628 = vshrl.u32 %v627, 7
        %v629 = vsub.s32 0, %v628
        %v630 = vrot.slane %v625, %v629
        %v632 = vadd.f32 %v624, %v630
        %v633 = vpack.c.bf16 %v632, %v632
        %634 = vst [vmem:[%s258] sm:$0xf] %v633
      $region40: #{model1_forward.6} parent=31 // pred_fallthru
        _
      %p635 = scmp.lt.s32.totalorder %s19, 0
      %s636 = scalar_select %p635, %s19, 0
      %p637 = scmp.lt.s32.totalorder %s20, 0
      %s638 = scalar_select %p637, %s20, 0
      %s639 = sadd.s32 %s638, %s636
      %s640 = smul.addr %s639, 4
      %s641 = scalar_lea.vmem %s3, %s640
      // Predicated region
      $region41: #{model1_forward.6} parent=31 // pred_check
        %p642 = pneg %p135
      $region42: #{model1_forward.6} parent=31 // pred_check_branch
        %644 = sbr.rel (%p642) target = $region44
      $region43: #{model1_forward.6} parent=31 // pred_region
        _
      $region44: #{model1_forward.6} parent=31 // pred_fallthru
        _
      // Predicated region
      $region45: #{model1_forward.6} parent=31 // pred_check
        %p645 = pneg %p135
      $region46: #{model1_forward.6} parent=31 // pred_check_branch
        %647 = sbr.rel (%p645) target = $region48
      $region47: #{model1_forward.6} parent=31 // pred_region
        %p648 = scmp.lt.s32.totalorder %s19, 0
        %s649 = scalar_select %p648, %s19, 0
        %p650 = scmp.lt.s32.totalorder %s20, 0
        %s651 = scalar_select %p650, %s20, 0
        %s652 = sadd.s32 %s651, %s649
        %s653 = smul.addr %s652, 4
        %s654 = scalar_lea.vmem %s3, %s653
      $region48: #{model1_forward.6} parent=31 // pred_fallthru
        _
    $region32: #{model1_forward.6} parent=5 // pred_fallthru
      _
    %p655 = scmp.le.s32.totalorder 2, %s9
    // Predicated region
    $region49: #{model1_forward.6} parent=5 // pred_check
      %p656 = pneg %p655
    $region50: #{model1_forward.6} parent=5 // pred_check_branch
      %658 = sbr.rel (%p656) target = $region52
    $region51: #{model1_forward.6} parent=5 // pred_region
      %s659 = ssub.s32 %s9, 2
    $region52: #{model1_forward.6} parent=5 // pred_fallthru
      _
  $region6: #{model1_forward.6} parent=0 // loop_footer
    %s13 = sadd.s32 1, %s9
  $region7: #{model1_forward.6} parent=0 // loop_footer_branch
    %8 = sbr.rel target = $region3
  $region8: #{model1_forward.6} parent=0 // loop_exit
    _

// kernel: model1_forward.7
$region0: #{model1_forward.7}
  #allocation0 [shape = 'u32[]', space=smem, size = 0x4, offset = 0x4, fixed_abs, tag = 'smem constant byte address 0x4 - core index']
  #allocation1 [shape = 'u32[144,128]{1,0:T(1,128)}', space=vmem, size = 0x12000, scoped, tag = 'internal scratch']
  #allocation2 [shape = 'f32[16,512]{1,0:T(8,128)}', space=vmem, size = 0x8000, scoped, tag = 'scratch operand']
  %s0 = inlined_call_operand.vmem [shape: bf16[16,128], index: 0, kind: input, shape index: {}]
  %s1 = inlined_call_operand.vmem [shape: bf16[128,512], index: 1, kind: input, shape index: {}]
  %s2 = inlined_call_operand.vmem [shape: f32[1,512], index: 2, kind: input, shape index: {}]
  %s3 = inlined_call_operand.vmem [shape: bf16[16,512], index: 3, kind: output, shape index: {}]
  %s4 = sld [smem:[#allocation0]]
  $region30: #{model1_forward.7} parent=0
    _
  %s6 = ssub.s32 1, %s4
  %s7 = scalar_select 0, %s6, %s4
  // Predicated region
  $region2: #{model1_forward.7} parent=0 // pred_check
    _
  $region3: #{model1_forward.7} parent=0 // pred_check_branch
    %9 = sbr.rel (0) target = $region5
  $region4: #{model1_forward.7} parent=0 // pred_region
    _
  $region5: #{model1_forward.7} parent=0 // pred_fallthru
    _
  // Predicated region
  $region6: #{model1_forward.7} parent=0 // pred_check
    _
  $region7: #{model1_forward.7} parent=0 // pred_check_branch
    %11 = sbr.rel (0) target = $region9
  $region8: #{model1_forward.7} parent=0 // pred_region
    _
  $region9: #{model1_forward.7} parent=0 // pred_fallthru
    _
  // Predicated region
  $region10: #{model1_forward.7} parent=0 // pred_check
    _
  $region11: #{model1_forward.7} parent=0 // pred_check_branch
    %13 = sbr.rel (0) target = $region13
  $region12: #{model1_forward.7} parent=0 // pred_region
    _
  $region13: #{model1_forward.7} parent=0 // pred_fallthru
    _
  %p15 = scmp.eq.s32.totalorder 0, 0
  // Predicated region
  $region14: #{model1_forward.7} parent=0 // pred_check
    %p16 = pneg %p15
  $region15: #{model1_forward.7} parent=0 // pred_check_branch
    %18 = sbr.rel (%p16) target = $region17
  $region16: #{model1_forward.7} parent=0 // pred_region
    %19 = vst [vmem:[#allocation2] sm:$0xff] 0.0
    %20 = vst [vmem:[#allocation2 + $0x8] sm:$0xff] 0.0
    %21 = vst [vmem:[#allocation2 + $0x10] sm:$0xff] 0.0
    %22 = vst [vmem:[#allocation2 + $0x18] sm:$0xff] 0.0
    %23 = vst [vmem:[#allocation2 + $0x20] sm:$0xff] 0.0
    %24 = vst [vmem:[#allocation2 + $0x28] sm:$0xff] 0.0
    %25 = vst [vmem:[#allocation2 + $0x30] sm:$0xff] 0.0
    %26 = vst [vmem:[#allocation2 + $0x38] sm:$0xff] 0.0
  $region17: #{model1_forward.7} parent=0 // pred_fallthru
    _
  %v27 = vld [vmem:[#allocation2] sm:$0xff]
  %v28 = vld [vmem:[#allocation2 + $0x8] sm:$0xff]
  %v29 = vld [vmem:[#allocation2 + $0x10] sm:$0xff]
  %v30 = vld [vmem:[#allocation2 + $0x18] sm:$0xff]
  %v31 = vld [vmem:[#allocation2 + $0x20] sm:$0xff]
  %v32 = vld [vmem:[#allocation2 + $0x28] sm:$0xff]
  %v33 = vld [vmem:[#allocation2 + $0x30] sm:$0xff]
  %v34 = vld [vmem:[#allocation2 + $0x38] sm:$0xff]
  %v35 = vld [vmem:[%s0] sm:$0xf]
  %v36 = vld [vmem:[%s0 + $0x4] sm:$0xf]
  %v37 = vld [vmem:[%s1] sm:$0xff]
  %v38 = vld [vmem:[%s1 + $0x8] sm:$0xff]
  %v39 = vld [vmem:[%s1 + $0x10] sm:$0xff]
  %v40 = vld [vmem:[%s1 + $0x18] sm:$0xff]
  %v41 = vld [vmem:[%s1 + $0x20] sm:$0xff]
  %v42 = vld [vmem:[%s1 + $0x28] sm:$0xff]
  %v43 = vld [vmem:[%s1 + $0x30] sm:$0xff]
  %v44 = vld [vmem:[%s1 + $0x38] sm:$0xff]
  %v45 = vld [vmem:[%s1 + $0x40] sm:$0xff]
  %v46 = vld [vmem:[%s1 + $0x48] sm:$0xff]
  %v47 = vld [vmem:[%s1 + $0x50] sm:$0xff]
  %v48 = vld [vmem:[%s1 + $0x58] sm:$0xff]
  %v49 = vld [vmem:[%s1 + $0x60] sm:$0xff]
  %v50 = vld [vmem:[%s1 + $0x68] sm:$0xff]
  %v51 = vld [vmem:[%s1 + $0x70] sm:$0xff]
  %v52 = vld [vmem:[%s1 + $0x78] sm:$0xff]
  %v53 = vld [vmem:[%s1 + $0x80] sm:$0xff]
  %v54 = vld [vmem:[%s1 + $0x88] sm:$0xff]
  %v55 = vld [vmem:[%s1 + $0x90] sm:$0xff]
  %v56 = vld [vmem:[%s1 + $0x98] sm:$0xff]
  %v57 = vld [vmem:[%s1 + $0xa0] sm:$0xff]
  %v58 = vld [vmem:[%s1 + $0xa8] sm:$0xff]
  %v59 = vld [vmem:[%s1 + $0xb0] sm:$0xff]
  %v60 = vld [vmem:[%s1 + $0xb8] sm:$0xff]
  %v61 = vld [vmem:[%s1 + $0xc0] sm:$0xff]
  %v62 = vld [vmem:[%s1 + $0xc8] sm:$0xff]
  %v63 = vld [vmem:[%s1 + $0xd0] sm:$0xff]
  %v64 = vld [vmem:[%s1 + $0xd8] sm:$0xff]
  %v65 = vld [vmem:[%s1 + $0xe0] sm:$0xff]
  %v66 = vld [vmem:[%s1 + $0xe8] sm:$0xff]
  %v67 = vld [vmem:[%s1 + $0xf0] sm:$0xff]
  %v68 = vld [vmem:[%s1 + $0xf8] sm:$0xff]
  %v71 = vunpack.c.l.b16 %v35
  %v72 = vunpack.c.l.b16 %v36
  %v73 = vpack.c.b16 %v72, %v71
  %v107 = vunpack.c.l.b16 %v37
  %v108 = vunpack.c.h.b16 %v37
  %v109 = vunpack.c.l.b16 %v38
  %v110 = vunpack.c.h.b16 %v38
  %v111 = vunpack.c.l.b16 %v39
  %v112 = vunpack.c.h.b16 %v39
  %v113 = vunpack.c.l.b16 %v40
  %v114 = vunpack.c.h.b16 %v40
  %v115 = vunpack.c.l.b16 %v41
  %v116 = vunpack.c.h.b16 %v41
  %v117 = vunpack.c.l.b16 %v42
  %v118 = vunpack.c.h.b16 %v42
  %v119 = vunpack.c.l.b16 %v43
  %v120 = vunpack.c.h.b16 %v43
  %v121 = vunpack.c.l.b16 %v44
  %v122 = vunpack.c.h.b16 %v44
  %v123 = vunpack.c.l.b16 %v45
  %v124 = vunpack.c.h.b16 %v45
  %v125 = vunpack.c.l.b16 %v46
  %v126 = vunpack.c.h.b16 %v46
  %v127 = vunpack.c.l.b16 %v47
  %v128 = vunpack.c.h.b16 %v47
  %v129 = vunpack.c.l.b16 %v48
  %v130 = vunpack.c.h.b16 %v48
  %v131 = vunpack.c.l.b16 %v49
  %v132 = vunpack.c.h.b16 %v49
  %v133 = vunpack.c.l.b16 %v50
  %v134 = vunpack.c.h.b16 %v50
  %v135 = vunpack.c.l.b16 %v51
  %v136 = vunpack.c.h.b16 %v51
  %v137 = vunpack.c.l.b16 %v52
  %v138 = vunpack.c.h.b16 %v52
  %v139 = vunpack.c.l.b16 %v53
  %v140 = vunpack.c.h.b16 %v53
  %v141 = vunpack.c.l.b16 %v54
  %v142 = vunpack.c.h.b16 %v54
  %v143 = vunpack.c.l.b16 %v55
  %v144 = vunpack.c.h.b16 %v55
  %v145 = vunpack.c.l.b16 %v56
  %v146 = vunpack.c.h.b16 %v56
  %v147 = vunpack.c.l.b16 %v57
  %v148 = vunpack.c.h.b16 %v57
  %v149 = vunpack.c.l.b16 %v58
  %v150 = vunpack.c.h.b16 %v58
  %v151 = vunpack.c.l.b16 %v59
  %v152 = vunpack.c.h.b16 %v59
  %v153 = vunpack.c.l.b16 %v60
  %v154 = vunpack.c.h.b16 %v60
  %v155 = vunpack.c.l.b16 %v61
  %v156 = vunpack.c.h.b16 %v61
  %v157 = vunpack.c.l.b16 %v62
  %v158 = vunpack.c.h.b16 %v62
  %v159 = vunpack.c.l.b16 %v63
  %v160 = vunpack.c.h.b16 %v63
  %v161 = vunpack.c.l.b16 %v64
  %v162 = vunpack.c.h.b16 %v64
  %v163 = vunpack.c.l.b16 %v65
  %v164 = vunpack.c.h.b16 %v65
  %v165 = vunpack.c.l.b16 %v66
  %v166 = vunpack.c.h.b16 %v66
  %v167 = vunpack.c.l.b16 %v67
  %v168 = vunpack.c.h.b16 %v67
  %v169 = vunpack.c.l.b16 %v68
  %v170 = vunpack.c.h.b16 %v68
  %v171 = vpack.c.b16 %v111, %v107
  %v172 = vpack.c.b16 %v112, %v108
  %v173 = vpack.c.b16 %v113, %v109
  %v174 = vpack.c.b16 %v114, %v110
  %v175 = vpack.c.b16 %v119, %v115
  %v176 = vpack.c.b16 %v120, %v116
  %v177 = vpack.c.b16 %v121, %v117
  %v178 = vpack.c.b16 %v122, %v118
  %v179 = vpack.c.b16 %v127, %v123
  %v180 = vpack.c.b16 %v128, %v124
  %v181 = vpack.c.b16 %v129, %v125
  %v182 = vpack.c.b16 %v130, %v126
  %v183 = vpack.c.b16 %v135, %v131
  %v184 = vpack.c.b16 %v136, %v132
  %v185 = vpack.c.b16 %v137, %v133
  %v186 = vpack.c.b16 %v138, %v134
  %v187 = vpack.c.b16 %v143, %v139
  %v188 = vpack.c.b16 %v144, %v140
  %v189 = vpack.c.b16 %v145, %v141
  %v190 = vpack.c.b16 %v146, %v142
  %v191 = vpack.c.b16 %v151, %v147
  %v192 = vpack.c.b16 %v152, %v148
  %v193 = vpack.c.b16 %v153, %v149
  %v194 = vpack.c.b16 %v154, %v150
  %v195 = vpack.c.b16 %v159, %v155
  %v196 = vpack.c.b16 %v160, %v156
  %v197 = vpack.c.b16 %v161, %v157
  %v198 = vpack.c.b16 %v162, %v158
  %v199 = vpack.c.b16 %v167, %v163
  %v200 = vpack.c.b16 %v168, %v164
  %v201 = vpack.c.b16 %v169, %v165
  %v202 = vpack.c.b16 %v170, %v166
  %235 = vmatprep.subr.bf16.mxu0 %v172
  %236 = vmatpush1.bf16.msra.mxu0 %v171
  %237 = vmatprep.subr.bf16.mxu0 %v176
  %238 = vmatpush1.bf16.msra.mxu0 %v175
  %239 = vmatprep.subr.bf16.mxu0 %v180
  %240 = vmatpush1.bf16.msra.mxu0 %v179
  %241 = vmatprep.subr.bf16.mxu0 %v184
  %242 = vmatpush1.bf16.msra.mxu0 %v183
  %243 = vmatprep.subr.bf16.mxu0 %v188
  %244 = vmatpush1.bf16.msra.mxu0 %v187
  %245 = vmatprep.subr.bf16.mxu0 %v192
  %246 = vmatpush1.bf16.msra.mxu0 %v191
  %247 = vmatprep.subr.bf16.mxu0 %v196
  %248 = vmatpush1.bf16.msra.mxu0 %v195
  %249 = vmatprep.subr.bf16.mxu0 %v200
  %250 = vmatpush1.bf16.msra.mxu0 %v199
  %251 = vmatprep.subr.bf16.mxu0 0
  %252 = vmatpush1.bf16.msra.mxu0 0
  %253 = vmatprep.subr.bf16.mxu0 0
  %254 = vmatpush1.bf16.msra.mxu0 0
  %255 = vmatprep.subr.bf16.mxu0 0
  %256 = vmatpush1.bf16.msra.mxu0 0
  %257 = vmatprep.subr.bf16.mxu0 0
  %258 = vmatpush1.bf16.msra.mxu0 0
  %259 = vmatprep.subr.bf16.mxu0 0
  %260 = vmatpush1.bf16.msra.mxu0 0
  %261 = vmatprep.subr.bf16.mxu0 0
  %262 = vmatpush1.bf16.msra.mxu0 0
  %263 = vmatprep.subr.bf16.mxu0 0
  %264 = vmatpush1.bf16.msra.mxu0 0
  %265 = vmatprep.subr.bf16.mxu0 0
  %266 = vmatpush1.bf16.msra.mxu0 0
  %267 = vmatprep.mubr.bf16.mxu0 0
  %268 = vmatmul.mubr.bf16.gmra.mrb[0].mxu0 %v73
  %v269 = vpop.f32.mrb[0].mxu0
  %v270 = vadd.f32 0.0, %v269
  %v271 = vpop.f32.mrb[0].mxu0
  %v272 = vadd.f32 0.0, %v271
  %v273 = vpop.f32.mrb[0].mxu0
  %v274 = vadd.f32 0.0, %v273
  %v275 = vpop.f32.mrb[0].mxu0
  %v276 = vadd.f32 0.0, %v275
  %277 = vdwg.mxu0
  %278 = vmatprep.subr.bf16.mxu0 %v174
  %279 = vmatpush1.bf16.msra.mxu0 %v173
  %280 = vmatprep.subr.bf16.mxu0 %v178
  %281 = vmatpush1.bf16.msra.mxu0 %v177
  %282 = vmatprep.subr.bf16.mxu0 %v182
  %283 = vmatpush1.bf16.msra.mxu0 %v181
  %284 = vmatprep.subr.bf16.mxu0 %v186
  %285 = vmatpush1.bf16.msra.mxu0 %v185
  %286 = vmatprep.subr.bf16.mxu0 %v190
  %287 = vmatpush1.bf16.msra.mxu0 %v189
  %288 = vmatprep.subr.bf16.mxu0 %v194
  %289 = vmatpush1.bf16.msra.mxu0 %v193
  %290 = vmatprep.subr.bf16.mxu0 %v198
  %291 = vmatpush1.bf16.msra.mxu0 %v197
  %292 = vmatprep.subr.bf16.mxu0 %v202
  %293 = vmatpush1.bf16.msra.mxu0 %v201
  %294 = vmatprep.subr.bf16.mxu0 0
  %295 = vmatpush1.bf16.msra.mxu0 0
  %296 = vmatprep.subr.bf16.mxu0 0
  %297 = vmatpush1.bf16.msra.mxu0 0
  %298 = vmatprep.subr.bf16.mxu0 0
  %299 = vmatpush1.bf16.msra.mxu0 0
  %300 = vmatprep.subr.bf16.mxu0 0
  %301 = vmatpush1.bf16.msra.mxu0 0
  %302 = vmatprep.subr.bf16.mxu0 0
  %303 = vmatpush1.bf16.msra.mxu0 0
  %304 = vmatprep.subr.bf16.mxu0 0
  %305 = vmatpush1.bf16.msra.mxu0 0
  %306 = vmatprep.subr.bf16.mxu0 0
  %307 = vmatpush1.bf16.msra.mxu0 0
  %308 = vmatprep.subr.bf16.mxu0 0
  %309 = vmatpush1.bf16.msra.mxu0 0
  %310 = vmatprep.mubr.bf16.mxu0 0
  %311 = vmatmul.mubr.bf16.gmra.mrb[0].mxu0 %v73
  %v312 = vpop.f32.mrb[0].mxu0
  %v313 = vadd.f32 0.0, %v312
  %v314 = vpop.f32.mrb[0].mxu0
  %v315 = vadd.f32 0.0, %v314
  %v316 = vpop.f32.mrb[0].mxu0
  %v317 = vadd.f32 0.0, %v316
  %v318 = vpop.f32.mrb[0].mxu0
  %v319 = vadd.f32 0.0, %v318
  %320 = vdwg.mxu0
  %v321 = vadd.f32 %v27, %v270
  %v322 = vadd.f32 %v28, %v272
  %v323 = vadd.f32 %v29, %v313
  %v324 = vadd.f32 %v30, %v315
  %v325 = vadd.f32 %v31, %v274
  %v326 = vadd.f32 %v32, %v276
  %v327 = vadd.f32 %v33, %v317
  %v328 = vadd.f32 %v34, %v319
  %329 = vst [vmem:[#allocation2] sm:$0xff] %v321
  %330 = vst [vmem:[#allocation2 + $0x8] sm:$0xff] %v322
  %331 = vst [vmem:[#allocation2 + $0x10] sm:$0xff] %v323
  %332 = vst [vmem:[#allocation2 + $0x18] sm:$0xff] %v324
  %333 = vst [vmem:[#allocation2 + $0x20] sm:$0xff] %v325
  %334 = vst [vmem:[#allocation2 + $0x28] sm:$0xff] %v326
  %335 = vst [vmem:[#allocation2 + $0x30] sm:$0xff] %v327
  %336 = vst [vmem:[#allocation2 + $0x38] sm:$0xff] %v328
  // Predicated region
  $region18: #{model1_forward.7} parent=0 // pred_check
    %p337 = pneg %p15
  $region19: #{model1_forward.7} parent=0 // pred_check_branch
    %339 = sbr.rel (%p337) target = $region21
  $region20: #{model1_forward.7} parent=0 // pred_region
    %v340 = vld [vmem:[#allocation2] sm:$0xff]
    %v341 = vld [vmem:[#allocation2 + $0x8] sm:$0xff]
    %v342 = vld [vmem:[#allocation2 + $0x10] sm:$0xff]
    %v343 = vld [vmem:[#allocation2 + $0x18] sm:$0xff]
    %v344 = vld [vmem:[#allocation2 + $0x20] sm:$0xff]
    %v345 = vld [vmem:[#allocation2 + $0x28] sm:$0xff]
    %v346 = vld [vmem:[#allocation2 + $0x30] sm:$0xff]
    %v347 = vld [vmem:[#allocation2 + $0x38] sm:$0xff]
    %v348 = vld [vmem:[%s2] sm:$0xf]
    %v350 = vlaneseq
    %v351 = vshrl.u32 %v350, 7
    %v352 = vsub.s32 0, %v351
    %v353 = vrot.slane %v348, %v352
    %v354 = vlaneseq
    %v355 = vshrl.u32 %v354, 7
    %v356 = vsub.s32 1, %v355
    %v357 = vrot.slane %v348, %v356
    %v358 = vlaneseq
    %v359 = vshrl.u32 %v358, 7
    %v360 = vsub.s32 2, %v359
    %v361 = vrot.slane %v348, %v360
    %v362 = vlaneseq
    %v363 = vshrl.u32 %v362, 7
    %v364 = vsub.s32 3, %v363
    %v365 = vrot.slane %v348, %v364
    %v370 = vadd.f32 %v340, %v353
    %v371 = vadd.f32 %v341, %v357
    %v372 = vadd.f32 %v342, %v361
    %v373 = vadd.f32 %v343, %v365
    %v374 = vadd.f32 %v344, %v353
    %v375 = vadd.f32 %v345, %v357
    %v376 = vadd.f32 %v346, %v361
    %v377 = vadd.f32 %v347, %v365
    %v378 = vpack.c.bf16 %v374, %v370
    %v379 = vpack.c.bf16 %v375, %v371
    %v380 = vpack.c.bf16 %v376, %v372
    %v381 = vpack.c.bf16 %v377, %v373
    %v386 = vunpack.c.l.b16 %v378
    %v387 = vunpack.c.l.b16 %v379
    %v388 = vunpack.c.l.b16 %v380
    %v389 = vunpack.c.l.b16 %v381
    %v390 = vunpack.c.h.b16 %v378
    %v391 = vunpack.c.h.b16 %v379
    %v392 = vunpack.c.h.b16 %v380
    %v393 = vunpack.c.h.b16 %v381
    %v394 = vpack.c.b16 %v387, %v386
    %v395 = vpack.c.b16 %v389, %v388
    %v396 = vpack.c.b16 %v391, %v390
    %v397 = vpack.c.b16 %v393, %v392
    %402 = vst [vmem:[%s3] sm:$0xff] %v394
    %403 = vst [vmem:[%s3 + $0x8] sm:$0xff] %v395
    %404 = vst [vmem:[%s3 + $0x10] sm:$0xff] %v396
    %405 = vst [vmem:[%s3 + $0x18] sm:$0xff] %v397
  $region21: #{model1_forward.7} parent=0 // pred_fallthru
    _
  // Predicated region
  $region22: #{model1_forward.7} parent=0 // pred_check
    _
  $region23: #{model1_forward.7} parent=0 // pred_check_branch
    %407 = sbr.rel (0) target = $region25
  $region24: #{model1_forward.7} parent=0 // pred_region
    _
  $region25: #{model1_forward.7} parent=0 // pred_fallthru
    _
  // Predicated region
  $region26: #{model1_forward.7} parent=0 // pred_check
    _
  $region27: #{model1_forward.7} parent=0 // pred_check_branch
    %409 = sbr.rel (0) target = $region29
  $region28: #{model1_forward.7} parent=0 // pred_region
    _
  $region29: #{model1_forward.7} parent=0 // pred_fallthru
    _

// kernel: model1_forward.8
$region0: #{model1_forward.8}
  #allocation0 [shape = 'u32[]', space=smem, size = 0x4, offset = 0x4, fixed_abs, tag = 'smem constant byte address 0x4 - core index']
  #allocation1 [shape = 'u32[144,128]{1,0:T(1,128)}', space=vmem, size = 0x12000, scoped, tag = 'internal scratch']
  #allocation2 [shape = 'f32[2,128]{1,0:T(2,128)}', space=vmem, size = 0x400, scoped, tag = 'scratch operand']
  #allocation3 [shape = 'f32[2,128]{1,0:T(2,128)}', space=vmem, size = 0x400, scoped, tag = 'scratch operand']
  #allocation4 [shape = 'f32[2,128]{1,0:T(2,128)}', space=vmem, size = 0x400, scoped, tag = 'scratch operand']
  #allocation5 [shape = 'f32[2,128]{1,0:T(2,128)}', space=vmem, size = 0x400, scoped, tag = 'scratch operand']
  %s0 = inlined_call_operand.vmem [shape: bf16[8,2,512], index: 0, kind: input, shape index: {}]
  %s1 = inlined_call_operand.vmem [shape: bf16[128,512], index: 1, kind: input, shape index: {}]
  %s2 = inlined_call_operand.vmem [shape: bf16[256,512], index: 2, kind: input, shape index: {}]
  %s3 = inlined_call_operand.vmem [shape: f32[1,512], index: 3, kind: input, shape index: {}]
  %s4 = inlined_call_operand.vmem [shape: bf16[8,2,128], index: 4, kind: output, shape index: {}]
  %s5 = sld [smem:[#allocation0]]
  $region53: #{model1_forward.8} parent=0
    _
  %s7 = ssub.s32 1, %s5
  %s8 = scalar_select 0, %s7, %s5
  loop: start=0, step=1, limit=10
  $region2: #{model1_forward.8} parent=0 // loop_pre_header
    _
  $region3: #{model1_forward.8} parent=0 // loop_header
    %s10 = sphi 0, %s14
    %p11 = scmp.ge.s32.totalorder %s10, 10
    %s17 = sphi 0, %s29
    %s18 = sphi 0, %s25
    %s19 = sphi 0, %s17
    %s20 = sphi 0, %s18
    %s21 = sphi 0, %s19
    %s22 = sphi 0, %s20
    %s34 = sphi 0, %s36
    %s37 = sphi 0, %s34
    %s38 = sphi 0, %s37
    %s54 = sphi 0, %s38
    %s58 = sphi 0, %s58
    %s60 = sphi 0, %s58
    %s61 = sphi 0, %s60
    %s75 = sphi 0, %s61
    %s79 = sphi 0, %s79
    %s81 = sphi 0, %s79
    %s82 = sphi 0, %s81
    %s96 = sphi 0, %s82
    %s100 = sphi 0, %s100
    %s102 = sphi 0, %s100
    %s103 = sphi 0, %s102
    %s117 = sphi 0, %s103
    %s125 = sphi 0, %s127
    %s128 = sphi 0, %s125
    %s129 = sphi 0, %s128
    %s145 = sphi 0, %s129
  $region4: #{model1_forward.8} parent=0 // loop_header_branch
    %13 = sbr.rel (%p11) target = $region8
  $region5: #{model1_forward.8} parent=0 // loop_body
    %s15 = ssub.s32 %s10, 1
    %s16 = ssub.s32 %s10, 2
    %s23 = sadd.s32 1, %s18
    %p24 = scmp.ge.s32.totalorder %s23, 8
    %s25 = scalar_select %p24, 0, %s23
    %s26 = sadd.s32 1, %s17
    %s27 = scalar_select %p24, %s26, %s17
    %p28 = scmp.ge.s32.totalorder %s27, 1
    %s29 = scalar_select %p28, 0, %s27
    %s30 = ssub.s32 %s18, %s25
    %s31 = ssub.s32 %s17, %s29
    %s32 = sor.u32 %s30, %s31
    %p33 = scmp.eq.s32.totalorder %s32, 0
    %s35 = sadd.s32 %s34, 1
    %s36 = scalar_select %p33, %s34, %s35
    %p39 = pneg %p33
    %p40 = scmp.eq.s32.totalorder %s10, 7
    %p41 = por %p39, %p40
    %p42 = scmp.ne.s32.totalorder %s34, %s37
    %p43 = scmp.eq.s32.totalorder %s10, 0
    %p44 = por %p42, %p43
    %p45 = scmp.ne.s32.totalorder %s34, %s37
    %p46 = scmp.eq.s32.totalorder %s15, 7
    %p47 = por %p45, %p46
    %p48 = scmp.ne.s32.totalorder %s37, %s38
    %p49 = scmp.eq.s32.totalorder %s15, 0
    %p50 = por %p48, %p49
    %p51 = scmp.ne.s32.totalorder %s37, %s38
    %p52 = scmp.eq.s32.totalorder %s16, 7
    %p53 = por %p51, %p52
    %p55 = scmp.ne.s32.totalorder %s38, %s54
    %p56 = scmp.eq.s32.totalorder %s16, 0
    %p57 = por %p55, %p56
    %s59 = sadd.s32 %s58, 1
    %p62 = scmp.eq.s32.totalorder %s10, 7
    %p63 = scmp.ne.s32.totalorder %s58, %s60
    %p64 = scmp.eq.s32.totalorder %s10, 0
    %p65 = por %p63, %p64
    %p66 = scmp.ne.s32.totalorder %s58, %s60
    %p67 = scmp.eq.s32.totalorder %s15, 7
    %p68 = por %p66, %p67
    %p69 = scmp.ne.s32.totalorder %s60, %s61
    %p70 = scmp.eq.s32.totalorder %s15, 0
    %p71 = por %p69, %p70
    %p72 = scmp.ne.s32.totalorder %s60, %s61
    %p73 = scmp.eq.s32.totalorder %s16, 7
    %p74 = por %p72, %p73
    %p76 = scmp.ne.s32.totalorder %s61, %s75
    %p77 = scmp.eq.s32.totalorder %s16, 0
    %p78 = por %p76, %p77
    %s80 = sadd.s32 %s79, 1
    %p83 = scmp.eq.s32.totalorder %s10, 7
    %p84 = scmp.ne.s32.totalorder %s79, %s81
    %p85 = scmp.eq.s32.totalorder %s10, 0
    %p86 = por %p84, %p85
    %p87 = scmp.ne.s32.totalorder %s79, %s81
    %p88 = scmp.eq.s32.totalorder %s15, 7
    %p89 = por %p87, %p88
    %p90 = scmp.ne.s32.totalorder %s81, %s82
    %p91 = scmp.eq.s32.totalorder %s15, 0
    %p92 = por %p90, %p91
    %p93 = scmp.ne.s32.totalorder %s81, %s82
    %p94 = scmp.eq.s32.totalorder %s16, 7
    %p95 = por %p93, %p94
    %p97 = scmp.ne.s32.totalorder %s82, %s96
    %p98 = scmp.eq.s32.totalorder %s16, 0
    %p99 = por %p97, %p98
    %s101 = sadd.s32 %s100, 1
    %p104 = scmp.eq.s32.totalorder %s10, 7
    %p105 = scmp.ne.s32.totalorder %s100, %s102
    %p106 = scmp.eq.s32.totalorder %s10, 0
    %p107 = por %p105, %p106
    %p108 = scmp.ne.s32.totalorder %s100, %s102
    %p109 = scmp.eq.s32.totalorder %s15, 7
    %p110 = por %p108, %p109
    %p111 = scmp.ne.s32.totalorder %s102, %s103
    %p112 = scmp.eq.s32.totalorder %s15, 0
    %p113 = por %p111, %p112
    %p114 = scmp.ne.s32.totalorder %s102, %s103
    %p115 = scmp.eq.s32.totalorder %s16, 7
    %p116 = por %p114, %p115
    %p118 = scmp.ne.s32.totalorder %s103, %s117
    %p119 = scmp.eq.s32.totalorder %s16, 0
    %p120 = por %p118, %p119
    %s121 = ssub.s32 %s18, %s25
    %s122 = ssub.s32 %s17, %s29
    %s123 = sor.u32 %s121, %s122
    %p124 = scmp.eq.s32.totalorder %s123, 0
    %s126 = sadd.s32 %s125, 1
    %s127 = scalar_select %p124, %s125, %s126
    %p130 = pneg %p124
    %p131 = scmp.eq.s32.totalorder %s10, 7
    %p132 = por %p130, %p131
    %p133 = scmp.ne.s32.totalorder %s125, %s128
    %p134 = scmp.eq.s32.totalorder %s10, 0
    %p135 = por %p133, %p134
    %p136 = scmp.ne.s32.totalorder %s125, %s128
    %p137 = scmp.eq.s32.totalorder %s15, 7
    %p138 = por %p136, %p137
    %p139 = scmp.ne.s32.totalorder %s128, %s129
    %p140 = scmp.eq.s32.totalorder %s15, 0
    %p141 = por %p139, %p140
    %p142 = scmp.ne.s32.totalorder %s128, %s129
    %p143 = scmp.eq.s32.totalorder %s16, 7
    %p144 = por %p142, %p143
    %p146 = scmp.ne.s32.totalorder %s129, %s145
    %p147 = scmp.eq.s32.totalorder %s16, 0
    %p148 = por %p146, %p147
    %p149 = scmp.le.s32.totalorder 1, %s10
    %p150 = scmp.lt.s32.totalorder %s10, 9
    %p151 = pnand %p149, %p150
    %p152 = pneg %p151
    // Predicated region
    $region9: #{model1_forward.8} parent=5 // pred_check
      _
    $region10: #{model1_forward.8} parent=5 // pred_check_branch
      %154 = sbr.rel (%p151) target = $region12
    $region11: #{model1_forward.8} parent=5 // pred_region
      %s155 = ssub.s32 %s10, 1
      // Predicated region
      $region13: #{model1_forward.8} parent=11 // pred_check
        %p156 = pneg %p71
      $region14: #{model1_forward.8} parent=11 // pred_check_branch
        %158 = sbr.rel (%p156) target = $region16
      $region15: #{model1_forward.8} parent=11 // pred_region
        _
      $region16: #{model1_forward.8} parent=11 // pred_fallthru
        _
      // Predicated region
      $region17: #{model1_forward.8} parent=11 // pred_check
        %p159 = pneg %p92
      $region18: #{model1_forward.8} parent=11 // pred_check_branch
        %161 = sbr.rel (%p159) target = $region20
      $region19: #{model1_forward.8} parent=11 // pred_region
        _
      $region20: #{model1_forward.8} parent=11 // pred_fallthru
        _
      // Predicated region
      $region21: #{model1_forward.8} parent=11 // pred_check
        %p162 = pneg %p113
      $region22: #{model1_forward.8} parent=11 // pred_check_branch
        %164 = sbr.rel (%p162) target = $region24
      $region23: #{model1_forward.8} parent=11 // pred_region
        _
      $region24: #{model1_forward.8} parent=11 // pred_fallthru
        _
    $region12: #{model1_forward.8} parent=5 // pred_fallthru
      _
    %p165 = scmp.lt.s32.totalorder %s10, 8
    // Predicated region
    $region25: #{model1_forward.8} parent=5 // pred_check
      %p166 = pneg %p165
    $region26: #{model1_forward.8} parent=5 // pred_check_branch
      %168 = sbr.rel (%p166) target = $region28
    $region27: #{model1_forward.8} parent=5 // pred_region
      // Predicated region
      $region29: #{model1_forward.8} parent=27 // pred_check
        %p169 = pneg %p44
      $region30: #{model1_forward.8} parent=27 // pred_check_branch
        %171 = sbr.rel (%p169) target = $region32
      $region31: #{model1_forward.8} parent=27 // pred_region
        %p172 = scmp.lt.s32.totalorder %s18, 7
        %s173 = scalar_select %p172, %s18, 7
        %p174 = scmp.lt.s32.totalorder %s17, 0
        %s175 = scalar_select %p174, %s17, 0
        %s176 = smul.addr %s175, 4
        %s177 = smul.addr %s173, 4
        %s178 = sadd.s32 %s176, %s177
        %s179 = scalar_lea.vmem %s0, %s178
      $region32: #{model1_forward.8} parent=27 // pred_fallthru
        _
    $region28: #{model1_forward.8} parent=5 // pred_fallthru
      _
    %p180 = scmp.le.s32.totalorder 1, %s10
    %p181 = scmp.lt.s32.totalorder %s10, 9
    %p182 = pnand %p180, %p181
    %p183 = pneg %p182
    // Predicated region
    $region33: #{model1_forward.8} parent=5 // pred_check
      _
    $region34: #{model1_forward.8} parent=5 // pred_check_branch
      %185 = sbr.rel (%p182) target = $region36
    $region35: #{model1_forward.8} parent=5 // pred_region
      %s186 = ssub.s32 %s10, 1
      %p187 = scmp.lt.s32.totalorder %s20, 7
      %s188 = scalar_select %p187, %s20, 7
      %p189 = scmp.lt.s32.totalorder %s19, 0
      %s190 = scalar_select %p189, %s19, 0
      %s191 = smul.addr %s190, 4
      %s192 = smul.addr %s188, 4
      %s193 = sadd.s32 %s191, %s192
      %s194 = scalar_lea.vmem %s0, %s193
      %p195 = pneg %p50
      %p196 = pneg %p47
      %p197 = pneg %p71
      %p198 = pneg %p68
      %p199 = pneg %p92
      %p200 = pneg %p89
      %p201 = pneg %p113
      %p202 = pneg %p110
      %p203 = pneg %p141
      %p204 = pneg %p138
      %p205 = scmp.lt.s32.totalorder %s20, 7
      %s206 = scalar_select %p205, %s20, 7
      %p207 = scmp.lt.s32.totalorder %s19, 0
      %s208 = scalar_select %p207, %s19, 0
      %s209 = sadd.s32 %s208, %s206
      %s210 = scalar_lea.vmem %s4, %s209
      %p211 = scmp.lt.s32.totalorder %s20, 7
      %s212 = scalar_select %p211, %s20, 7
      %p213 = scmp.lt.s32.totalorder %s19, 0
      %s214 = scalar_select %p213, %s19, 0
      %s215 = smul.addr %s214, 4
      %s216 = smul.addr %s212, 4
      %s217 = sadd.s32 %s215, %s216
      %s218 = scalar_lea.vmem %s0, %s217
      %p219 = scmp.lt.s32.totalorder %s20, 7
      %s220 = scalar_select %p219, %s20, 7
      %p221 = scmp.lt.s32.totalorder %s19, 0
      %s222 = scalar_select %p221, %s19, 0
      %s223 = sadd.s32 %s222, %s220
      %s224 = scalar_lea.vmem %s4, %s223
      %p226 = scmp.eq.s32.totalorder %s20, 0
      // Predicated region
      $region37: #{model1_forward.8} parent=35 // pred_check
        %p227 = pneg %p226
      $region38: #{model1_forward.8} parent=35 // pred_check_branch
        %229 = sbr.rel (%p227) target = $region40
      $region39: #{model1_forward.8} parent=35 // pred_region
        %230 = vst [vmem:[#allocation2] sm:$0x3] 0.0
        %231 = vst [vmem:[#allocation3] sm:$0x3] 0.0
        %232 = vst [vmem:[#allocation4] sm:$0x3] 0.0
        %233 = vst [vmem:[#allocation5] sm:$0x3] 0.0
      $region40: #{model1_forward.8} parent=35 // pred_fallthru
        _
      %v234 = vld [vmem:[#allocation2] sm:$0x3]
      %v235 = vld [vmem:[#allocation3] sm:$0x3]
      %v236 = vld [vmem:[#allocation4] sm:$0x3]
      %v237 = vld [vmem:[#allocation5] sm:$0x3]
      %v238 = vld [vmem:[%s218] sm:$0xf]
      %v239 = vunpack.c.l.bf16 %v238
      %v240 = vpack.c.bf16 %v234, %v234
      %v241 = vld [vmem:[%s1] sm:$0xff]
      %v242 = vld [vmem:[%s1 + $0x8] sm:$0xff]
      %v243 = vld [vmem:[%s1 + $0x10] sm:$0xff]
      %v244 = vld [vmem:[%s1 + $0x18] sm:$0xff]
      %v245 = vld [vmem:[%s1 + $0x20] sm:$0xff]
      %v246 = vld [vmem:[%s1 + $0x28] sm:$0xff]
      %v247 = vld [vmem:[%s1 + $0x30] sm:$0xff]
      %v248 = vld [vmem:[%s1 + $0x38] sm:$0xff]
      %v249 = vld [vmem:[%s1 + $0x40] sm:$0xff]
      %v250 = vld [vmem:[%s1 + $0x48] sm:$0xff]
      %v251 = vld [vmem:[%s1 + $0x50] sm:$0xff]
      %v252 = vld [vmem:[%s1 + $0x58] sm:$0xff]
      %v253 = vld [vmem:[%s1 + $0x60] sm:$0xff]
      %v254 = vld [vmem:[%s1 + $0x68] sm:$0xff]
      %v255 = vld [vmem:[%s1 + $0x70] sm:$0xff]
      %v256 = vld [vmem:[%s1 + $0x78] sm:$0xff]
      %v257 = vld [vmem:[%s1 + $0x80] sm:$0xff]
      %v258 = vld [vmem:[%s1 + $0x88] sm:$0xff]
      %v259 = vld [vmem:[%s1 + $0x90] sm:$0xff]
      %v260 = vld [vmem:[%s1 + $0x98] sm:$0xff]
      %v261 = vld [vmem:[%s1 + $0xa0] sm:$0xff]
      %v262 = vld [vmem:[%s1 + $0xa8] sm:$0xff]
      %v263 = vld [vmem:[%s1 + $0xb0] sm:$0xff]
      %v264 = vld [vmem:[%s1 + $0xb8] sm:$0xff]
      %v265 = vld [vmem:[%s1 + $0xc0] sm:$0xff]
      %v266 = vld [vmem:[%s1 + $0xc8] sm:$0xff]
      %v267 = vld [vmem:[%s1 + $0xd0] sm:$0xff]
      %v268 = vld [vmem:[%s1 + $0xd8] sm:$0xff]
      %v269 = vld [vmem:[%s1 + $0xe0] sm:$0xff]
      %v270 = vld [vmem:[%s1 + $0xe8] sm:$0xff]
      %v271 = vld [vmem:[%s1 + $0xf0] sm:$0xff]
      %v272 = vld [vmem:[%s1 + $0xf8] sm:$0xff]
      %v305 = vunpack.c.l.b16 %v241
      %v306 = vunpack.c.h.b16 %v241
      %v307 = vunpack.c.l.b16 %v242
      %v308 = vunpack.c.h.b16 %v242
      %v309 = vunpack.c.l.b16 %v243
      %v310 = vunpack.c.h.b16 %v243
      %v311 = vunpack.c.l.b16 %v244
      %v312 = vunpack.c.h.b16 %v244
      %v313 = vunpack.c.l.b16 %v245
      %v314 = vunpack.c.h.b16 %v245
      %v315 = vunpack.c.l.b16 %v246
      %v316 = vunpack.c.h.b16 %v246
      %v317 = vunpack.c.l.b16 %v247
      %v318 = vunpack.c.h.b16 %v247
      %v319 = vunpack.c.l.b16 %v248
      %v320 = vunpack.c.h.b16 %v248
      %v321 = vunpack.c.l.b16 %v249
      %v322 = vunpack.c.h.b16 %v249
      %v323 = vunpack.c.l.b16 %v250
      %v324 = vunpack.c.h.b16 %v250
      %v325 = vunpack.c.l.b16 %v251
      %v326 = vunpack.c.h.b16 %v251
      %v327 = vunpack.c.l.b16 %v252
      %v328 = vunpack.c.h.b16 %v252
      %v329 = vunpack.c.l.b16 %v253
      %v330 = vunpack.c.h.b16 %v253
      %v331 = vunpack.c.l.b16 %v254
      %v332 = vunpack.c.h.b16 %v254
      %v333 = vunpack.c.l.b16 %v255
      %v334 = vunpack.c.h.b16 %v255
      %v335 = vunpack.c.l.b16 %v256
      %v336 = vunpack.c.h.b16 %v256
      %v337 = vunpack.c.l.b16 %v257
      %v338 = vunpack.c.h.b16 %v257
      %v339 = vunpack.c.l.b16 %v258
      %v340 = vunpack.c.h.b16 %v258
      %v341 = vunpack.c.l.b16 %v259
      %v342 = vunpack.c.h.b16 %v259
      %v343 = vunpack.c.l.b16 %v260
      %v344 = vunpack.c.h.b16 %v260
      %v345 = vunpack.c.l.b16 %v261
      %v346 = vunpack.c.h.b16 %v261
      %v347 = vunpack.c.l.b16 %v262
      %v348 = vunpack.c.h.b16 %v262
      %v349 = vunpack.c.l.b16 %v263
      %v350 = vunpack.c.h.b16 %v263
      %v351 = vunpack.c.l.b16 %v264
      %v352 = vunpack.c.h.b16 %v264
      %v353 = vunpack.c.l.b16 %v265
      %v354 = vunpack.c.h.b16 %v265
      %v355 = vunpack.c.l.b16 %v266
      %v356 = vunpack.c.h.b16 %v266
      %v357 = vunpack.c.l.b16 %v267
      %v358 = vunpack.c.h.b16 %v267
      %v359 = vunpack.c.l.b16 %v268
      %v360 = vunpack.c.h.b16 %v268
      %v361 = vunpack.c.l.b16 %v269
      %v362 = vunpack.c.h.b16 %v269
      %v363 = vunpack.c.l.b16 %v270
      %v364 = vunpack.c.h.b16 %v270
      %v365 = vunpack.c.l.b16 %v271
      %v366 = vunpack.c.h.b16 %v271
      %v367 = vunpack.c.l.b16 %v272
      %v368 = vunpack.c.h.b16 %v272
      %v369 = vpack.c.b16 %v309, %v305
      %v370 = vpack.c.b16 %v310, %v306
      %v371 = vpack.c.b16 %v311, %v307
      %v372 = vpack.c.b16 %v312, %v308
      %v373 = vpack.c.b16 %v317, %v313
      %v374 = vpack.c.b16 %v318, %v314
      %v375 = vpack.c.b16 %v319, %v315
      %v376 = vpack.c.b16 %v320, %v316
      %v377 = vpack.c.b16 %v325, %v321
      %v378 = vpack.c.b16 %v326, %v322
      %v379 = vpack.c.b16 %v327, %v323
      %v380 = vpack.c.b16 %v328, %v324
      %v381 = vpack.c.b16 %v333, %v329
      %v382 = vpack.c.b16 %v334, %v330
      %v383 = vpack.c.b16 %v335, %v331
      %v384 = vpack.c.b16 %v336, %v332
      %v385 = vpack.c.b16 %v341, %v337
      %v386 = vpack.c.b16 %v342, %v338
      %v387 = vpack.c.b16 %v343, %v339
      %v388 = vpack.c.b16 %v344, %v340
      %v389 = vpack.c.b16 %v349, %v345
      %v390 = vpack.c.b16 %v350, %v346
      %v391 = vpack.c.b16 %v351, %v347
      %v392 = vpack.c.b16 %v352, %v348
      %v393 = vpack.c.b16 %v357, %v353
      %v394 = vpack.c.b16 %v358, %v354
      %v395 = vpack.c.b16 %v359, %v355
      %v396 = vpack.c.b16 %v360, %v356
      %v397 = vpack.c.b16 %v365, %v361
      %v398 = vpack.c.b16 %v366, %v362
      %v399 = vpack.c.b16 %v367, %v363
      %v400 = vpack.c.b16 %v368, %v364
      %433 = vmatprep.subr.bf16.mxu0 %v370
      %434 = vmatpush1.bf16.msra.mxu0 %v369
      %435 = vmatprep.subr.bf16.mxu0 %v374
      %436 = vmatpush1.bf16.msra.mxu0 %v373
      %437 = vmatprep.subr.bf16.mxu0 %v378
      %438 = vmatpush1.bf16.msra.mxu0 %v377
      %439 = vmatprep.subr.bf16.mxu0 %v382
      %440 = vmatpush1.bf16.msra.mxu0 %v381
      %441 = vmatprep.subr.bf16.mxu0 %v386
      %442 = vmatpush1.bf16.msra.mxu0 %v385
      %443 = vmatprep.subr.bf16.mxu0 %v390
      %444 = vmatpush1.bf16.msra.mxu0 %v389
      %445 = vmatprep.subr.bf16.mxu0 %v394
      %446 = vmatpush1.bf16.msra.mxu0 %v393
      %447 = vmatprep.subr.bf16.mxu0 %v398
      %448 = vmatpush1.bf16.msra.mxu0 %v397
      %449 = vmatprep.subr.bf16.mxu0 0
      %450 = vmatpush1.bf16.msra.mxu0 0
      %451 = vmatprep.subr.bf16.mxu0 0
      %452 = vmatpush1.bf16.msra.mxu0 0
      %453 = vmatprep.subr.bf16.mxu0 0
      %454 = vmatpush1.bf16.msra.mxu0 0
      %455 = vmatprep.subr.bf16.mxu0 0
      %456 = vmatpush1.bf16.msra.mxu0 0
      %457 = vmatprep.subr.bf16.mxu0 0
      %458 = vmatpush1.bf16.msra.mxu0 0
      %459 = vmatprep.subr.bf16.mxu0 0
      %460 = vmatpush1.bf16.msra.mxu0 0
      %461 = vmatprep.subr.bf16.mxu0 0
      %462 = vmatpush1.bf16.msra.mxu0 0
      %463 = vmatprep.subr.bf16.mxu0 0
      %464 = vmatpush1.bf16.msra.mxu0 0
      %465 = vmatprep.mubr.bf16.mxu0 0
      %466 = vmatmul.mubr.bf16.gmra.mrb[0].mxu0 %v240
      %v467 = vpop.f32.mrb[0].mxu0
      %v468 = vadd.f32 0.0, %v467
      %v469 = vpop.f32.mrb[0].mxu0
      %v470 = vadd.f32 0.0, %v469
      %v471 = vpop.f32.mrb[0].mxu0
      %v472 = vpop.f32.mrb[0].mxu0
      %473 = vdwg.mxu0
      %474 = vmatprep.subr.bf16.mxu0 %v372
      %475 = vmatpush1.bf16.msra.mxu0 %v371
      %476 = vmatprep.subr.bf16.mxu0 %v376
      %477 = vmatpush1.bf16.msra.mxu0 %v375
      %478 = vmatprep.subr.bf16.mxu0 %v380
      %479 = vmatpush1.bf16.msra.mxu0 %v379
      %480 = vmatprep.subr.bf16.mxu0 %v384
      %481 = vmatpush1.bf16.msra.mxu0 %v383
      %482 = vmatprep.subr.bf16.mxu0 %v388
      %483 = vmatpush1.bf16.msra.mxu0 %v387
      %484 = vmatprep.subr.bf16.mxu0 %v392
      %485 = vmatpush1.bf16.msra.mxu0 %v391
      %486 = vmatprep.subr.bf16.mxu0 %v396
      %487 = vmatpush1.bf16.msra.mxu0 %v395
      %488 = vmatprep.subr.bf16.mxu0 %v400
      %489 = vmatpush1.bf16.msra.mxu0 %v399
      %490 = vmatprep.subr.bf16.mxu0 0
      %491 = vmatpush1.bf16.msra.mxu0 0
      %492 = vmatprep.subr.bf16.mxu0 0
      %493 = vmatpush1.bf16.msra.mxu0 0
      %494 = vmatprep.subr.bf16.mxu0 0
      %495 = vmatpush1.bf16.msra.mxu0 0
      %496 = vmatprep.subr.bf16.mxu0 0
      %497 = vmatpush1.bf16.msra.mxu0 0
      %498 = vmatprep.subr.bf16.mxu0 0
      %499 = vmatpush1.bf16.msra.mxu0 0
      %500 = vmatprep.subr.bf16.mxu0 0
      %501 = vmatpush1.bf16.msra.mxu0 0
      %502 = vmatprep.subr.bf16.mxu0 0
      %503 = vmatpush1.bf16.msra.mxu0 0
      %504 = vmatprep.subr.bf16.mxu0 0
      %505 = vmatpush1.bf16.msra.mxu0 0
      %506 = vmatprep.mubr.bf16.mxu0 0
      %507 = vmatmul.mubr.bf16.gmra.mrb[0].mxu0 %v240
      %v508 = vpop.f32.mrb[0].mxu0
      %v509 = vadd.f32 0.0, %v508
      %v510 = vpop.f32.mrb[0].mxu0
      %v511 = vadd.f32 0.0, %v510
      %v512 = vpop.f32.mrb[0].mxu0
      %v513 = vpop.f32.mrb[0].mxu0
      %514 = vdwg.mxu0
      %v519 = vcombine.low %v468, %v470
      %v520 = vcombine.low %v509, %v511
      %v522 = vunpack.c.l.s4 1983009808
      %v523 = vunpack.c.0.s8 %v522
      %v524 = vlaneseq
      %v525 = vshrl.u32 %v524, 7
      %v526 = vsub.s32 %v523, %v525
      %v527 = vrot.slane %v519, %v526
      %v529 = vunpack.c.l.s4 1983009808
      %v530 = vunpack.c.0.s8 %v529
      %v531 = vlaneseq
      %v532 = vshrl.u32 %v531, 7
      %v533 = vsub.s32 %v530, %v532
      %v534 = vrot.slane %v520, %v533
      %v535 = vcombine.low %v527, %v534
      %v537 = vadd.f32 %v239, %v535
      %v538 = vxor.u32 %v537, 2147483648
      %v539 = vmul.f32 %v538, 1.442695
      %v540 = vpow.pop %v539
      %v541 = vadd.f32 %v540, 1.0
      %v542 = vrcp.pop %v541
      %v543 = vmul.f32 1.0, %v542
      %v545 = vrot.slane %v537, 6
      %v547 = vtanh.pop %v545
      %v549 = vrot.slane %v543, 2
      %v551 = vmul.f32 %v549, %v235
      %v552 = vmul.f32 %v543, %v547
      %v553 = vadd.f32 %v551, %v552
      %v554 = vtanh.pop %v553
      %v555 = vrot.slane %v543, 4
      %v557 = vmul.f32 %v555, %v554
      %v558 = vpack.c.bf16 %v557, %v557
      %v559 = vpack.c.bf16 %v236, %v236
      %v560 = vld [vmem:[%s2] sm:$0xff]
      %v561 = vld [vmem:[%s2 + $0x8] sm:$0xff]
      %v562 = vld [vmem:[%s2 + $0x10] sm:$0xff]
      %v563 = vld [vmem:[%s2 + $0x18] sm:$0xff]
      %v564 = vld [vmem:[%s2 + $0x20] sm:$0xff]
      %v565 = vld [vmem:[%s2 + $0x28] sm:$0xff]
      %v566 = vld [vmem:[%s2 + $0x30] sm:$0xff]
      %v567 = vld [vmem:[%s2 + $0x38] sm:$0xff]
      %v568 = vld [vmem:[%s2 + $0x40] sm:$0xff]
      %v569 = vld [vmem:[%s2 + $0x48] sm:$0xff]
      %v570 = vld [vmem:[%s2 + $0x50] sm:$0xff]
      %v571 = vld [vmem:[%s2 + $0x58] sm:$0xff]
      %v572 = vld [vmem:[%s2 + $0x60] sm:$0xff]
      %v573 = vld [vmem:[%s2 + $0x68] sm:$0xff]
      %v574 = vld [vmem:[%s2 + $0x70] sm:$0xff]
      %v575 = vld [vmem:[%s2 + $0x78] sm:$0xff]
      %v576 = vld [vmem:[%s2 + $0x80] sm:$0xff]
      %v577 = vld [vmem:[%s2 + $0x88] sm:$0xff]
      %v578 = vld [vmem:[%s2 + $0x90] sm:$0xff]
      %v579 = vld [vmem:[%s2 + $0x98] sm:$0xff]
      %v580 = vld [vmem:[%s2 + $0xa0] sm:$0xff]
      %v581 = vld [vmem:[%s2 + $0xa8] sm:$0xff]
      %v582 = vld [vmem:[%s2 + $0xb0] sm:$0xff]
      %v583 = vld [vmem:[%s2 + $0xb8] sm:$0xff]
      %v584 = vld [vmem:[%s2 + $0xc0] sm:$0xff]
      %v585 = vld [vmem:[%s2 + $0xc8] sm:$0xff]
      %v586 = vld [vmem:[%s2 + $0xd0] sm:$0xff]
      %v587 = vld [vmem:[%s2 + $0xd8] sm:$0xff]
      %v588 = vld [vmem:[%s2 + $0xe0] sm:$0xff]
      %v589 = vld [vmem:[%s2 + $0xe8] sm:$0xff]
      %v590 = vld [vmem:[%s2 + $0xf0] sm:$0xff]
      %v591 = vld [vmem:[%s2 + $0xf8] sm:$0xff]
      %v592 = vld [vmem:[%s2 + $0x100] sm:$0xff]
      %v593 = vld [vmem:[%s2 + $0x108] sm:$0xff]
      %v594 = vld [vmem:[%s2 + $0x110] sm:$0xff]
      %v595 = vld [vmem:[%s2 + $0x118] sm:$0xff]
      %v596 = vld [vmem:[%s2 + $0x120] sm:$0xff]
      %v597 = vld [vmem:[%s2 + $0x128] sm:$0xff]
      %v598 = vld [vmem:[%s2 + $0x130] sm:$0xff]
      %v599 = vld [vmem:[%s2 + $0x138] sm:$0xff]
      %v600 = vld [vmem:[%s2 + $0x140] sm:$0xff]
      %v601 = vld [vmem:[%s2 + $0x148] sm:$0xff]
      %v602 = vld [vmem:[%s2 + $0x150] sm:$0xff]
      %v603 = vld [vmem:[%s2 + $0x158] sm:$0xff]
      %v604 = vld [vmem:[%s2 + $0x160] sm:$0xff]
      %v605 = vld [vmem:[%s2 + $0x168] sm:$0xff]
      %v606 = vld [vmem:[%s2 + $0x170] sm:$0xff]
      %v607 = vld [vmem:[%s2 + $0x178] sm:$0xff]
      %v608 = vld [vmem:[%s2 + $0x180] sm:$0xff]
      %v609 = vld [vmem:[%s2 + $0x188] sm:$0xff]
      %v610 = vld [vmem:[%s2 + $0x190] sm:$0xff]
      %v611 = vld [vmem:[%s2 + $0x198] sm:$0xff]
      %v612 = vld [vmem:[%s2 + $0x1a0] sm:$0xff]
      %v613 = vld [vmem:[%s2 + $0x1a8] sm:$0xff]
      %v614 = vld [vmem:[%s2 + $0x1b0] sm:$0xff]
      %v615 = vld [vmem:[%s2 + $0x1b8] sm:$0xff]
      %v616 = vld [vmem:[%s2 + $0x1c0] sm:$0xff]
      %v617 = vld [vmem:[%s2 + $0x1c8] sm:$0xff]
      %v618 = vld [vmem:[%s2 + $0x1d0] sm:$0xff]
      %v619 = vld [vmem:[%s2 + $0x1d8] sm:$0xff]
      %v620 = vld [vmem:[%s2 + $0x1e0] sm:$0xff]
      %v621 = vld [vmem:[%s2 + $0x1e8] sm:$0xff]
      %v622 = vld [vmem:[%s2 + $0x1f0] sm:$0xff]
      %v623 = vld [vmem:[%s2 + $0x1f8] sm:$0xff]
      %v624 = vld [vmem:[%s3] sm:$0xf]
      %v626 = vlaneseq
      %v627 = vshrl.u32 %v626, 7
      %v628 = vsub.s32 0, %v627
      %v629 = vrot.slane %v624, %v628
      %v630 = vlaneseq
      %v631 = vshrl.u32 %v630, 7
      %v632 = vsub.s32 1, %v631
      %v633 = vrot.slane %v624, %v632
      %v634 = vlaneseq
      %v635 = vshrl.u32 %v634, 7
      %v636 = vsub.s32 2, %v635
      %v637 = vrot.slane %v624, %v636
      %v638 = vlaneseq
      %v639 = vshrl.u32 %v638, 7
      %v640 = vsub.s32 3, %v639
      %v641 = vrot.slane %v624, %v640
      %v710 = vunpack.c.l.b16 %v560
      %v711 = vunpack.c.h.b16 %v560
      %v712 = vunpack.c.l.b16 %v561
      %v713 = vunpack.c.h.b16 %v561
      %v714 = vunpack.c.l.b16 %v562
      %v715 = vunpack.c.h.b16 %v562
      %v716 = vunpack.c.l.b16 %v563
      %v717 = vunpack.c.h.b16 %v563
      %v718 = vunpack.c.l.b16 %v564
      %v719 = vunpack.c.h.b16 %v564
      %v720 = vunpack.c.l.b16 %v565
      %v721 = vunpack.c.h.b16 %v565
      %v722 = vunpack.c.l.b16 %v566
      %v723 = vunpack.c.h.b16 %v566
      %v724 = vunpack.c.l.b16 %v567
      %v725 = vunpack.c.h.b16 %v567
      %v726 = vunpack.c.l.b16 %v568
      %v727 = vunpack.c.h.b16 %v568
      %v728 = vunpack.c.l.b16 %v569
      %v729 = vunpack.c.h.b16 %v569
      %v730 = vunpack.c.l.b16 %v570
      %v731 = vunpack.c.h.b16 %v570
      %v732 = vunpack.c.l.b16 %v571
      %v733 = vunpack.c.h.b16 %v571
      %v734 = vunpack.c.l.b16 %v572
      %v735 = vunpack.c.h.b16 %v572
      %v736 = vunpack.c.l.b16 %v573
      %v737 = vunpack.c.h.b16 %v573
      %v738 = vunpack.c.l.b16 %v574
      %v739 = vunpack.c.h.b16 %v574
      %v740 = vunpack.c.l.b16 %v575
      %v741 = vunpack.c.h.b16 %v575
      %v742 = vunpack.c.l.b16 %v576
      %v743 = vunpack.c.h.b16 %v576
      %v744 = vunpack.c.l.b16 %v577
      %v745 = vunpack.c.h.b16 %v577
      %v746 = vunpack.c.l.b16 %v578
      %v747 = vunpack.c.h.b16 %v578
      %v748 = vunpack.c.l.b16 %v579
      %v749 = vunpack.c.h.b16 %v579
      %v750 = vunpack.c.l.b16 %v580
      %v751 = vunpack.c.h.b16 %v580
      %v752 = vunpack.c.l.b16 %v581
      %v753 = vunpack.c.h.b16 %v581
      %v754 = vunpack.c.l.b16 %v582
      %v755 = vunpack.c.h.b16 %v582
      %v756 = vunpack.c.l.b16 %v583
      %v757 = vunpack.c.h.b16 %v583
      %v758 = vunpack.c.l.b16 %v584
      %v759 = vunpack.c.h.b16 %v584
      %v760 = vunpack.c.l.b16 %v585
      %v761 = vunpack.c.h.b16 %v585
      %v762 = vunpack.c.l.b16 %v586
      %v763 = vunpack.c.h.b16 %v586
      %v764 = vunpack.c.l.b16 %v587
      %v765 = vunpack.c.h.b16 %v587
      %v766 = vunpack.c.l.b16 %v588
      %v767 = vunpack.c.h.b16 %v588
      %v768 = vunpack.c.l.b16 %v589
      %v769 = vunpack.c.h.b16 %v589
      %v770 = vunpack.c.l.b16 %v590
      %v771 = vunpack.c.h.b16 %v590
      %v772 = vunpack.c.l.b16 %v591
      %v773 = vunpack.c.h.b16 %v591
      %v774 = vunpack.c.l.b16 %v592
      %v775 = vunpack.c.h.b16 %v592
      %v776 = vunpack.c.l.b16 %v593
      %v777 = vunpack.c.h.b16 %v593
      %v778 = vunpack.c.l.b16 %v594
      %v779 = vunpack.c.h.b16 %v594
      %v780 = vunpack.c.l.b16 %v595
      %v781 = vunpack.c.h.b16 %v595
      %v782 = vunpack.c.l.b16 %v596
      %v783 = vunpack.c.h.b16 %v596
      %v784 = vunpack.c.l.b16 %v597
      %v785 = vunpack.c.h.b16 %v597
      %v786 = vunpack.c.l.b16 %v598
      %v787 = vunpack.c.h.b16 %v598
      %v788 = vunpack.c.l.b16 %v599
      %v789 = vunpack.c.h.b16 %v599
      %v790 = vunpack.c.l.b16 %v600
      %v791 = vunpack.c.h.b16 %v600
      %v792 = vunpack.c.l.b16 %v601
      %v793 = vunpack.c.h.b16 %v601
      %v794 = vunpack.c.l.b16 %v602
      %v795 = vunpack.c.h.b16 %v602
      %v796 = vunpack.c.l.b16 %v603
      %v797 = vunpack.c.h.b16 %v603
      %v798 = vunpack.c.l.b16 %v604
      %v799 = vunpack.c.h.b16 %v604
      %v800 = vunpack.c.l.b16 %v605
      %v801 = vunpack.c.h.b16 %v605
      %v802 = vunpack.c.l.b16 %v606
      %v803 = vunpack.c.h.b16 %v606
      %v804 = vunpack.c.l.b16 %v607
      %v805 = vunpack.c.h.b16 %v607
      %v806 = vunpack.c.l.b16 %v608
      %v807 = vunpack.c.h.b16 %v608
      %v808 = vunpack.c.l.b16 %v609
      %v809 = vunpack.c.h.b16 %v609
      %v810 = vunpack.c.l.b16 %v610
      %v811 = vunpack.c.h.b16 %v610
      %v812 = vunpack.c.l.b16 %v611
      %v813 = vunpack.c.h.b16 %v611
      %v814 = vunpack.c.l.b16 %v612
      %v815 = vunpack.c.h.b16 %v612
      %v816 = vunpack.c.l.b16 %v613
      %v817 = vunpack.c.h.b16 %v613
      %v818 = vunpack.c.l.b16 %v614
      %v819 = vunpack.c.h.b16 %v614
      %v820 = vunpack.c.l.b16 %v615
      %v821 = vunpack.c.h.b16 %v615
      %v822 = vunpack.c.l.b16 %v616
      %v823 = vunpack.c.h.b16 %v616
      %v824 = vunpack.c.l.b16 %v617
      %v825 = vunpack.c.h.b16 %v617
      %v826 = vunpack.c.l.b16 %v618
      %v827 = vunpack.c.h.b16 %v618
      %v828 = vunpack.c.l.b16 %v619
      %v829 = vunpack.c.h.b16 %v619
      %v830 = vunpack.c.l.b16 %v620
      %v831 = vunpack.c.h.b16 %v620
      %v832 = vunpack.c.l.b16 %v621
      %v833 = vunpack.c.h.b16 %v621
      %v834 = vunpack.c.l.b16 %v622
      %v835 = vunpack.c.h.b16 %v622
      %v836 = vunpack.c.l.b16 %v623
      %v837 = vunpack.c.h.b16 %v623
      %v838 = vpack.c.b16 %v714, %v710
      %v839 = vpack.c.b16 %v715, %v711
      %v840 = vpack.c.b16 %v716, %v712
      %v841 = vpack.c.b16 %v717, %v713
      %v842 = vpack.c.b16 %v722, %v718
      %v843 = vpack.c.b16 %v723, %v719
      %v844 = vpack.c.b16 %v724, %v720
      %v845 = vpack.c.b16 %v725, %v721
      %v846 = vpack.c.b16 %v730, %v726
      %v847 = vpack.c.b16 %v731, %v727
      %v848 = vpack.c.b16 %v732, %v728
      %v849 = vpack.c.b16 %v733, %v729
      %v850 = vpack.c.b16 %v738, %v734
      %v851 = vpack.c.b16 %v739, %v735
      %v852 = vpack.c.b16 %v740, %v736
      %v853 = vpack.c.b16 %v741, %v737
      %v854 = vpack.c.b16 %v746, %v742
      %v855 = vpack.c.b16 %v747, %v743
      %v856 = vpack.c.b16 %v748, %v744
      %v857 = vpack.c.b16 %v749, %v745
      %v858 = vpack.c.b16 %v754, %v750
      %v859 = vpack.c.b16 %v755, %v751
      %v860 = vpack.c.b16 %v756, %v752
      %v861 = vpack.c.b16 %v757, %v753
      %v862 = vpack.c.b16 %v762, %v758
      %v863 = vpack.c.b16 %v763, %v759
      %v864 = vpack.c.b16 %v764, %v760
      %v865 = vpack.c.b16 %v765, %v761
      %v866 = vpack.c.b16 %v770, %v766
      %v867 = vpack.c.b16 %v771, %v767
      %v868 = vpack.c.b16 %v772, %v768
      %v869 = vpack.c.b16 %v773, %v769
      %v870 = vpack.c.b16 %v778, %v774
      %v871 = vpack.c.b16 %v779, %v775
      %v872 = vpack.c.b16 %v780, %v776
      %v873 = vpack.c.b16 %v781, %v777
      %v874 = vpack.c.b16 %v786, %v782
      %v875 = vpack.c.b16 %v787, %v783
      %v876 = vpack.c.b16 %v788, %v784
      %v877 = vpack.c.b16 %v789, %v785
      %v878 = vpack.c.b16 %v794, %v790
      %v879 = vpack.c.b16 %v795, %v791
      %v880 = vpack.c.b16 %v796, %v792
      %v881 = vpack.c.b16 %v797, %v793
      %v882 = vpack.c.b16 %v802, %v798
      %v883 = vpack.c.b16 %v803, %v799
      %v884 = vpack.c.b16 %v804, %v800
      %v885 = vpack.c.b16 %v805, %v801
      %v886 = vpack.c.b16 %v810, %v806
      %v887 = vpack.c.b16 %v811, %v807
      %v888 = vpack.c.b16 %v812, %v808
      %v889 = vpack.c.b16 %v813, %v809
      %v890 = vpack.c.b16 %v818, %v814
      %v891 = vpack.c.b16 %v819, %v815
      %v892 = vpack.c.b16 %v820, %v816
      %v893 = vpack.c.b16 %v821, %v817
      %v894 = vpack.c.b16 %v826, %v822
      %v895 = vpack.c.b16 %v827, %v823
      %v896 = vpack.c.b16 %v828, %v824
      %v897 = vpack.c.b16 %v829, %v825
      %v898 = vpack.c.b16 %v834, %v830
      %v899 = vpack.c.b16 %v835, %v831
      %v900 = vpack.c.b16 %v836, %v832
      %v901 = vpack.c.b16 %v837, %v833
      %966 = vmatprep.subr.bf16.mxu0 %v839
      %967 = vmatpush1.bf16.msra.mxu0 %v838
      %968 = vmatprep.subr.bf16.mxu0 %v843
      %969 = vmatpush1.bf16.msra.mxu0 %v842
      %970 = vmatprep.subr.bf16.mxu0 %v847
      %971 = vmatpush1.bf16.msra.mxu0 %v846
      %972 = vmatprep.subr.bf16.mxu0 %v851
      %973 = vmatpush1.bf16.msra.mxu0 %v850
      %974 = vmatprep.subr.bf16.mxu0 %v855
      %975 = vmatpush1.bf16.msra.mxu0 %v854
      %976 = vmatprep.subr.bf16.mxu0 %v859
      %977 = vmatpush1.bf16.msra.mxu0 %v858
      %978 = vmatprep.subr.bf16.mxu0 %v863
      %979 = vmatpush1.bf16.msra.mxu0 %v862
      %980 = vmatprep.subr.bf16.mxu0 %v867
      %981 = vmatpush1.bf16.msra.mxu0 %v866
      %982 = vmatprep.subr.bf16.mxu0 %v871
      %983 = vmatpush1.bf16.msra.mxu0 %v870
      %984 = vmatprep.subr.bf16.mxu0 %v875
      %985 = vmatpush1.bf16.msra.mxu0 %v874
      %986 = vmatprep.subr.bf16.mxu0 %v879
      %987 = vmatpush1.bf16.msra.mxu0 %v878
      %988 = vmatprep.subr.bf16.mxu0 %v883
      %989 = vmatpush1.bf16.msra.mxu0 %v882
      %990 = vmatprep.subr.bf16.mxu0 %v887
      %991 = vmatpush1.bf16.msra.mxu0 %v886
      %992 = vmatprep.subr.bf16.mxu0 %v891
      %993 = vmatpush1.bf16.msra.mxu0 %v890
      %994 = vmatprep.subr.bf16.mxu0 %v895
      %995 = vmatpush1.bf16.msra.mxu0 %v894
      %996 = vmatprep.subr.bf16.mxu0 %v899
      %997 = vmatpush1.bf16.msra.mxu0 %v898
      %998 = vmatprep.mubr.bf16.mxu0 %v559
      %999 = vmatmul.mubr.bf16.gmra.mrb[0].mxu0 %v558
      %v1000 = vpop.f32.mrb[0].mxu0
      %v1001 = vadd.f32 %v629, %v1000
      %v1002 = vpop.f32.mrb[0].mxu0
      %v1003 = vadd.f32 %v633, %v1002
      %v1004 = vpop.f32.mrb[0].mxu0
      %v1005 = vpop.f32.mrb[0].mxu0
      %1006 = vdwg.mxu0
      %1007 = vmatprep.subr.bf16.mxu0 %v841
      %1008 = vmatpush1.bf16.msra.mxu0 %v840
      %1009 = vmatprep.subr.bf16.mxu0 %v845
      %1010 = vmatpush1.bf16.msra.mxu0 %v844
      %1011 = vmatprep.subr.bf16.mxu0 %v849
      %1012 = vmatpush1.bf16.msra.mxu0 %v848
      %1013 = vmatprep.subr.bf16.mxu0 %v853
      %1014 = vmatpush1.bf16.msra.mxu0 %v852
      %1015 = vmatprep.subr.bf16.mxu0 %v857
      %1016 = vmatpush1.bf16.msra.mxu0 %v856
      %1017 = vmatprep.subr.bf16.mxu0 %v861
      %1018 = vmatpush1.bf16.msra.mxu0 %v860
      %1019 = vmatprep.subr.bf16.mxu0 %v865
      %1020 = vmatpush1.bf16.msra.mxu0 %v864
      %1021 = vmatprep.subr.bf16.mxu0 %v869
      %1022 = vmatpush1.bf16.msra.mxu0 %v868
      %1023 = vmatprep.subr.bf16.mxu0 %v873
      %1024 = vmatpush1.bf16.msra.mxu0 %v872
      %1025 = vmatprep.subr.bf16.mxu0 %v877
      %1026 = vmatpush1.bf16.msra.mxu0 %v876
      %1027 = vmatprep.subr.bf16.mxu0 %v881
      %1028 = vmatpush1.bf16.msra.mxu0 %v880
      %1029 = vmatprep.subr.bf16.mxu0 %v885
      %1030 = vmatpush1.bf16.msra.mxu0 %v884
      %1031 = vmatprep.subr.bf16.mxu0 %v889
      %1032 = vmatpush1.bf16.msra.mxu0 %v888
      %1033 = vmatprep.subr.bf16.mxu0 %v893
      %1034 = vmatpush1.bf16.msra.mxu0 %v892
      %1035 = vmatprep.subr.bf16.mxu0 %v897
      %1036 = vmatpush1.bf16.msra.mxu0 %v896
      %1037 = vmatprep.subr.bf16.mxu0 %v901
      %1038 = vmatpush1.bf16.msra.mxu0 %v900
      %1039 = vmatprep.mubr.bf16.mxu0 %v559
      %1040 = vmatmul.mubr.bf16.gmra.mrb[0].mxu0 %v558
      %v1041 = vpop.f32.mrb[0].mxu0
      %v1042 = vadd.f32 %v637, %v1041
      %v1043 = vpop.f32.mrb[0].mxu0
      %v1044 = vadd.f32 %v641, %v1043
      %v1045 = vpop.f32.mrb[0].mxu0
      %v1046 = vpop.f32.mrb[0].mxu0
      %1047 = vdwg.mxu0
      %v1048 = vxor.u32 %v1001, 2147483648
      %v1049 = vxor.u32 %v1003, 2147483648
      %v1050 = vxor.u32 %v1042, 2147483648
      %v1051 = vmul.f32 %v1048, 1.442695
      %v1052 = vpow.pop %v1051
      %v1053 = vmul.f32 %v1049, 1.442695
      %v1054 = vpow.pop %v1053
      %v1055 = vmul.f32 %v1050, 1.442695
      %v1056 = vpow.pop %v1055
      %v1057 = vadd.f32 %v1052, 1.0
      %v1058 = vadd.f32 %v1054, 1.0
      %v1059 = vadd.f32 %v1056, 1.0
      %v1060 = vrcp.pop %v1057
      %v1061 = vmul.f32 1.0, %v1060
      %v1062 = vrcp.pop %v1058
      %v1063 = vmul.f32 1.0, %v1062
      %v1064 = vrcp.pop %v1059
      %v1065 = vmul.f32 1.0, %v1064
      %v1066 = vtanh.pop %v1044
      %v1067 = vmul.f32 %v1063, %v237
      %v1068 = vmul.f32 %v1061, %v1066
      %v1069 = vadd.f32 %v1067, %v1068
      %v1070 = vtanh.pop %v1069
      %v1071 = vmul.f32 %v1065, %v1070
      %1072 = vst [vmem:[#allocation2] sm:$0x3] %v557
      %1073 = vst [vmem:[#allocation3] sm:$0x3] %v553
      %1074 = vst [vmem:[#allocation4] sm:$0x3] %v1071
      %1075 = vst [vmem:[#allocation5] sm:$0x3] %v1069
      %v1076 = vpack.c.bf16 %v1071, %v1071
      %1077 = vst [vmem:[%s224] sm:$0x1] %v1076
      %p1078 = scmp.lt.s32.totalorder %s20, 7
      %s1079 = scalar_select %p1078, %s20, 7
      %p1080 = scmp.lt.s32.totalorder %s19, 0
      %s1081 = scalar_select %p1080, %s19, 0
      %s1082 = sadd.s32 %s1081, %s1079
      %s1083 = scalar_lea.vmem %s4, %s1082
      // Predicated region
      $region41: #{model1_forward.8} parent=35 // pred_check
        %p1084 = pneg %p138
      $region42: #{model1_forward.8} parent=35 // pred_check_branch
        %1086 = sbr.rel (%p1084) target = $region44
      $region43: #{model1_forward.8} parent=35 // pred_region
        _
      $region44: #{model1_forward.8} parent=35 // pred_fallthru
        _
    $region36: #{model1_forward.8} parent=5 // pred_fallthru
      _
    %p1087 = scmp.le.s32.totalorder 2, %s10
    // Predicated region
    $region45: #{model1_forward.8} parent=5 // pred_check
      %p1088 = pneg %p1087
    $region46: #{model1_forward.8} parent=5 // pred_check_branch
      %1090 = sbr.rel (%p1088) target = $region48
    $region47: #{model1_forward.8} parent=5 // pred_region
      %s1091 = ssub.s32 %s10, 2
      // Predicated region
      $region49: #{model1_forward.8} parent=47 // pred_check
        %p1092 = pneg %p144
      $region50: #{model1_forward.8} parent=47 // pred_check_branch
        %1094 = sbr.rel (%p1092) target = $region52
      $region51: #{model1_forward.8} parent=47 // pred_region
        %p1095 = scmp.lt.s32.totalorder %s22, 7
        %s1096 = scalar_select %p1095, %s22, 7
        %p1097 = scmp.lt.s32.totalorder %s21, 0
        %s1098 = scalar_select %p1097, %s21, 0
        %s1099 = sadd.s32 %s1098, %s1096
        %s1100 = scalar_lea.vmem %s4, %s1099
      $region52: #{model1_forward.8} parent=47 // pred_fallthru
        _
    $region48: #{model1_forward.8} parent=5 // pred_fallthru
      _
  $region6: #{model1_forward.8} parent=0 // loop_footer
    %s14 = sadd.s32 1, %s10
  $region7: #{model1_forward.8} parent=0 // loop_footer_branch
    %9 = sbr.rel target = $region3
  $region8: #{model1_forward.8} parent=0 // loop_exit
    _

// kernel: model1_forward.9
$region0: #{model1_forward.9}
  #allocation0 [shape = 'u32[]', space=smem, size = 0x4, offset = 0x4, fixed_abs, tag = 'smem constant byte address 0x4 - core index']
  #allocation1 [shape = 'u32[144,128]{1,0:T(1,128)}', space=vmem, size = 0x12000, scoped, tag = 'internal scratch']
  #allocation2 [shape = 'f32[16,128]{1,0:T(8,128)}', space=vmem, size = 0x2000, scoped, tag = 'scratch operand']
  %s0 = inlined_call_operand.vmem [shape: bf16[16,128], index: 0, kind: input, shape index: {}]
  %s1 = inlined_call_operand.vmem [shape: bf16[128,128], index: 1, kind: input, shape index: {}]
  %s2 = inlined_call_operand.vmem [shape: f32[1,128], index: 2, kind: input, shape index: {}]
  %s3 = inlined_call_operand.vmem [shape: f32[16,128], index: 3, kind: output, shape index: {}]
  %s4 = sld [smem:[#allocation0]]
  $region30: #{model1_forward.9} parent=0
    _
  %s6 = ssub.s32 1, %s4
  %s7 = scalar_select 0, %s6, %s4
  // Predicated region
  $region2: #{model1_forward.9} parent=0 // pred_check
    _
  $region3: #{model1_forward.9} parent=0 // pred_check_branch
    %9 = sbr.rel (0) target = $region5
  $region4: #{model1_forward.9} parent=0 // pred_region
    _
  $region5: #{model1_forward.9} parent=0 // pred_fallthru
    _
  // Predicated region
  $region6: #{model1_forward.9} parent=0 // pred_check
    _
  $region7: #{model1_forward.9} parent=0 // pred_check_branch
    %11 = sbr.rel (0) target = $region9
  $region8: #{model1_forward.9} parent=0 // pred_region
    _
  $region9: #{model1_forward.9} parent=0 // pred_fallthru
    _
  // Predicated region
  $region10: #{model1_forward.9} parent=0 // pred_check
    _
  $region11: #{model1_forward.9} parent=0 // pred_check_branch
    %13 = sbr.rel (0) target = $region13
  $region12: #{model1_forward.9} parent=0 // pred_region
    _
  $region13: #{model1_forward.9} parent=0 // pred_fallthru
    _
  %p15 = scmp.eq.s32.totalorder 0, 0
  // Predicated region
  $region14: #{model1_forward.9} parent=0 // pred_check
    %p16 = pneg %p15
  $region15: #{model1_forward.9} parent=0 // pred_check_branch
    %18 = sbr.rel (%p16) target = $region17
  $region16: #{model1_forward.9} parent=0 // pred_region
    %19 = vst [vmem:[#allocation2] sm:$0xff] 0.0
    %20 = vst [vmem:[#allocation2 + $0x8] sm:$0xff] 0.0
  $region17: #{model1_forward.9} parent=0 // pred_fallthru
    _
  %v21 = vld [vmem:[#allocation2] sm:$0xff]
  %v22 = vld [vmem:[#allocation2 + $0x8] sm:$0xff]
  %v23 = vld [vmem:[%s0] sm:$0xf]
  %v24 = vld [vmem:[%s0 + $0x4] sm:$0xf]
  %v25 = vld [vmem:[%s1] sm:$0xf]
  %v26 = vld [vmem:[%s1 + $0x4] sm:$0xf]
  %v27 = vld [vmem:[%s1 + $0x8] sm:$0xf]
  %v28 = vld [vmem:[%s1 + $0xc] sm:$0xf]
  %v29 = vld [vmem:[%s1 + $0x10] sm:$0xf]
  %v30 = vld [vmem:[%s1 + $0x14] sm:$0xf]
  %v31 = vld [vmem:[%s1 + $0x18] sm:$0xf]
  %v32 = vld [vmem:[%s1 + $0x1c] sm:$0xf]
  %v33 = vld [vmem:[%s1 + $0x20] sm:$0xf]
  %v34 = vld [vmem:[%s1 + $0x24] sm:$0xf]
  %v35 = vld [vmem:[%s1 + $0x28] sm:$0xf]
  %v36 = vld [vmem:[%s1 + $0x2c] sm:$0xf]
  %v37 = vld [vmem:[%s1 + $0x30] sm:$0xf]
  %v38 = vld [vmem:[%s1 + $0x34] sm:$0xf]
  %v39 = vld [vmem:[%s1 + $0x38] sm:$0xf]
  %v40 = vld [vmem:[%s1 + $0x3c] sm:$0xf]
  %v43 = vunpack.c.l.b16 %v23
  %v44 = vunpack.c.l.b16 %v24
  %v45 = vpack.c.b16 %v44, %v43
  %v63 = vunpack.c.l.b16 %v25
  %v64 = vunpack.c.l.b16 %v26
  %v65 = vunpack.c.l.b16 %v27
  %v66 = vunpack.c.l.b16 %v28
  %v67 = vunpack.c.l.b16 %v29
  %v68 = vunpack.c.l.b16 %v30
  %v69 = vunpack.c.l.b16 %v31
  %v70 = vunpack.c.l.b16 %v32
  %v71 = vunpack.c.l.b16 %v33
  %v72 = vunpack.c.l.b16 %v34
  %v73 = vunpack.c.l.b16 %v35
  %v74 = vunpack.c.l.b16 %v36
  %v75 = vunpack.c.l.b16 %v37
  %v76 = vunpack.c.l.b16 %v38
  %v77 = vunpack.c.l.b16 %v39
  %v78 = vunpack.c.l.b16 %v40
  %v79 = vpack.c.b16 %v64, %v63
  %v80 = vpack.c.b16 %v66, %v65
  %v81 = vpack.c.b16 %v68, %v67
  %v82 = vpack.c.b16 %v70, %v69
  %v83 = vpack.c.b16 %v72, %v71
  %v84 = vpack.c.b16 %v74, %v73
  %v85 = vpack.c.b16 %v76, %v75
  %v86 = vpack.c.b16 %v78, %v77
  %95 = vmatprep.subr.bf16.mxu0 0
  %96 = vmatpush1.bf16.msra.mxu0 %v79
  %97 = vmatprep.subr.bf16.mxu0 0
  %98 = vmatpush1.bf16.msra.mxu0 %v80
  %99 = vmatprep.subr.bf16.mxu0 0
  %100 = vmatpush1.bf16.msra.mxu0 %v81
  %101 = vmatprep.subr.bf16.mxu0 0
  %102 = vmatpush1.bf16.msra.mxu0 %v82
  %103 = vmatprep.subr.bf16.mxu0 0
  %104 = vmatpush1.bf16.msra.mxu0 %v83
  %105 = vmatprep.subr.bf16.mxu0 0
  %106 = vmatpush1.bf16.msra.mxu0 %v84
  %107 = vmatprep.subr.bf16.mxu0 0
  %108 = vmatpush1.bf16.msra.mxu0 %v85
  %109 = vmatprep.subr.bf16.mxu0 0
  %110 = vmatpush1.bf16.msra.mxu0 %v86
  %111 = vmatprep.subr.bf16.mxu0 0
  %112 = vmatpush1.bf16.msra.mxu0 0
  %113 = vmatprep.subr.bf16.mxu0 0
  %114 = vmatpush1.bf16.msra.mxu0 0
  %115 = vmatprep.subr.bf16.mxu0 0
  %116 = vmatpush1.bf16.msra.mxu0 0
  %117 = vmatprep.subr.bf16.mxu0 0
  %118 = vmatpush1.bf16.msra.mxu0 0
  %119 = vmatprep.subr.bf16.mxu0 0
  %120 = vmatpush1.bf16.msra.mxu0 0
  %121 = vmatprep.subr.bf16.mxu0 0
  %122 = vmatpush1.bf16.msra.mxu0 0
  %123 = vmatprep.subr.bf16.mxu0 0
  %124 = vmatpush1.bf16.msra.mxu0 0
  %125 = vmatprep.subr.bf16.mxu0 0
  %126 = vmatpush1.bf16.msra.mxu0 0
  %127 = vmatprep.mubr.bf16.mxu0 0
  %128 = vmatmul.mubr.bf16.gmra.mrb[0].mxu0 %v45
  %v129 = vpop.f32.mrb[0].mxu0
  %v130 = vadd.f32 0.0, %v129
  %v131 = vpop.f32.mrb[0].mxu0
  %v132 = vpop.f32.mrb[0].mxu0
  %v133 = vadd.f32 0.0, %v132
  %v134 = vpop.f32.mrb[0].mxu0
  %135 = vdwg.mxu0
  %v136 = vadd.f32 %v21, %v130
  %v137 = vadd.f32 %v22, %v133
  %138 = vst [vmem:[#allocation2] sm:$0xff] %v136
  %139 = vst [vmem:[#allocation2 + $0x8] sm:$0xff] %v137
  // Predicated region
  $region18: #{model1_forward.9} parent=0 // pred_check
    %p140 = pneg %p15
  $region19: #{model1_forward.9} parent=0 // pred_check_branch
    %142 = sbr.rel (%p140) target = $region21
  $region20: #{model1_forward.9} parent=0 // pred_region
    %v143 = vld [vmem:[#allocation2] sm:$0xff]
    %v144 = vld [vmem:[#allocation2 + $0x8] sm:$0xff]
    %v145 = vld [vmem:[%s2] sm:$0x1]
    %v147 = vlaneseq
    %v148 = vshrl.u32 %v147, 7
    %v149 = vsub.s32 0, %v148
    %v150 = vrot.slane %v145, %v149
    %v152 = vadd.f32 %v143, %v150
    %v153 = vadd.f32 %v144, %v150
    %154 = vst [vmem:[%s3] sm:$0xff] %v152
    %155 = vst [vmem:[%s3 + $0x8] sm:$0xff] %v153
  $region21: #{model1_forward.9} parent=0 // pred_fallthru
    _
  // Predicated region
  $region22: #{model1_forward.9} parent=0 // pred_check
    _
  $region23: #{model1_forward.9} parent=0 // pred_check_branch
    %157 = sbr.rel (0) target = $region25
  $region24: #{model1_forward.9} parent=0 // pred_region
    _
  $region25: #{model1_forward.9} parent=0 // pred_fallthru
    _
  // Predicated region
  $region26: #{model1_forward.9} parent=0 // pred_check
    _
  $region27: #{model1_forward.9} parent=0 // pred_check_branch
    %159 = sbr.rel (0) target = $region29
  $region28: #{model1_forward.9} parent=0 // pred_region
    _
  $region29: #{model1_forward.9} parent=0 // pred_fallthru
    _

</llo_original>
